<compile_context>
chip_gen: v7x
topology: tpu7x:2x2x1
jax: 0.10.0
libtpu: 0.0.40
codegen_flags: <defaults>
</compile_context>

<pallas_src>
import numpy as np
import jax
import jax.numpy as jnp
from jax import lax
from jax.experimental import pallas as pl
from jax.experimental.pallas import tpu as pltpu

BANDS = 13
IN_H = IN_W = 5          # spatial input size implied by valid-conv -> 3x3 -> avgpool(3) -> 1x1
OUT_POS = 9              # 3x3 post-conv1 spatial positions
FEAT = 64                # channels after concat
CAT = OUT_POS * FEAT     # 576 = flattened (position, channel) feature vector
OUT_LANES = 128          # lane-dense output slab: [0:64]=x_flat, [64]=fc, rest zero


def _round_up(x, m):
    return (x + m - 1) // m * m


# ---------------------------------------------------------------------------
# Kernel: one row-tile of samples per grid step, all weights resident in VMEM.
# ---------------------------------------------------------------------------
def hresnet_kernel(x_ref, w1_ref, w2a_ref, w2b_ref, wf_ref, vec_ref, out_ref):
    bn_s  = vec_ref[0:1, :]                 # (1, 576) BN scale (eval mode, folded)
    bn_b  = vec_ref[1:2, :]                 # (1, 576) BN shift (+ conv1 bias folded in)
    b2a   = vec_ref[2:3, :]                 # (1, 576) conv2a bias (ReLU follows, can't fold)
    bhead = vec_ref[3:4, 0:OUT_LANES]       # (1, 128) head bias (avgpool/fc + b1/b2b folds)

    # bf16 cast of the streamed input tile is free VPU filler under MXU slack.
    x_bf = x_ref[...].astype(jnp.bfloat16)

    # conv1a + conv1b + channel concat, expressed as one bf16 matmul (f32 accumulate).
    cat = jnp.dot(x_bf, w1_ref[...], preferred_element_type=jnp.float32)      # (T, 576) f32

    # BatchNorm2d(64) (running stats folded into scale/shift, conv1 bias folded into shift) + ReLU.
    # TODO(synk): training-mode BN (per-batch statistics) is not modeled; this is inference-only.
    h = jnp.maximum(cat * bn_s + bn_b, 0.0)

    # conv2a (3x3 'same' on the 3x3 grid) + bias + ReLU.
    h = jnp.dot(h.astype(jnp.bfloat16), w2a_ref[...],
                preferred_element_type=jnp.float32) + b2a
    h = jnp.maximum(h, 0.0)

    # conv2b (3x3 'same'); its bias is folded into the head bias (nothing nonlinear follows).
    h = jnp.dot(h.astype(jnp.bfloat16), w2b_ref[...],
                preferred_element_type=jnp.float32)

    # Residual add (bias-free cat + conv2b output), then bf16 for the single-pass head matmul.
    res = (cat + h).astype(jnp.bfloat16)                                      # (T, 576) bf16

    # AvgPool2d(3) + flatten + fc folded into one lane-dense bf16 matmul:
    #   lanes 0..63 = x.view(N, 64), lane 64 = fc(x), lanes 65..127 = 0.
    out_ref[...] = jnp.dot(res, wf_ref[...],
                           preferred_element_type=jnp.float32) + bhead        # (T, 128) f32


# ---------------------------------------------------------------------------
# Weight packing: fold the convolutions into dense matmul matrices (done once,
# host-side, on the tiny parameter tensors).
# ---------------------------------------------------------------------------
def _build_w1(w1a, w1b, bands):
    """(bands*25, 576): 3x3 'valid' conv on 5x5 for both branches + channel concat."""
    w1a = np.asarray(w1a, np.float32)
    w1b = np.asarray(w1b, np.float32)
    rows_total = bands * IN_H * IN_W
    W = np.zeros((rows_total, CAT), np.float32)
    for oh in range(3):
        for ow in range(3):
            p = oh * 3 + ow
            for kh in range(3):
                for kw in range(3):
                    ih, iw = oh + kh, ow + kw
                    rows = np.arange(bands) * (IN_H * IN_W) + ih * IN_W + iw
                    W[rows, p * FEAT:p * FEAT + 32] = w1a[:, :, kh, kw].T
                    W[rows, p * FEAT + 32:p * FEAT + 64] = w1b[:, :, kh, kw].T
    return W


def _build_w2(w2):
    """(576, 576): 3x3 'same' conv on the 3x3 grid of 64-channel features."""
    w2 = np.asarray(w2, np.float32)
    W = np.zeros((CAT, CAT), np.float32)
    for oh in range(3):
        for ow in range(3):
            po = oh * 3 + ow
            for kh in range(3):
                for kw in range(3):
                    ih, iw = oh + kh - 1, ow + kw - 1
                    if 0 <= ih < 3 and 0 <= iw < 3:
                        pi = ih * 3 + iw
                        W[pi * FEAT:(pi + 1) * FEAT,
                          po * FEAT:(po + 1) * FEAT] = w2[:, :, kh, kw].T
    return W


def _build_wf(wfc):
    """(576, 128): AvgPool2d(3) + flatten into lanes 0..63, Linear(64,1) into lane 64."""
    wfc = np.asarray(wfc, np.float32).reshape(FEAT)
    W = np.zeros((CAT, OUT_LANES), np.float32)
    eye = np.eye(FEAT, dtype=np.float32) / float(OUT_POS)
    for p in range(OUT_POS):
        W[p * FEAT:(p + 1) * FEAT, 0:FEAT] = eye
        W[p * FEAT:(p + 1) * FEAT, FEAT] = wfc / float(OUT_POS)
    return W


def _build_vecs(params, wf_f32, eps=1e-5):
    """Pack the per-channel vectors into one (8, 576) f32 array (single DMA).

    conv1 bias (b1) is folded into the BN shift and into the head bias;
    conv2b bias (b2b) is folded into the head bias. Only BN scale/shift,
    the conv2a bias and the head bias remain as in-kernel adds.
    """
    b1 = np.concatenate([np.asarray(params["b1a"], np.float32),
                         np.asarray(params["b1b"], np.float32)])        # (64,)
    scale = np.asarray(params["bn_gamma"], np.float32) / np.sqrt(
        np.asarray(params["bn_var"], np.float32) + eps)
    shift = np.asarray(params["bn_beta"], np.float32) - \
        np.asarray(params["bn_mean"], np.float32) * scale

    b1_t = np.tile(b1, OUT_POS)                                          # (576,)
    b2b_t = np.tile(np.asarray(params["b2b"], np.float32), OUT_POS)      # (576,)

    V = np.zeros((8, CAT), np.float32)
    V[0] = np.tile(scale, OUT_POS)
    V[1] = np.tile(shift, OUT_POS) + b1_t * V[0]      # BN shift with conv1 bias folded in
    V[2] = np.tile(np.asarray(params["b2a"], np.float32), OUT_POS)

    head_bias = (b1_t + b2b_t) @ wf_f32                                  # (128,)
    head_bias[FEAT] += float(np.asarray(params["bfc"]).reshape(-1)[0])
    V[3, :OUT_LANES] = head_bias
    return V


# ---------------------------------------------------------------------------
# Wrapper
# ---------------------------------------------------------------------------
def _resident_spec(shape):
    """Constant-index resident operand; single-buffered when the API allows it."""
    index_map = lambda i: tuple(0 for _ in shape)
    try:
        return pl.BlockSpec(shape, index_map, pipeline_mode=pl.Buffered(1))
    except (TypeError, AttributeError):
        return pl.BlockSpec(shape, index_map)


def _pick_tile_and_vmem(n_rows):
    """Per-generation row-tile / VMEM-limit defaults, clamped so the grid has >=2 steps."""
    kind = ""
    try:
        kind = jax.devices()[0].device_kind.lower()
    except Exception:
        pass
    if ("v5" in kind) or ("v6" in kind):
        tile, vmem = 2048, 64 * 1024 * 1024      # 128 MiB physical VMEM: amortize step overhead
    else:
        tile, vmem = 1024, 48 * 1024 * 1024      # v7x (64 MiB/TC) & unknown: stay conservative
    tile = min(tile, _round_up(max(1, -(-n_rows // 2)), 8))   # >=2 grid steps when possible
    return max(8, tile), vmem


def hresnet_forward(x, params, *, tile_n=None):
    # x: (N, bands, 5, 5) float32, NCHW (PyTorch convention)
    N, C, H, W = x.shape
    assert H == IN_H and W == IN_W, "HResNet shape algebra requires a 5x5 spatial input"
    in_feat = C * H * W                           # 325 (full-width lane block, no padding pass)

    # Row-major NCHW flatten is free; only pad rows when N is not a multiple of 8.
    n8 = _round_up(N, 8)
    x2d = x.reshape(N, in_feat)
    if n8 != N:
        x2d = jnp.pad(x2d, ((0, n8 - N), (0, 0)))

    auto_tile, vmem_bytes = _pick_tile_and_vmem(n8)
    if tile_n is None:
        tile_n = auto_tile
    tile_n = max(8, min(_round_up(tile_n, 8), n8))
    grid = (n8 + tile_n - 1) // tile_n            # ragged last block handled by Pallas

    wf_f32 = _build_wf(params["wfc"])
    w1 = jnp.asarray(_build_w1(params["w1a"], params["w1b"], C), jnp.bfloat16)
    w2a = jnp.asarray(_build_w2(params["w2a"]), jnp.bfloat16)
    w2b = jnp.asarray(_build_w2(params["w2b"]), jnp.bfloat16)
    wf = jnp.asarray(wf_f32, jnp.bfloat16)        # bf16 head matmul (single MXU pass)
    vec = jnp.asarray(_build_vecs(params, wf_f32), jnp.float32)

    out = pl.pallas_call(
        hresnet_kernel,
        out_shape=jax.ShapeDtypeStruct((n8, OUT_LANES), jnp.float32),
        grid_spec=pltpu.PrefetchScalarGridSpec(
            num_scalar_prefetch=0,
            grid=(grid,),
            in_specs=[
                pl.BlockSpec((tile_n, in_feat), lambda i: (i, 0)),   # streamed input tile (f32)
                _resident_spec((in_feat, CAT)),                      # resident weights
                _resident_spec((CAT, CAT)),
                _resident_spec((CAT, CAT)),
                _resident_spec((CAT, OUT_LANES)),
                _resident_spec((8, CAT)),                            # packed bias/BN vectors
            ],
            out_specs=pl.BlockSpec((tile_n, OUT_LANES), lambda i: (i, 0)),
        ),
        compiler_params=pltpu.CompilerParams(
            dimension_semantics=("parallel",),
            vmem_limit_bytes=vmem_bytes,
        ),
    )(x2d, w1, w2a, w2b, wf, vec)

    fc_out = out[:N, FEAT:FEAT + 1]   # (N, 1)
    x_flat = out[:N, 0:FEAT]          # (N, 64)
    return fc_out, x_flat


# ---------------------------------------------------------------------------
# Pure-JAX reference (mirrors the torch forward, eval-mode BN)
# ---------------------------------------------------------------------------
def hresnet_reference(x, params, eps=1e-5):
    dn = ("NCHW", "OIHW", "NCHW")

    def conv(inp, w, b, padding):
        y = lax.conv_general_dilated(inp, w, window_strides=(1, 1),
                                     padding=padding, dimension_numbers=dn)
        return y + b[None, :, None, None]

    y1 = conv(x, params["w1a"], params["b1a"], "VALID")
    y2 = conv(x, params["w1b"], params["b1b"], "VALID")
    cat = jnp.concatenate([y1, y2], axis=1)
    scale = params["bn_gamma"] / jnp.sqrt(params["bn_var"] + eps)
    shift = params["bn_beta"] - params["bn_mean"] * scale
    h = jnp.maximum(cat * scale[None, :, None, None] + shift[None, :, None, None], 0.0)
    h = jnp.maximum(conv(h, params["w2a"], params["b2a"], "SAME"), 0.0)
    h = conv(h, params["w2b"], params["b2b"], "SAME")
    res = cat + h
    x_flat = jnp.mean(res, axis=(2, 3))                 # AvgPool2d(3) -> (N, 64)
    fc = x_flat @ params["wfc"].T + params["bfc"]
    return fc, x_flat


def init_params(key, bands=BANDS):
    ks = jax.random.split(key, 10)

    def w(k, shape, fan_in):
        return jax.random.normal(k, shape, jnp.float32) / jnp.sqrt(fan_in)

    return {
        "w1a": w(ks[0], (32, bands, 3, 3), bands * 9),   # torch Conv2d layout (O, I, kh, kw)
        "b1a": w(ks[1], (32,), bands * 9),
        "w1b": w(ks[2], (32, bands, 3, 3), bands * 9),
        "b1b": w(ks[3], (32,), bands * 9),
        "bn_gamma": jnp.ones((64,), jnp.float32),
        "bn_beta": jnp.zeros((64,), jnp.float32),
        "bn_mean": jnp.zeros((64,), jnp.float32),
        "bn_var": jnp.ones((64,), jnp.float32),
        "w2a": w(ks[4], (64, 64, 3, 3), 64 * 9),
        "b2a": w(ks[5], (64,), 64 * 9),
        "w2b": w(ks[6], (64, 64, 3, 3), 64 * 9),
        "b2b": w(ks[7], (64,), 64 * 9),
        "wfc": w(ks[8], (1, 64), 64),                    # torch Linear weight (out, in)
        "bfc": jnp.zeros((1,), jnp.float32),
    }


if __name__ == "__main__":
    key = jax.random.PRNGKey(0)
    kx, kp = jax.random.split(key)
    N = 2
    x = jax.random.normal(kx, (N, BANDS, IN_H, IN_W), jnp.float32)
    params = init_params(kp)

    fc_out, x_flat = hresnet_forward(x, params)
    jax.block_until_ready((fc_out, x_flat))

    # Reference with the same bf16-rounded weights/input (bf16 is part of the kernel design).
    def _q(a):
        return a.astype(jnp.bfloat16).astype(jnp.float32)

    params_q = dict(params)
    for k in ("w1a", "w1b", "w2a", "w2b"):
        params_q[k] = _q(params[k])
    fc_ref, xflat_ref = hresnet_reference(_q(x), params_q)

    assert fc_out.shape == (N, 1) and x_flat.shape == (N, 64)
    assert jnp.allclose(x_flat, xflat_ref, rtol=2e-2, atol=2e-2), \
        float(jnp.max(jnp.abs(x_flat - xflat_ref)))
    assert jnp.allclose(fc_out, fc_ref, rtol=2e-2, atol=2e-2), \
        float(jnp.max(jnp.abs(fc_out - fc_ref)))
    print("KERNEL_OK")
</pallas_src>

<mosaic_0001>
module attributes {stable_mosaic.version = 11 : i64} {
  func.func @hresnet_kernel(%arg0: i32, %arg1: memref<8x325xf32, #tpu.memory_space<vmem>>, %arg2: memref<325x576xbf16, #tpu.memory_space<vmem>>, %arg3: memref<576x576xbf16, #tpu.memory_space<vmem>>, %arg4: memref<576x576xbf16, #tpu.memory_space<vmem>>, %arg5: memref<576x128xbf16, #tpu.memory_space<vmem>>, %arg6: memref<8x576xf32, #tpu.memory_space<vmem>>, %arg7: memref<8x128xf32, #tpu.memory_space<vmem>>) attributes {dimension_semantics = [#tpu.dimension_semantics<parallel>], iteration_bounds = array<i64: 1>, scalar_prefetch = 0 : i64, scratch_operands = 0 : i64, tpu.core_type = #tpu.core_type<tc>, window_params = [{transform_indices = @transform_0, window_bounds = array<i64: 8, 325>}, {pipeline_mode = #tpu.pipeline_mode<synchronous>, transform_indices = @transform_1, window_bounds = array<i64: 325, 576>}, {pipeline_mode = #tpu.pipeline_mode<synchronous>, transform_indices = @transform_2, window_bounds = array<i64: 576, 576>}, {pipeline_mode = #tpu.pipeline_mode<synchronous>, transform_indices = @transform_3, window_bounds = array<i64: 576, 576>}, {pipeline_mode = #tpu.pipeline_mode<synchronous>, transform_indices = @transform_4, window_bounds = array<i64: 576, 128>}, {pipeline_mode = #tpu.pipeline_mode<synchronous>, transform_indices = @transform_5, window_bounds = array<i64: 8, 576>}, {transform_indices = @transform_6, window_bounds = array<i64: 8, 128>}]} {
    %c0 = arith.constant 0 : index
    %c0_0 = arith.constant 0 : index
    %0 = vector.load %arg6[%c0, %c0_0] : memref<8x576xf32, #tpu.memory_space<vmem>>, vector<1x576xf32>
    %c1 = arith.constant 1 : index
    %c0_1 = arith.constant 0 : index
    %1 = vector.load %arg6[%c1, %c0_1] : memref<8x576xf32, #tpu.memory_space<vmem>>, vector<1x576xf32>
    %c2 = arith.constant 2 : index
    %c0_2 = arith.constant 0 : index
    %2 = vector.load %arg6[%c2, %c0_2] : memref<8x576xf32, #tpu.memory_space<vmem>>, vector<1x576xf32>
    %c3 = arith.constant 3 : index
    %c0_3 = arith.constant 0 : index
    %3 = vector.load %arg6[%c3, %c0_3] : memref<8x576xf32, #tpu.memory_space<vmem>>, vector<1x128xf32>
    %c0_4 = arith.constant 0 : index
    %c0_5 = arith.constant 0 : index
    %4 = vector.load %arg1[%c0_4, %c0_5] : memref<8x325xf32, #tpu.memory_space<vmem>>, vector<8x325xf32>
    %5 = arith.truncf %4 : vector<8x325xf32> to vector<8x325xbf16>
    %c0_6 = arith.constant 0 : index
    %c0_7 = arith.constant 0 : index
    %6 = vector.load %arg2[%c0_6, %c0_7] : memref<325x576xbf16, #tpu.memory_space<vmem>>, vector<325x576xbf16>
    %cst = arith.constant dense<0.000000e+00> : vector<8x576xf32>
    %7 = tpu.matmul %5, %6, %cst {dimension_numbers = #tpu.dot_dimension_numbers<[1], [0], [0], [1], [0, 0, 1, 1], [], []>} : vector<8x325xbf16>, vector<325x576xbf16>, vector<8x576xf32> -> vector<8x576xf32>
    %8 = vector.broadcast %0 : vector<1x576xf32> to vector<8x576xf32>
    %9 = arith.mulf %7, %8 : vector<8x576xf32>
    %10 = vector.broadcast %1 : vector<1x576xf32> to vector<8x576xf32>
    %11 = arith.addf %9, %10 : vector<8x576xf32>
    %cst_8 = arith.constant 0.000000e+00 : f32
    %12 = vector.broadcast %cst_8 : f32 to vector<8x576xf32>
    %13 = arith.maximumf %11, %12 : vector<8x576xf32>
    %14 = arith.truncf %13 : vector<8x576xf32> to vector<8x576xbf16>
    %c0_9 = arith.constant 0 : index
    %c0_10 = arith.constant 0 : index
    %15 = vector.load %arg3[%c0_9, %c0_10] : memref<576x576xbf16, #tpu.memory_space<vmem>>, vector<576x576xbf16>
    %cst_11 = arith.constant dense<0.000000e+00> : vector<8x576xf32>
    %16 = tpu.matmul %14, %15, %cst_11 {dimension_numbers = #tpu.dot_dimension_numbers<[1], [0], [0], [1], [0, 0, 1, 1], [], []>} : vector<8x576xbf16>, vector<576x576xbf16>, vector<8x576xf32> -> vector<8x576xf32>
    %17 = vector.broadcast %2 : vector<1x576xf32> to vector<8x576xf32>
    %18 = arith.addf %16, %17 : vector<8x576xf32>
    %cst_12 = arith.constant 0.000000e+00 : f32
    %19 = vector.broadcast %cst_12 : f32 to vector<8x576xf32>
    %20 = arith.maximumf %18, %19 : vector<8x576xf32>
    %21 = arith.truncf %20 : vector<8x576xf32> to vector<8x576xbf16>
    %c0_13 = arith.constant 0 : index
    %c0_14 = arith.constant 0 : index
    %22 = vector.load %arg4[%c0_13, %c0_14] : memref<576x576xbf16, #tpu.memory_space<vmem>>, vector<576x576xbf16>
    %cst_15 = arith.constant dense<0.000000e+00> : vector<8x576xf32>
    %23 = tpu.matmul %21, %22, %cst_15 {dimension_numbers = #tpu.dot_dimension_numbers<[1], [0], [0], [1], [0, 0, 1, 1], [], []>} : vector<8x576xbf16>, vector<576x576xbf16>, vector<8x576xf32> -> vector<8x576xf32>
    %24 = arith.addf %7, %23 : vector<8x576xf32>
    %25 = arith.truncf %24 : vector<8x576xf32> to vector<8x576xbf16>
    %c0_16 = arith.constant 0 : index
    %c0_17 = arith.constant 0 : index
    %26 = vector.load %arg5[%c0_16, %c0_17] : memref<576x128xbf16, #tpu.memory_space<vmem>>, vector<576x128xbf16>
    %cst_18 = arith.constant dense<0.000000e+00> : vector<8x128xf32>
    %27 = tpu.matmul %25, %26, %cst_18 {dimension_numbers = #tpu.dot_dimension_numbers<[1], [0], [0], [1], [0, 0, 1, 1], [], []>} : vector<8x576xbf16>, vector<576x128xbf16>, vector<8x128xf32> -> vector<8x128xf32>
    %28 = vector.broadcast %3 : vector<1x128xf32> to vector<8x128xf32>
    %29 = arith.addf %27, %28 : vector<8x128xf32>
    %c0_19 = arith.constant 0 : index
    %c0_20 = arith.constant 0 : index
    %30 = vector.load %arg7[%c0_19, %c0_20] : memref<8x128xf32, #tpu.memory_space<vmem>>, vector<8x128xf32>
    tpu.vector_store %arg7[%c0_19, %c0_20], %29 {strides = array<i32>} : memref<8x128xf32, #tpu.memory_space<vmem>>, vector<8x128xf32>,
    return
  }
  func.func @transform_0(%arg0: i32) -> (i32, i32) {
    %c0_i32 = arith.constant 0 : i32
    %c0_i32_0 = arith.constant 0 : i32
    return %arg0, %c0_i32 : i32, i32
  }
  func.func @transform_1(%arg0: i32) -> (i32, i32) {
    %c0_i32 = arith.constant 0 : i32
    %c0_i32_0 = arith.constant 0 : i32
    %c0_i32_1 = arith.constant 0 : i32
    return %c0_i32, %c0_i32_0 : i32, i32
  }
  func.func @transform_2(%arg0: i32) -> (i32, i32) {
    %c0_i32 = arith.constant 0 : i32
    %c0_i32_0 = arith.constant 0 : i32
    %c0_i32_1 = arith.constant 0 : i32
    return %c0_i32, %c0_i32_0 : i32, i32
  }
  func.func @transform_3(%arg0: i32) -> (i32, i32) {
    %c0_i32 = arith.constant 0 : i32
    %c0_i32_0 = arith.constant 0 : i32
    %c0_i32_1 = arith.constant 0 : i32
    return %c0_i32, %c0_i32_0 : i32, i32
  }
  func.func @transform_4(%arg0: i32) -> (i32, i32) {
    %c0_i32 = arith.constant 0 : i32
    %c0_i32_0 = arith.constant 0 : i32
    %c0_i32_1 = arith.constant 0 : i32
    return %c0_i32, %c0_i32_0 : i32, i32
  }
  func.func @transform_5(%arg0: i32) -> (i32, i32) {
    %c0_i32 = arith.constant 0 : i32
    %c0_i32_0 = arith.constant 0 : i32
    %c0_i32_1 = arith.constant 0 : i32
    return %c0_i32, %c0_i32_0 : i32, i32
  }
  func.func @transform_6(%arg0: i32) -> (i32, i32) {
    %c0_i32 = arith.constant 0 : i32
    %c0_i32_0 = arith.constant 0 : i32
    return %arg0, %c0_i32 : i32, i32
  }
}

</mosaic_0001>

<llo_original>
// kernel: tpu_custom_call.1
$region0: #{tpu_custom_call.1}
  #allocation0 [shape = 'u32[]', space=smem, size = 0x4, offset = 0x4, fixed_abs, tag = 'smem constant byte address 0x4 - core index']
  #allocation1 [shape = 'u32[144,128]{1,0:T(1,128)}', space=vmem, size = 0x12000, scoped, tag = 'internal scratch']
  %s0 = inlined_call_operand.hbm [shape: f32[8,325], index: 0, kind: input, shape index: {}]
  %s1 = inlined_call_operand.hbm [shape: bf16[325,576], index: 1, kind: input, shape index: {}]
  %s2 = inlined_call_operand.hbm [shape: bf16[576,576], index: 2, kind: input, shape index: {}]
  %s3 = inlined_call_operand.hbm [shape: bf16[576,576], index: 3, kind: input, shape index: {}]
  %s4 = inlined_call_operand.hbm [shape: bf16[576,128], index: 4, kind: input, shape index: {}]
  %s5 = inlined_call_operand.hbm [shape: f32[8,576], index: 5, kind: input, shape index: {}]
  %s6 = inlined_call_operand.hbm [shape: f32[8,128], index: 6, kind: output, shape index: {}]
  %s7 = sld [smem:[#allocation0]]
  $region58: #{tpu_custom_call.1} parent=0
    _
  %s9 = ssub.s32 1, %s7
  %s10 = scalar_select 0, %s9, %s7
  $region1: #{tpu_custom_call.1} parent=0
    #allocation2 [shape = 'u8[12288]{0}', space=vmem, size = 0x3000, scoped, tag = 'input window, operand 0, single buffered']
    #allocation3 [shape = 's32[1]{0}', space=sflag, size = 0x4, scoped, tag = 'scoped memory for tpu_custom_call.1']
    #allocation4 [shape = 's32[1]{0}', space=sflag, size = 0x4, scoped, tag = 'scoped memory for tpu_custom_call.1']
    #allocation5 [shape = 'u8[419840]{0}', space=vmem, size = 0x66800, scoped, tag = 'input window, operand 1, single buffered']
    #allocation6 [shape = 's32[1]{0}', space=sflag, size = 0x4, scoped, tag = 'scoped memory for tpu_custom_call.1']
    #allocation7 [shape = 'u8[737280]{0}', space=vmem, size = 0xb4000, scoped, tag = 'input window, operand 2, single buffered']
    #allocation8 [shape = 'u8[737280]{0}', space=vmem, size = 0xb4000, scoped, tag = 'input window, operand 3, single buffered']
    #allocation9 [shape = 's32[1]{0}', space=sflag, size = 0x4, scoped, tag = 'scoped memory for tpu_custom_call.1']
    #allocation10 [shape = 'u8[147456]{0}', space=vmem, size = 0x24000, scoped, tag = 'input window, operand 4, single buffered']
    #allocation11 [shape = 'u8[20480]{0}', space=vmem, size = 0x5000, scoped, tag = 'input window, operand 5, single buffered']
    #allocation12 [shape = 's32[1]{0}', space=sflag, size = 0x4, scoped, tag = 'scoped memory for tpu_custom_call.1']
    #allocation13 [shape = 'u8[4096]{0}', space=vmem, size = 0x1000, scoped, tag = 'output window, operand 0, single buffered']
    %11 = vsyncpa [#allocation3], 0
    %12 = vsyncpa [#allocation6], 0
    %13 = vsyncpa [#allocation9], 0
    %14 = vsyncpa [#allocation12], 0
    %15 = vsyncpa [#allocation4], 0
    // Predicated region
    $region2: #{tpu_custom_call.1} parent=1 // pred_check
      _
    $region3: #{tpu_custom_call.1} parent=1 // pred_check_branch
      %17 = sbr.rel (0) target = $region5
    $region4: #{tpu_custom_call.1} parent=1 // pred_region
      %s19 = ssub.s32 384, 384
      %20 = vsyncadd [#allocation3], %s19
      %s22 = sshll.u32 [#allocation2], 4
      %s23 = int_to_ptr.vmem [resolvable:$true] %s22
      %25 = dma.hbm_to_vmem [thread:$0]  %s0, 384, %s23, [#allocation3]
    $region5: #{tpu_custom_call.1} parent=1 // pred_fallthru
      _
    // Predicated region
    $region6: #{tpu_custom_call.1} parent=1 // pred_check
      _
    $region7: #{tpu_custom_call.1} parent=1 // pred_check_branch
      %27 = sbr.rel (0) target = $region9
    $region8: #{tpu_custom_call.1} parent=1 // pred_region
      %s29 = ssub.s32 13120, 13120
      %30 = vsyncadd [#allocation6], %s29
      %s31 = sshll.u32 [#allocation5], 4
      %s32 = int_to_ptr.vmem [resolvable:$true] %s31
      %37 = dma.hbm_to_vmem [thread:$0]  %s1, 13120, %s32, [#allocation6], 320, 320, 20
    $region9: #{tpu_custom_call.1} parent=1 // pred_fallthru
      _
    // Predicated region
    $region10: #{tpu_custom_call.1} parent=1 // pred_check
      _
    $region11: #{tpu_custom_call.1} parent=1 // pred_check_branch
      %39 = sbr.rel (0) target = $region13
    $region12: #{tpu_custom_call.1} parent=1 // pred_region
      %s41 = ssub.s32 23040, 23040
      %42 = vsyncadd [#allocation6], %s41
      %s43 = sshll.u32 [#allocation7], 4
      %s44 = int_to_ptr.vmem [resolvable:$true] %s43
      %49 = dma.hbm_to_vmem [thread:$0]  %s2, 23040, %s44, [#allocation6], 320, 320, 20
    $region13: #{tpu_custom_call.1} parent=1 // pred_fallthru
      _
    // Predicated region
    $region14: #{tpu_custom_call.1} parent=1 // pred_check
      _
    $region15: #{tpu_custom_call.1} parent=1 // pred_check_branch
      %51 = sbr.rel (0) target = $region17
    $region16: #{tpu_custom_call.1} parent=1 // pred_region
      %s53 = ssub.s32 23040, 23040
      %54 = vsyncadd [#allocation9], %s53
      %s55 = sshll.u32 [#allocation8], 4
      %s56 = int_to_ptr.vmem [resolvable:$true] %s55
      %61 = dma.hbm_to_vmem [thread:$0]  %s3, 23040, %s56, [#allocation9], 320, 320, 20
    $region17: #{tpu_custom_call.1} parent=1 // pred_fallthru
      _
    // Predicated region
    $region18: #{tpu_custom_call.1} parent=1 // pred_check
      _
    $region19: #{tpu_custom_call.1} parent=1 // pred_check_branch
      %63 = sbr.rel (0) target = $region21
    $region20: #{tpu_custom_call.1} parent=1 // pred_region
      %s65 = ssub.s32 4608, 4608
      %66 = vsyncadd [#allocation9], %s65
      %s67 = sshll.u32 [#allocation10], 4
      %s68 = int_to_ptr.vmem [resolvable:$true] %s67
      %73 = dma.hbm_to_vmem [thread:$0]  %s4, 4608, %s68, [#allocation9], 64, 64, 4
    $region21: #{tpu_custom_call.1} parent=1 // pred_fallthru
      _
    // Predicated region
    $region22: #{tpu_custom_call.1} parent=1 // pred_check
      _
    $region23: #{tpu_custom_call.1} parent=1 // pred_check_branch
      %75 = sbr.rel (0) target = $region25
    $region24: #{tpu_custom_call.1} parent=1 // pred_region
      %s77 = ssub.s32 640, 640
      %78 = vsyncadd [#allocation12], %s77
      %s80 = sshll.u32 [#allocation11], 4
      %s81 = int_to_ptr.vmem [resolvable:$true] %s80
      %83 = dma.hbm_to_vmem [thread:$0]  %s5, 640, %s81, [#allocation12]
    $region25: #{tpu_custom_call.1} parent=1 // pred_fallthru
      _
    // Predicated region
    $region26: #{tpu_custom_call.1} parent=1 // pred_check
      _
    $region27: #{tpu_custom_call.1} parent=1 // pred_check_branch
      %85 = sbr.rel (0) target = $region29
    $region28: #{tpu_custom_call.1} parent=1 // pred_region
      %86 = dma.done [#allocation3], 384
    $region29: #{tpu_custom_call.1} parent=1 // pred_fallthru
      _
    // Predicated region
    $region30: #{tpu_custom_call.1} parent=1 // pred_check
      _
    $region31: #{tpu_custom_call.1} parent=1 // pred_check_branch
      %88 = sbr.rel (0) target = $region33
    $region32: #{tpu_custom_call.1} parent=1 // pred_region
      %89 = dma.done [#allocation6], 13120
    $region33: #{tpu_custom_call.1} parent=1 // pred_fallthru
      _
    // Predicated region
    $region34: #{tpu_custom_call.1} parent=1 // pred_check
      _
    $region35: #{tpu_custom_call.1} parent=1 // pred_check_branch
      %91 = sbr.rel (0) target = $region37
    $region36: #{tpu_custom_call.1} parent=1 // pred_region
      %92 = dma.done [#allocation6], 23040
    $region37: #{tpu_custom_call.1} parent=1 // pred_fallthru
      _
    // Predicated region
    $region38: #{tpu_custom_call.1} parent=1 // pred_check
      _
    $region39: #{tpu_custom_call.1} parent=1 // pred_check_branch
      %94 = sbr.rel (0) target = $region41
    $region40: #{tpu_custom_call.1} parent=1 // pred_region
      %95 = dma.done [#allocation9], 23040
    $region41: #{tpu_custom_call.1} parent=1 // pred_fallthru
      _
    // Predicated region
    $region42: #{tpu_custom_call.1} parent=1 // pred_check
      _
    $region43: #{tpu_custom_call.1} parent=1 // pred_check_branch
      %97 = sbr.rel (0) target = $region45
    $region44: #{tpu_custom_call.1} parent=1 // pred_region
      %98 = dma.done [#allocation9], 4608
    $region45: #{tpu_custom_call.1} parent=1 // pred_fallthru
      _
    // Predicated region
    $region46: #{tpu_custom_call.1} parent=1 // pred_check
      _
    $region47: #{tpu_custom_call.1} parent=1 // pred_check_branch
      %100 = sbr.rel (0) target = $region49
    $region48: #{tpu_custom_call.1} parent=1 // pred_region
      %101 = dma.done [#allocation12], 640
    $region49: #{tpu_custom_call.1} parent=1 // pred_fallthru
      _
    %v103 = vld [vmem:[#allocation11] ss:$8 sm:$0xf]
    %v104 = vld [vmem:[#allocation11] ss:$8 sm:$0x10]
    %v105 = vor.u32 %v103, %v104
    %s106 = scalar_lea.vmem [#allocation11], 1
    %v107 = vld [vmem:[%s106] ss:$8 sm:$0xf]
    %v108 = vld [vmem:[%s106] ss:$8 sm:$0x10]
    %v109 = vor.u32 %v107, %v108
    %s110 = scalar_lea.vmem [#allocation11], 2
    %v111 = vld [vmem:[%s110] ss:$8 sm:$0xf]
    %v112 = vld [vmem:[%s110] ss:$8 sm:$0x10]
    %v113 = vor.u32 %v111, %v112
    %v114 = vld [vmem:[#allocation11 + $0x3] ss:$0 sm:$0xff]
    %v115 = vld [vmem:[#allocation2] sm:$0xff]
    %v116 = vld [vmem:[#allocation2 + $0x8] sm:$0xff]
    %v117 = vld [vmem:[#allocation2 + $0x10] sm:$0xff]
    %v118 = vpack.c.bf16 %v115, %v115
    %v119 = vpack.c.bf16 %v116, %v116
    %v120 = vpack.c.bf16 %v117, %v117
    %v121 = vld [vmem:[#allocation5] sm:$0xff]
    %v122 = vld [vmem:[#allocation5 + $0x8] sm:$0xff]
    %v123 = vld [vmem:[#allocation5 + $0x10] sm:$0xf]
    %v124 = vld [vmem:[#allocation5 + $0x14] sm:$0xff]
    %v125 = vld [vmem:[#allocation5 + $0x1c] sm:$0xff]
    %v126 = vld [vmem:[#allocation5 + $0x24] sm:$0xf]
    %v127 = vld [vmem:[#allocation5 + $0x28] sm:$0xff]
    %v128 = vld [vmem:[#allocation5 + $0x30] sm:$0xff]
    %v129 = vld [vmem:[#allocation5 + $0x38] sm:$0xf]
    %v130 = vld [vmem:[#allocation5 + $0x3c] sm:$0xff]
    %v131 = vld [vmem:[#allocation5 + $0x44] sm:$0xff]
    %v132 = vld [vmem:[#allocation5 + $0x4c] sm:$0xf]
    %v133 = vld [vmem:[#allocation5 + $0x50] sm:$0xff]
    %v134 = vld [vmem:[#allocation5 + $0x58] sm:$0xff]
    %v135 = vld [vmem:[#allocation5 + $0x60] sm:$0xf]
    %v136 = vld [vmem:[#allocation5 + $0x64] sm:$0xff]
    %v137 = vld [vmem:[#allocation5 + $0x6c] sm:$0xff]
    %v138 = vld [vmem:[#allocation5 + $0x74] sm:$0xf]
    %v139 = vld [vmem:[#allocation5 + $0x78] sm:$0xff]
    %v140 = vld [vmem:[#allocation5 + $0x80] sm:$0xff]
    %v141 = vld [vmem:[#allocation5 + $0x88] sm:$0xf]
    %v142 = vld [vmem:[#allocation5 + $0x8c] sm:$0xff]
    %v143 = vld [vmem:[#allocation5 + $0x94] sm:$0xff]
    %v144 = vld [vmem:[#allocation5 + $0x9c] sm:$0xf]
    %v145 = vld [vmem:[#allocation5 + $0xa0] sm:$0xff]
    %v146 = vld [vmem:[#allocation5 + $0xa8] sm:$0xff]
    %v147 = vld [vmem:[#allocation5 + $0xb0] sm:$0xf]
    %v148 = vld [vmem:[#allocation5 + $0xb4] sm:$0xff]
    %v149 = vld [vmem:[#allocation5 + $0xbc] sm:$0xff]
    %v150 = vld [vmem:[#allocation5 + $0xc4] sm:$0xf]
    %v151 = vld [vmem:[#allocation5 + $0xc8] sm:$0xff]
    %v152 = vld [vmem:[#allocation5 + $0xd0] sm:$0xff]
    %v153 = vld [vmem:[#allocation5 + $0xd8] sm:$0xf]
    %v154 = vld [vmem:[#allocation5 + $0xdc] sm:$0xff]
    %v155 = vld [vmem:[#allocation5 + $0xe4] sm:$0xff]
    %v156 = vld [vmem:[#allocation5 + $0xec] sm:$0xf]
    %v157 = vld [vmem:[#allocation5 + $0xf0] sm:$0xff]
    %v158 = vld [vmem:[#allocation5 + $0xf8] sm:$0xff]
    %v159 = vld [vmem:[#allocation5 + $0x100] sm:$0xf]
    %v160 = vld [vmem:[#allocation5 + $0x104] sm:$0xff]
    %v161 = vld [vmem:[#allocation5 + $0x10c] sm:$0xff]
    %v162 = vld [vmem:[#allocation5 + $0x114] sm:$0xf]
    %v163 = vld [vmem:[#allocation5 + $0x118] sm:$0xff]
    %v164 = vld [vmem:[#allocation5 + $0x120] sm:$0xff]
    %v165 = vld [vmem:[#allocation5 + $0x128] sm:$0xf]
    %v166 = vld [vmem:[#allocation5 + $0x12c] sm:$0xff]
    %v167 = vld [vmem:[#allocation5 + $0x134] sm:$0xff]
    %v168 = vld [vmem:[#allocation5 + $0x13c] sm:$0xf]
    %v169 = vld [vmem:[#allocation5 + $0x140] sm:$0xff]
    %v170 = vld [vmem:[#allocation5 + $0x148] sm:$0xff]
    %v171 = vld [vmem:[#allocation5 + $0x150] sm:$0xf]
    %v172 = vld [vmem:[#allocation5 + $0x154] sm:$0xff]
    %v173 = vld [vmem:[#allocation5 + $0x15c] sm:$0xff]
    %v174 = vld [vmem:[#allocation5 + $0x164] sm:$0xf]
    %v175 = vld [vmem:[#allocation5 + $0x168] sm:$0xff]
    %v176 = vld [vmem:[#allocation5 + $0x170] sm:$0xff]
    %v177 = vld [vmem:[#allocation5 + $0x178] sm:$0xf]
    %v178 = vld [vmem:[#allocation5 + $0x17c] sm:$0xff]
    %v179 = vld [vmem:[#allocation5 + $0x184] sm:$0xff]
    %v180 = vld [vmem:[#allocation5 + $0x18c] sm:$0xf]
    %v181 = vld [vmem:[#allocation5 + $0x190] sm:$0xff]
    %v182 = vld [vmem:[#allocation5 + $0x198] sm:$0xff]
    %v183 = vld [vmem:[#allocation5 + $0x1a0] sm:$0xf]
    %v184 = vld [vmem:[#allocation5 + $0x1a4] sm:$0xff]
    %v185 = vld [vmem:[#allocation5 + $0x1ac] sm:$0xff]
    %v186 = vld [vmem:[#allocation5 + $0x1b4] sm:$0xf]
    %v187 = vld [vmem:[#allocation5 + $0x1b8] sm:$0xff]
    %v188 = vld [vmem:[#allocation5 + $0x1c0] sm:$0xff]
    %v189 = vld [vmem:[#allocation5 + $0x1c8] sm:$0xf]
    %v190 = vld [vmem:[#allocation5 + $0x1cc] sm:$0xff]
    %v191 = vld [vmem:[#allocation5 + $0x1d4] sm:$0xff]
    %v192 = vld [vmem:[#allocation5 + $0x1dc] sm:$0xf]
    %v193 = vld [vmem:[#allocation5 + $0x1e0] sm:$0xff]
    %v194 = vld [vmem:[#allocation5 + $0x1e8] sm:$0xff]
    %v195 = vld [vmem:[#allocation5 + $0x1f0] sm:$0xf]
    %v196 = vld [vmem:[#allocation5 + $0x1f4] sm:$0xff]
    %v197 = vld [vmem:[#allocation5 + $0x1fc] sm:$0xff]
    %v198 = vld [vmem:[#allocation5 + $0x204] sm:$0xf]
    %v199 = vld [vmem:[#allocation5 + $0x208] sm:$0xff]
    %v200 = vld [vmem:[#allocation5 + $0x210] sm:$0xff]
    %v201 = vld [vmem:[#allocation5 + $0x218] sm:$0xf]
    %v202 = vld [vmem:[#allocation5 + $0x21c] sm:$0xff]
    %v203 = vld [vmem:[#allocation5 + $0x224] sm:$0xff]
    %v204 = vld [vmem:[#allocation5 + $0x22c] sm:$0xf]
    %v205 = vld [vmem:[#allocation5 + $0x230] sm:$0xff]
    %v206 = vld [vmem:[#allocation5 + $0x238] sm:$0xff]
    %v207 = vld [vmem:[#allocation5 + $0x240] sm:$0xf]
    %v208 = vld [vmem:[#allocation5 + $0x244] sm:$0xff]
    %v209 = vld [vmem:[#allocation5 + $0x24c] sm:$0xff]
    %v210 = vld [vmem:[#allocation5 + $0x254] sm:$0xf]
    %v211 = vld [vmem:[#allocation5 + $0x258] sm:$0xff]
    %v212 = vld [vmem:[#allocation5 + $0x260] sm:$0xff]
    %v213 = vld [vmem:[#allocation5 + $0x268] sm:$0xf]
    %v214 = vld [vmem:[#allocation5 + $0x26c] sm:$0xff]
    %v215 = vld [vmem:[#allocation5 + $0x274] sm:$0xff]
    %v216 = vld [vmem:[#allocation5 + $0x27c] sm:$0xf]
    %v217 = vld [vmem:[#allocation5 + $0x280] sm:$0xff]
    %v218 = vld [vmem:[#allocation5 + $0x288] sm:$0xff]
    %v219 = vld [vmem:[#allocation5 + $0x290] sm:$0xf]
    %v220 = vld [vmem:[#allocation5 + $0x294] sm:$0xff]
    %v221 = vld [vmem:[#allocation5 + $0x29c] sm:$0xff]
    %v222 = vld [vmem:[#allocation5 + $0x2a4] sm:$0xf]
    %v223 = vld [vmem:[#allocation5 + $0x2a8] sm:$0xff]
    %v224 = vld [vmem:[#allocation5 + $0x2b0] sm:$0xff]
    %v225 = vld [vmem:[#allocation5 + $0x2b8] sm:$0xf]
    %v226 = vld [vmem:[#allocation5 + $0x2bc] sm:$0xff]
    %v227 = vld [vmem:[#allocation5 + $0x2c4] sm:$0xff]
    %v228 = vld [vmem:[#allocation5 + $0x2cc] sm:$0xf]
    %v229 = vld [vmem:[#allocation5 + $0x2d0] sm:$0xff]
    %v230 = vld [vmem:[#allocation5 + $0x2d8] sm:$0xff]
    %v231 = vld [vmem:[#allocation5 + $0x2e0] sm:$0xf]
    %v232 = vld [vmem:[#allocation5 + $0x2e4] sm:$0xff]
    %v233 = vld [vmem:[#allocation5 + $0x2ec] sm:$0xff]
    %v234 = vld [vmem:[#allocation5 + $0x2f4] sm:$0xf]
    %v235 = vld [vmem:[#allocation5 + $0x2f8] sm:$0xff]
    %v236 = vld [vmem:[#allocation5 + $0x300] sm:$0xff]
    %v237 = vld [vmem:[#allocation5 + $0x308] sm:$0xf]
    %v238 = vld [vmem:[#allocation5 + $0x30c] sm:$0xff]
    %v239 = vld [vmem:[#allocation5 + $0x314] sm:$0xff]
    %v240 = vld [vmem:[#allocation5 + $0x31c] sm:$0xf]
    %v241 = vld [vmem:[#allocation5 + $0x320] sm:$0x77]
    %v242 = vld [vmem:[#allocation5 + $0x328] sm:$0x77]
    %v243 = vld [vmem:[#allocation5 + $0x330] sm:$0x7]
    %v367 = vunpack.c.l.b16 %v121
    %v368 = vunpack.c.h.b16 %v121
    %v369 = vunpack.c.l.b16 %v122
    %v370 = vunpack.c.h.b16 %v122
    %v371 = vunpack.c.l.b16 %v123
    %v372 = vunpack.c.l.b16 %v124
    %v373 = vunpack.c.h.b16 %v124
    %v374 = vunpack.c.l.b16 %v125
    %v375 = vunpack.c.h.b16 %v125
    %v376 = vunpack.c.l.b16 %v126
    %v377 = vunpack.c.l.b16 %v127
    %v378 = vunpack.c.h.b16 %v127
    %v379 = vunpack.c.l.b16 %v128
    %v380 = vunpack.c.h.b16 %v128
    %v381 = vunpack.c.l.b16 %v129
    %v382 = vunpack.c.l.b16 %v130
    %v383 = vunpack.c.h.b16 %v130
    %v384 = vunpack.c.l.b16 %v131
    %v385 = vunpack.c.h.b16 %v131
    %v386 = vunpack.c.l.b16 %v132
    %v387 = vunpack.c.l.b16 %v133
    %v388 = vunpack.c.h.b16 %v133
    %v389 = vunpack.c.l.b16 %v134
    %v390 = vunpack.c.h.b16 %v134
    %v391 = vunpack.c.l.b16 %v135
    %v392 = vunpack.c.l.b16 %v136
    %v393 = vunpack.c.h.b16 %v136
    %v394 = vunpack.c.l.b16 %v137
    %v395 = vunpack.c.h.b16 %v137
    %v396 = vunpack.c.l.b16 %v138
    %v397 = vunpack.c.l.b16 %v139
    %v398 = vunpack.c.h.b16 %v139
    %v399 = vunpack.c.l.b16 %v140
    %v400 = vunpack.c.h.b16 %v140
    %v401 = vunpack.c.l.b16 %v141
    %v402 = vunpack.c.l.b16 %v142
    %v403 = vunpack.c.h.b16 %v142
    %v404 = vunpack.c.l.b16 %v143
    %v405 = vunpack.c.h.b16 %v143
    %v406 = vunpack.c.l.b16 %v144
    %v407 = vunpack.c.l.b16 %v145
    %v408 = vunpack.c.h.b16 %v145
    %v409 = vunpack.c.l.b16 %v146
    %v410 = vunpack.c.h.b16 %v146
    %v411 = vunpack.c.l.b16 %v147
    %v412 = vunpack.c.l.b16 %v148
    %v413 = vunpack.c.h.b16 %v148
    %v414 = vunpack.c.l.b16 %v149
    %v415 = vunpack.c.h.b16 %v149
    %v416 = vunpack.c.l.b16 %v150
    %v417 = vunpack.c.l.b16 %v151
    %v418 = vunpack.c.h.b16 %v151
    %v419 = vunpack.c.l.b16 %v152
    %v420 = vunpack.c.h.b16 %v152
    %v421 = vunpack.c.l.b16 %v153
    %v422 = vunpack.c.l.b16 %v154
    %v423 = vunpack.c.h.b16 %v154
    %v424 = vunpack.c.l.b16 %v155
    %v425 = vunpack.c.h.b16 %v155
    %v426 = vunpack.c.l.b16 %v156
    %v427 = vunpack.c.l.b16 %v157
    %v428 = vunpack.c.h.b16 %v157
    %v429 = vunpack.c.l.b16 %v158
    %v430 = vunpack.c.h.b16 %v158
    %v431 = vunpack.c.l.b16 %v159
    %v432 = vunpack.c.l.b16 %v160
    %v433 = vunpack.c.h.b16 %v160
    %v434 = vunpack.c.l.b16 %v161
    %v435 = vunpack.c.h.b16 %v161
    %v436 = vunpack.c.l.b16 %v162
    %v437 = vunpack.c.l.b16 %v163
    %v438 = vunpack.c.h.b16 %v163
    %v439 = vunpack.c.l.b16 %v164
    %v440 = vunpack.c.h.b16 %v164
    %v441 = vunpack.c.l.b16 %v165
    %v442 = vunpack.c.l.b16 %v166
    %v443 = vunpack.c.h.b16 %v166
    %v444 = vunpack.c.l.b16 %v167
    %v445 = vunpack.c.h.b16 %v167
    %v446 = vunpack.c.l.b16 %v168
    %v447 = vunpack.c.l.b16 %v169
    %v448 = vunpack.c.h.b16 %v169
    %v449 = vunpack.c.l.b16 %v170
    %v450 = vunpack.c.h.b16 %v170
    %v451 = vunpack.c.l.b16 %v171
    %v452 = vunpack.c.l.b16 %v172
    %v453 = vunpack.c.h.b16 %v172
    %v454 = vunpack.c.l.b16 %v173
    %v455 = vunpack.c.h.b16 %v173
    %v456 = vunpack.c.l.b16 %v174
    %v457 = vunpack.c.l.b16 %v175
    %v458 = vunpack.c.h.b16 %v175
    %v459 = vunpack.c.l.b16 %v176
    %v460 = vunpack.c.h.b16 %v176
    %v461 = vunpack.c.l.b16 %v177
    %v462 = vunpack.c.l.b16 %v178
    %v463 = vunpack.c.h.b16 %v178
    %v464 = vunpack.c.l.b16 %v179
    %v465 = vunpack.c.h.b16 %v179
    %v466 = vunpack.c.l.b16 %v180
    %v467 = vunpack.c.l.b16 %v181
    %v468 = vunpack.c.h.b16 %v181
    %v469 = vunpack.c.l.b16 %v182
    %v470 = vunpack.c.h.b16 %v182
    %v471 = vunpack.c.l.b16 %v183
    %v472 = vunpack.c.l.b16 %v184
    %v473 = vunpack.c.h.b16 %v184
    %v474 = vunpack.c.l.b16 %v185
    %v475 = vunpack.c.h.b16 %v185
    %v476 = vunpack.c.l.b16 %v186
    %v477 = vunpack.c.l.b16 %v187
    %v478 = vunpack.c.h.b16 %v187
    %v479 = vunpack.c.l.b16 %v188
    %v480 = vunpack.c.h.b16 %v188
    %v481 = vunpack.c.l.b16 %v189
    %v482 = vunpack.c.l.b16 %v190
    %v483 = vunpack.c.h.b16 %v190
    %v484 = vunpack.c.l.b16 %v191
    %v485 = vunpack.c.h.b16 %v191
    %v486 = vunpack.c.l.b16 %v192
    %v487 = vunpack.c.l.b16 %v193
    %v488 = vunpack.c.h.b16 %v193
    %v489 = vunpack.c.l.b16 %v194
    %v490 = vunpack.c.h.b16 %v194
    %v491 = vunpack.c.l.b16 %v195
    %v492 = vunpack.c.l.b16 %v196
    %v493 = vunpack.c.h.b16 %v196
    %v494 = vunpack.c.l.b16 %v197
    %v495 = vunpack.c.h.b16 %v197
    %v496 = vunpack.c.l.b16 %v198
    %v497 = vunpack.c.l.b16 %v199
    %v498 = vunpack.c.h.b16 %v199
    %v499 = vunpack.c.l.b16 %v200
    %v500 = vunpack.c.h.b16 %v200
    %v501 = vunpack.c.l.b16 %v201
    %v502 = vunpack.c.l.b16 %v202
    %v503 = vunpack.c.h.b16 %v202
    %v504 = vunpack.c.l.b16 %v203
    %v505 = vunpack.c.h.b16 %v203
    %v506 = vunpack.c.l.b16 %v204
    %v507 = vunpack.c.l.b16 %v205
    %v508 = vunpack.c.h.b16 %v205
    %v509 = vunpack.c.l.b16 %v206
    %v510 = vunpack.c.h.b16 %v206
    %v511 = vunpack.c.l.b16 %v207
    %v512 = vunpack.c.l.b16 %v208
    %v513 = vunpack.c.h.b16 %v208
    %v514 = vunpack.c.l.b16 %v209
    %v515 = vunpack.c.h.b16 %v209
    %v516 = vunpack.c.l.b16 %v210
    %v517 = vunpack.c.l.b16 %v211
    %v518 = vunpack.c.h.b16 %v211
    %v519 = vunpack.c.l.b16 %v212
    %v520 = vunpack.c.h.b16 %v212
    %v521 = vunpack.c.l.b16 %v213
    %v522 = vunpack.c.l.b16 %v214
    %v523 = vunpack.c.h.b16 %v214
    %v524 = vunpack.c.l.b16 %v215
    %v525 = vunpack.c.h.b16 %v215
    %v526 = vunpack.c.l.b16 %v216
    %v527 = vunpack.c.l.b16 %v217
    %v528 = vunpack.c.h.b16 %v217
    %v529 = vunpack.c.l.b16 %v218
    %v530 = vunpack.c.h.b16 %v218
    %v531 = vunpack.c.l.b16 %v219
    %v532 = vunpack.c.l.b16 %v220
    %v533 = vunpack.c.h.b16 %v220
    %v534 = vunpack.c.l.b16 %v221
    %v535 = vunpack.c.h.b16 %v221
    %v536 = vunpack.c.l.b16 %v222
    %v537 = vunpack.c.l.b16 %v223
    %v538 = vunpack.c.h.b16 %v223
    %v539 = vunpack.c.l.b16 %v224
    %v540 = vunpack.c.h.b16 %v224
    %v541 = vunpack.c.l.b16 %v225
    %v542 = vunpack.c.l.b16 %v226
    %v543 = vunpack.c.h.b16 %v226
    %v544 = vunpack.c.l.b16 %v227
    %v545 = vunpack.c.h.b16 %v227
    %v546 = vunpack.c.l.b16 %v228
    %v547 = vunpack.c.l.b16 %v229
    %v548 = vunpack.c.h.b16 %v229
    %v549 = vunpack.c.l.b16 %v230
    %v550 = vunpack.c.h.b16 %v230
    %v551 = vunpack.c.l.b16 %v231
    %v552 = vunpack.c.l.b16 %v232
    %v553 = vunpack.c.h.b16 %v232
    %v554 = vunpack.c.l.b16 %v233
    %v555 = vunpack.c.h.b16 %v233
    %v556 = vunpack.c.l.b16 %v234
    %v557 = vunpack.c.l.b16 %v235
    %v558 = vunpack.c.h.b16 %v235
    %v559 = vunpack.c.l.b16 %v236
    %v560 = vunpack.c.h.b16 %v236
    %v561 = vunpack.c.l.b16 %v237
    %v562 = vunpack.c.l.b16 %v238
    %v563 = vunpack.c.h.b16 %v238
    %v564 = vunpack.c.l.b16 %v239
    %v565 = vunpack.c.h.b16 %v239
    %v566 = vunpack.c.l.b16 %v240
    %v567 = vunpack.c.l.b16 %v241
    %v568 = vunpack.c.h.b16 %v241
    %v569 = vunpack.c.l.b16 %v242
    %v570 = vunpack.c.h.b16 %v242
    %v571 = vunpack.c.l.b16 %v243
    %v572 = vpack.c.b16 %v372, %v367
    %v573 = vpack.c.b16 %v373, %v368
    %v574 = vpack.c.b16 %v374, %v369
    %v575 = vpack.c.b16 %v375, %v370
    %v576 = vpack.c.b16 %v376, %v371
    %v577 = vpack.c.b16 %v382, %v377
    %v578 = vpack.c.b16 %v383, %v378
    %v579 = vpack.c.b16 %v384, %v379
    %v580 = vpack.c.b16 %v385, %v380
    %v581 = vpack.c.b16 %v386, %v381
    %v582 = vpack.c.b16 %v392, %v387
    %v583 = vpack.c.b16 %v393, %v388
    %v584 = vpack.c.b16 %v394, %v389
    %v585 = vpack.c.b16 %v395, %v390
    %v586 = vpack.c.b16 %v396, %v391
    %v587 = vpack.c.b16 %v402, %v397
    %v588 = vpack.c.b16 %v403, %v398
    %v589 = vpack.c.b16 %v404, %v399
    %v590 = vpack.c.b16 %v405, %v400
    %v591 = vpack.c.b16 %v406, %v401
    %v592 = vpack.c.b16 %v412, %v407
    %v593 = vpack.c.b16 %v413, %v408
    %v594 = vpack.c.b16 %v414, %v409
    %v595 = vpack.c.b16 %v415, %v410
    %v596 = vpack.c.b16 %v416, %v411
    %v597 = vpack.c.b16 %v422, %v417
    %v598 = vpack.c.b16 %v423, %v418
    %v599 = vpack.c.b16 %v424, %v419
    %v600 = vpack.c.b16 %v425, %v420
    %v601 = vpack.c.b16 %v426, %v421
    %v602 = vpack.c.b16 %v432, %v427
    %v603 = vpack.c.b16 %v433, %v428
    %v604 = vpack.c.b16 %v434, %v429
    %v605 = vpack.c.b16 %v435, %v430
    %v606 = vpack.c.b16 %v436, %v431
    %v607 = vpack.c.b16 %v442, %v437
    %v608 = vpack.c.b16 %v443, %v438
    %v609 = vpack.c.b16 %v444, %v439
    %v610 = vpack.c.b16 %v445, %v440
    %v611 = vpack.c.b16 %v446, %v441
    %v612 = vpack.c.b16 %v452, %v447
    %v613 = vpack.c.b16 %v453, %v448
    %v614 = vpack.c.b16 %v454, %v449
    %v615 = vpack.c.b16 %v455, %v450
    %v616 = vpack.c.b16 %v456, %v451
    %v617 = vpack.c.b16 %v462, %v457
    %v618 = vpack.c.b16 %v463, %v458
    %v619 = vpack.c.b16 %v464, %v459
    %v620 = vpack.c.b16 %v465, %v460
    %v621 = vpack.c.b16 %v466, %v461
    %v622 = vpack.c.b16 %v472, %v467
    %v623 = vpack.c.b16 %v473, %v468
    %v624 = vpack.c.b16 %v474, %v469
    %v625 = vpack.c.b16 %v475, %v470
    %v626 = vpack.c.b16 %v476, %v471
    %v627 = vpack.c.b16 %v482, %v477
    %v628 = vpack.c.b16 %v483, %v478
    %v629 = vpack.c.b16 %v484, %v479
    %v630 = vpack.c.b16 %v485, %v480
    %v631 = vpack.c.b16 %v486, %v481
    %v632 = vpack.c.b16 %v492, %v487
    %v633 = vpack.c.b16 %v493, %v488
    %v634 = vpack.c.b16 %v494, %v489
    %v635 = vpack.c.b16 %v495, %v490
    %v636 = vpack.c.b16 %v496, %v491
    %v637 = vpack.c.b16 %v502, %v497
    %v638 = vpack.c.b16 %v503, %v498
    %v639 = vpack.c.b16 %v504, %v499
    %v640 = vpack.c.b16 %v505, %v500
    %v641 = vpack.c.b16 %v506, %v501
    %v642 = vpack.c.b16 %v512, %v507
    %v643 = vpack.c.b16 %v513, %v508
    %v644 = vpack.c.b16 %v514, %v509
    %v645 = vpack.c.b16 %v515, %v510
    %v646 = vpack.c.b16 %v516, %v511
    %v647 = vpack.c.b16 %v522, %v517
    %v648 = vpack.c.b16 %v523, %v518
    %v649 = vpack.c.b16 %v524, %v519
    %v650 = vpack.c.b16 %v525, %v520
    %v651 = vpack.c.b16 %v526, %v521
    %v652 = vpack.c.b16 %v532, %v527
    %v653 = vpack.c.b16 %v533, %v528
    %v654 = vpack.c.b16 %v534, %v529
    %v655 = vpack.c.b16 %v535, %v530
    %v656 = vpack.c.b16 %v536, %v531
    %v657 = vpack.c.b16 %v542, %v537
    %v658 = vpack.c.b16 %v543, %v538
    %v659 = vpack.c.b16 %v544, %v539
    %v660 = vpack.c.b16 %v545, %v540
    %v661 = vpack.c.b16 %v546, %v541
    %v662 = vpack.c.b16 %v552, %v547
    %v663 = vpack.c.b16 %v553, %v548
    %v664 = vpack.c.b16 %v554, %v549
    %v665 = vpack.c.b16 %v555, %v550
    %v666 = vpack.c.b16 %v556, %v551
    %v667 = vpack.c.b16 %v562, %v557
    %v668 = vpack.c.b16 %v563, %v558
    %v669 = vpack.c.b16 %v564, %v559
    %v670 = vpack.c.b16 %v565, %v560
    %v671 = vpack.c.b16 %v566, %v561
    %v672 = vpack.c.b16 %v567, %v567
    %v673 = vpack.c.b16 %v568, %v568
    %v674 = vpack.c.b16 %v569, %v569
    %v675 = vpack.c.b16 %v570, %v570
    %v676 = vpack.c.b16 %v571, %v571
    %vm777 = vcmask 564224
    %v779 = vsel %vm777, %v120, 0
    %vm781 = vcmask 1041408
    %vm782 = vcmask 1042432
    %v783 = vsel %vm781, 4294967295, 65535
    %v784 = vsel %vm782, %v783, 0
    %v786 = vand.u32 %v672, %v784
    %v789 = vand.u32 %v673, %v784
    %v792 = vand.u32 %v674, %v784
    %v795 = vand.u32 %v675, %v784
    %v798 = vand.u32 %v676, %v784
    %800 = vmatprep.subr.bf16.mxu0 %v573
    %801 = vmatpush1.bf16.msra.mxu0 %v572
    %802 = vmatprep.subr.bf16.mxu0 %v578
    %803 = vmatpush1.bf16.msra.mxu0 %v577
    %804 = vmatprep.subr.bf16.mxu0 %v583
    %805 = vmatpush1.bf16.msra.mxu0 %v582
    %806 = vmatprep.subr.bf16.mxu0 %v588
    %807 = vmatpush1.bf16.msra.mxu0 %v587
    %808 = vmatprep.subr.bf16.mxu0 %v593
    %809 = vmatpush1.bf16.msra.mxu0 %v592
    %810 = vmatprep.subr.bf16.mxu0 %v598
    %811 = vmatpush1.bf16.msra.mxu0 %v597
    %812 = vmatprep.subr.bf16.mxu0 %v603
    %813 = vmatpush1.bf16.msra.mxu0 %v602
    %814 = vmatprep.subr.bf16.mxu0 %v608
    %815 = vmatpush1.bf16.msra.mxu0 %v607
    %816 = vmatprep.subr.bf16.mxu0 %v613
    %817 = vmatpush1.bf16.msra.mxu0 %v612
    %818 = vmatprep.subr.bf16.mxu0 %v618
    %819 = vmatpush1.bf16.msra.mxu0 %v617
    %820 = vmatprep.subr.bf16.mxu0 %v623
    %821 = vmatpush1.bf16.msra.mxu0 %v622
    %822 = vmatprep.subr.bf16.mxu0 %v628
    %823 = vmatpush1.bf16.msra.mxu0 %v627
    %824 = vmatprep.subr.bf16.mxu0 %v633
    %825 = vmatpush1.bf16.msra.mxu0 %v632
    %826 = vmatprep.subr.bf16.mxu0 %v638
    %827 = vmatpush1.bf16.msra.mxu0 %v637
    %828 = vmatprep.subr.bf16.mxu0 %v643
    %829 = vmatpush1.bf16.msra.mxu0 %v642
    %830 = vmatprep.subr.bf16.mxu0 %v648
    %831 = vmatpush1.bf16.msra.mxu0 %v647
    %832 = vmatprep.mubr.bf16.mxu0 %v119
    %833 = vmatmul.mubr.bf16.gmra.mrb[0].mxu0 %v118
    %v834 = vpop.f32.mrb[0].mxu0
    %v835 = vadd.f32 0.0, %v834
    %v836 = vpop.f32.mrb[0].mxu0
    %v837 = vadd.f32 0.0, %v836
    %v838 = vpop.f32.mrb[0].mxu0
    %v839 = vpop.f32.mrb[0].mxu0
    %840 = vdwg.mxu0
    %841 = vmatprep.subr.bf16.mxu0 %v653
    %842 = vmatpush1.bf16.msra.mxu0 %v652
    %843 = vmatprep.subr.bf16.mxu0 %v658
    %844 = vmatpush1.bf16.msra.mxu0 %v657
    %845 = vmatprep.subr.bf16.mxu0 %v663
    %846 = vmatpush1.bf16.msra.mxu0 %v662
    %847 = vmatprep.subr.bf16.mxu0 %v668
    %848 = vmatpush1.bf16.msra.mxu0 %v667
    %849 = vmatprep.subr.bf16.mxu0 %v789
    %850 = vmatpush1.bf16.msra.mxu0 %v786
    %851 = vmatprep.subr.bf16.mxu0 0
    %852 = vmatpush1.bf16.msra.mxu0 0
    %853 = vmatprep.subr.bf16.mxu0 0
    %854 = vmatpush1.bf16.msra.mxu0 0
    %855 = vmatprep.subr.bf16.mxu0 0
    %856 = vmatpush1.bf16.msra.mxu0 0
    %857 = vmatprep.subr.bf16.mxu0 0
    %858 = vmatpush1.bf16.msra.mxu0 0
    %859 = vmatprep.subr.bf16.mxu0 0
    %860 = vmatpush1.bf16.msra.mxu0 0
    %861 = vmatprep.subr.bf16.mxu0 0
    %862 = vmatpush1.bf16.msra.mxu0 0
    %863 = vmatprep.subr.bf16.mxu0 0
    %864 = vmatpush1.bf16.msra.mxu0 0
    %865 = vmatprep.subr.bf16.mxu0 0
    %866 = vmatpush1.bf16.msra.mxu0 0
    %867 = vmatprep.subr.bf16.mxu0 0
    %868 = vmatpush1.bf16.msra.mxu0 0
    %869 = vmatprep.subr.bf16.mxu0 0
    %870 = vmatpush1.bf16.msra.mxu0 0
    %871 = vmatprep.subr.bf16.mxu0 0
    %872 = vmatpush1.bf16.msra.mxu0 0
    %873 = vmatprep.mubr.bf16.mxu0 0
    %874 = vmatmul.mubr.bf16.gmra.mrb[0].mxu0 %v779
    %v875 = vpop.f32.mrb[0].mxu0
    %v876 = vadd.f32 %v835, %v875
    %v877 = vpop.f32.mrb[0].mxu0
    %v878 = vadd.f32 %v837, %v877
    %v879 = vpop.f32.mrb[0].mxu0
    %v880 = vpop.f32.mrb[0].mxu0
    %881 = vdwg.mxu0
    %882 = vmatprep.subr.bf16.mxu0 %v575
    %883 = vmatpush1.bf16.msra.mxu0 %v574
    %884 = vmatprep.subr.bf16.mxu0 %v580
    %885 = vmatpush1.bf16.msra.mxu0 %v579
    %886 = vmatprep.subr.bf16.mxu0 %v585
    %887 = vmatpush1.bf16.msra.mxu0 %v584
    %888 = vmatprep.subr.bf16.mxu0 %v590
    %889 = vmatpush1.bf16.msra.mxu0 %v589
    %890 = vmatprep.subr.bf16.mxu0 %v595
    %891 = vmatpush1.bf16.msra.mxu0 %v594
    %892 = vmatprep.subr.bf16.mxu0 %v600
    %893 = vmatpush1.bf16.msra.mxu0 %v599
    %894 = vmatprep.subr.bf16.mxu0 %v605
    %895 = vmatpush1.bf16.msra.mxu0 %v604
    %896 = vmatprep.subr.bf16.mxu0 %v610
    %897 = vmatpush1.bf16.msra.mxu0 %v609
    %898 = vmatprep.subr.bf16.mxu0 %v615
    %899 = vmatpush1.bf16.msra.mxu0 %v614
    %900 = vmatprep.subr.bf16.mxu0 %v620
    %901 = vmatpush1.bf16.msra.mxu0 %v619
    %902 = vmatprep.subr.bf16.mxu0 %v625
    %903 = vmatpush1.bf16.msra.mxu0 %v624
    %904 = vmatprep.subr.bf16.mxu0 %v630
    %905 = vmatpush1.bf16.msra.mxu0 %v629
    %906 = vmatprep.subr.bf16.mxu0 %v635
    %907 = vmatpush1.bf16.msra.mxu0 %v634
    %908 = vmatprep.subr.bf16.mxu0 %v640
    %909 = vmatpush1.bf16.msra.mxu0 %v639
    %910 = vmatprep.subr.bf16.mxu0 %v645
    %911 = vmatpush1.bf16.msra.mxu0 %v644
    %912 = vmatprep.subr.bf16.mxu0 %v650
    %913 = vmatpush1.bf16.msra.mxu0 %v649
    %914 = vmatprep.mubr.bf16.mxu0 %v119
    %915 = vmatmul.mubr.bf16.gmra.mrb[0].mxu0 %v118
    %v916 = vpop.f32.mrb[0].mxu0
    %v917 = vadd.f32 0.0, %v916
    %v918 = vpop.f32.mrb[0].mxu0
    %v919 = vadd.f32 0.0, %v918
    %v920 = vpop.f32.mrb[0].mxu0
    %v921 = vpop.f32.mrb[0].mxu0
    %922 = vdwg.mxu0
    %923 = vmatprep.subr.bf16.mxu0 %v655
    %924 = vmatpush1.bf16.msra.mxu0 %v654
    %925 = vmatprep.subr.bf16.mxu0 %v660
    %926 = vmatpush1.bf16.msra.mxu0 %v659
    %927 = vmatprep.subr.bf16.mxu0 %v665
    %928 = vmatpush1.bf16.msra.mxu0 %v664
    %929 = vmatprep.subr.bf16.mxu0 %v670
    %930 = vmatpush1.bf16.msra.mxu0 %v669
    %931 = vmatprep.subr.bf16.mxu0 %v795
    %932 = vmatpush1.bf16.msra.mxu0 %v792
    %933 = vmatprep.subr.bf16.mxu0 0
    %934 = vmatpush1.bf16.msra.mxu0 0
    %935 = vmatprep.subr.bf16.mxu0 0
    %936 = vmatpush1.bf16.msra.mxu0 0
    %937 = vmatprep.subr.bf16.mxu0 0
    %938 = vmatpush1.bf16.msra.mxu0 0
    %939 = vmatprep.subr.bf16.mxu0 0
    %940 = vmatpush1.bf16.msra.mxu0 0
    %941 = vmatprep.subr.bf16.mxu0 0
    %942 = vmatpush1.bf16.msra.mxu0 0
    %943 = vmatprep.subr.bf16.mxu0 0
    %944 = vmatpush1.bf16.msra.mxu0 0
    %945 = vmatprep.subr.bf16.mxu0 0
    %946 = vmatpush1.bf16.msra.mxu0 0
    %947 = vmatprep.subr.bf16.mxu0 0
    %948 = vmatpush1.bf16.msra.mxu0 0
    %949 = vmatprep.subr.bf16.mxu0 0
    %950 = vmatpush1.bf16.msra.mxu0 0
    %951 = vmatprep.subr.bf16.mxu0 0
    %952 = vmatpush1.bf16.msra.mxu0 0
    %953 = vmatprep.subr.bf16.mxu0 0
    %954 = vmatpush1.bf16.msra.mxu0 0
    %955 = vmatprep.mubr.bf16.mxu0 0
    %956 = vmatmul.mubr.bf16.gmra.mrb[0].mxu0 %v779
    %v957 = vpop.f32.mrb[0].mxu0
    %v958 = vadd.f32 %v917, %v957
    %v959 = vpop.f32.mrb[0].mxu0
    %v960 = vadd.f32 %v919, %v959
    %v961 = vpop.f32.mrb[0].mxu0
    %v962 = vpop.f32.mrb[0].mxu0
    %963 = vdwg.mxu0
    %964 = vmatprep.subr.bf16.mxu0 0
    %965 = vmatpush1.bf16.msra.mxu0 %v576
    %966 = vmatprep.subr.bf16.mxu0 0
    %967 = vmatpush1.bf16.msra.mxu0 %v581
    %968 = vmatprep.subr.bf16.mxu0 0
    %969 = vmatpush1.bf16.msra.mxu0 %v586
    %970 = vmatprep.subr.bf16.mxu0 0
    %971 = vmatpush1.bf16.msra.mxu0 %v591
    %972 = vmatprep.subr.bf16.mxu0 0
    %973 = vmatpush1.bf16.msra.mxu0 %v596
    %974 = vmatprep.subr.bf16.mxu0 0
    %975 = vmatpush1.bf16.msra.mxu0 %v601
    %976 = vmatprep.subr.bf16.mxu0 0
    %977 = vmatpush1.bf16.msra.mxu0 %v606
    %978 = vmatprep.subr.bf16.mxu0 0
    %979 = vmatpush1.bf16.msra.mxu0 %v611
    %980 = vmatprep.subr.bf16.mxu0 0
    %981 = vmatpush1.bf16.msra.mxu0 %v616
    %982 = vmatprep.subr.bf16.mxu0 0
    %983 = vmatpush1.bf16.msra.mxu0 %v621
    %984 = vmatprep.subr.bf16.mxu0 0
    %985 = vmatpush1.bf16.msra.mxu0 %v626
    %986 = vmatprep.subr.bf16.mxu0 0
    %987 = vmatpush1.bf16.msra.mxu0 %v631
    %988 = vmatprep.subr.bf16.mxu0 0
    %989 = vmatpush1.bf16.msra.mxu0 %v636
    %990 = vmatprep.subr.bf16.mxu0 0
    %991 = vmatpush1.bf16.msra.mxu0 %v641
    %992 = vmatprep.subr.bf16.mxu0 0
    %993 = vmatpush1.bf16.msra.mxu0 %v646
    %994 = vmatprep.subr.bf16.mxu0 0
    %995 = vmatpush1.bf16.msra.mxu0 %v651
    %996 = vmatprep.mubr.bf16.mxu0 %v119
    %997 = vmatmul.mubr.bf16.gmra.mrb[0].mxu0 %v118
    %v998 = vpop.f32.mrb[0].mxu0
    %v999 = vadd.f32 0.0, %v998
    %v1000 = vpop.f32.mrb[0].mxu0
    %v1001 = vpop.f32.mrb[0].mxu0
    %v1002 = vpop.f32.mrb[0].mxu0
    %1003 = vdwg.mxu0
    %1004 = vmatprep.subr.bf16.mxu0 0
    %1005 = vmatpush1.bf16.msra.mxu0 %v656
    %1006 = vmatprep.subr.bf16.mxu0 0
    %1007 = vmatpush1.bf16.msra.mxu0 %v661
    %1008 = vmatprep.subr.bf16.mxu0 0
    %1009 = vmatpush1.bf16.msra.mxu0 %v666
    %1010 = vmatprep.subr.bf16.mxu0 0
    %1011 = vmatpush1.bf16.msra.mxu0 %v671
    %1012 = vmatprep.subr.bf16.mxu0 0
    %1013 = vmatpush1.bf16.msra.mxu0 %v798
    %1014 = vmatprep.subr.bf16.mxu0 0
    %1015 = vmatpush1.bf16.msra.mxu0 0
    %1016 = vmatprep.subr.bf16.mxu0 0
    %1017 = vmatpush1.bf16.msra.mxu0 0
    %1018 = vmatprep.subr.bf16.mxu0 0
    %1019 = vmatpush1.bf16.msra.mxu0 0
    %1020 = vmatprep.subr.bf16.mxu0 0
    %1021 = vmatpush1.bf16.msra.mxu0 0
    %1022 = vmatprep.subr.bf16.mxu0 0
    %1023 = vmatpush1.bf16.msra.mxu0 0
    %1024 = vmatprep.subr.bf16.mxu0 0
    %1025 = vmatpush1.bf16.msra.mxu0 0
    %1026 = vmatprep.subr.bf16.mxu0 0
    %1027 = vmatpush1.bf16.msra.mxu0 0
    %1028 = vmatprep.subr.bf16.mxu0 0
    %1029 = vmatpush1.bf16.msra.mxu0 0
    %1030 = vmatprep.subr.bf16.mxu0 0
    %1031 = vmatpush1.bf16.msra.mxu0 0
    %1032 = vmatprep.subr.bf16.mxu0 0
    %1033 = vmatpush1.bf16.msra.mxu0 0
    %1034 = vmatprep.subr.bf16.mxu0 0
    %1035 = vmatpush1.bf16.msra.mxu0 0
    %1036 = vmatprep.mubr.bf16.mxu0 0
    %1037 = vmatmul.mubr.bf16.gmra.mrb[0].mxu0 %v779
    %v1038 = vpop.f32.mrb[0].mxu0
    %v1039 = vadd.f32 %v999, %v1038
    %v1040 = vpop.f32.mrb[0].mxu0
    %v1041 = vpop.f32.mrb[0].mxu0
    %v1042 = vpop.f32.mrb[0].mxu0
    %1043 = vdwg.mxu0
    %v1045 = vlaneseq
    %v1046 = vshrl.u32 %v1045, 7
    %v1047 = vsub.s32 0, %v1046
    %v1048 = vrot.slane %v105, %v1047
    %v1049 = vlaneseq
    %v1050 = vshrl.u32 %v1049, 7
    %v1051 = vsub.s32 1, %v1050
    %v1052 = vrot.slane %v105, %v1051
    %v1053 = vlaneseq
    %v1054 = vshrl.u32 %v1053, 7
    %v1055 = vsub.s32 2, %v1054
    %v1056 = vrot.slane %v105, %v1055
    %v1057 = vlaneseq
    %v1058 = vshrl.u32 %v1057, 7
    %v1059 = vsub.s32 3, %v1058
    %v1060 = vrot.slane %v105, %v1059
    %v1061 = vlaneseq
    %v1062 = vshrl.u32 %v1061, 7
    %v1063 = vsub.s32 4, %v1062
    %v1064 = vrot.slane %v105, %v1063
    %v1070 = vmul.f32 %v876, %v1048
    %v1071 = vmul.f32 %v878, %v1052
    %v1072 = vmul.f32 %v958, %v1056
    %v1073 = vmul.f32 %v960, %v1060
    %v1074 = vmul.f32 %v1039, %v1064
    %v1076 = vlaneseq
    %v1077 = vshrl.u32 %v1076, 7
    %v1078 = vsub.s32 0, %v1077
    %v1079 = vrot.slane %v109, %v1078
    %v1080 = vlaneseq
    %v1081 = vshrl.u32 %v1080, 7
    %v1082 = vsub.s32 1, %v1081
    %v1083 = vrot.slane %v109, %v1082
    %v1084 = vlaneseq
    %v1085 = vshrl.u32 %v1084, 7
    %v1086 = vsub.s32 2, %v1085
    %v1087 = vrot.slane %v109, %v1086
    %v1088 = vlaneseq
    %v1089 = vshrl.u32 %v1088, 7
    %v1090 = vsub.s32 3, %v1089
    %v1091 = vrot.slane %v109, %v1090
    %v1092 = vlaneseq
    %v1093 = vshrl.u32 %v1092, 7
    %v1094 = vsub.s32 4, %v1093
    %v1095 = vrot.slane %v109, %v1094
    %v1101 = vadd.f32 %v1070, %v1079
    %v1102 = vadd.f32 %v1071, %v1083
    %v1103 = vadd.f32 %v1072, %v1087
    %v1104 = vadd.f32 %v1073, %v1091
    %v1105 = vadd.f32 %v1074, %v1095
    %v1106 = vmax.f32 %v1101, 0.0
    %v1107 = vmax.f32 %v1102, 0.0
    %v1108 = vmax.f32 %v1103, 0.0
    %v1109 = vmax.f32 %v1104, 0.0
    %v1110 = vmax.f32 %v1105, 0.0
    %v1111 = vpack.c.bf16 %v1106, %v1106
    %v1112 = vpack.c.bf16 %v1107, %v1107
    %v1113 = vpack.c.bf16 %v1108, %v1108
    %v1114 = vpack.c.bf16 %v1109, %v1109
    %v1115 = vpack.c.bf16 %v1110, %v1110
    %v1116 = vld [vmem:[#allocation7] sm:$0xff]
    %v1117 = vld [vmem:[#allocation7 + $0x8] sm:$0xff]
    %v1118 = vld [vmem:[#allocation7 + $0x10] sm:$0xf]
    %v1119 = vld [vmem:[#allocation7 + $0x14] sm:$0xff]
    %v1120 = vld [vmem:[#allocation7 + $0x1c] sm:$0xff]
    %v1121 = vld [vmem:[#allocation7 + $0x24] sm:$0xf]
    %v1122 = vld [vmem:[#allocation7 + $0x28] sm:$0xff]
    %v1123 = vld [vmem:[#allocation7 + $0x30] sm:$0xff]
    %v1124 = vld [vmem:[#allocation7 + $0x38] sm:$0xf]
    %v1125 = vld [vmem:[#allocation7 + $0x3c] sm:$0xff]
    %v1126 = vld [vmem:[#allocation7 + $0x44] sm:$0xff]
    %v1127 = vld [vmem:[#allocation7 + $0x4c] sm:$0xf]
    %v1128 = vld [vmem:[#allocation7 + $0x50] sm:$0xff]
    %v1129 = vld [vmem:[#allocation7 + $0x58] sm:$0xff]
    %v1130 = vld [vmem:[#allocation7 + $0x60] sm:$0xf]
    %v1131 = vld [vmem:[#allocation7 + $0x64] sm:$0xff]
    %v1132 = vld [vmem:[#allocation7 + $0x6c] sm:$0xff]
    %v1133 = vld [vmem:[#allocation7 + $0x74] sm:$0xf]
    %v1134 = vld [vmem:[#allocation7 + $0x78] sm:$0xff]
    %v1135 = vld [vmem:[#allocation7 + $0x80] sm:$0xff]
    %v1136 = vld [vmem:[#allocation7 + $0x88] sm:$0xf]
    %v1137 = vld [vmem:[#allocation7 + $0x8c] sm:$0xff]
    %v1138 = vld [vmem:[#allocation7 + $0x94] sm:$0xff]
    %v1139 = vld [vmem:[#allocation7 + $0x9c] sm:$0xf]
    %v1140 = vld [vmem:[#allocation7 + $0xa0] sm:$0xff]
    %v1141 = vld [vmem:[#allocation7 + $0xa8] sm:$0xff]
    %v1142 = vld [vmem:[#allocation7 + $0xb0] sm:$0xf]
    %v1143 = vld [vmem:[#allocation7 + $0xb4] sm:$0xff]
    %v1144 = vld [vmem:[#allocation7 + $0xbc] sm:$0xff]
    %v1145 = vld [vmem:[#allocation7 + $0xc4] sm:$0xf]
    %v1146 = vld [vmem:[#allocation7 + $0xc8] sm:$0xff]
    %v1147 = vld [vmem:[#allocation7 + $0xd0] sm:$0xff]
    %v1148 = vld [vmem:[#allocation7 + $0xd8] sm:$0xf]
    %v1149 = vld [vmem:[#allocation7 + $0xdc] sm:$0xff]
    %v1150 = vld [vmem:[#allocation7 + $0xe4] sm:$0xff]
    %v1151 = vld [vmem:[#allocation7 + $0xec] sm:$0xf]
    %v1152 = vld [vmem:[#allocation7 + $0xf0] sm:$0xff]
    %v1153 = vld [vmem:[#allocation7 + $0xf8] sm:$0xff]
    %v1154 = vld [vmem:[#allocation7 + $0x100] sm:$0xf]
    %v1155 = vld [vmem:[#allocation7 + $0x104] sm:$0xff]
    %v1156 = vld [vmem:[#allocation7 + $0x10c] sm:$0xff]
    %v1157 = vld [vmem:[#allocation7 + $0x114] sm:$0xf]
    %v1158 = vld [vmem:[#allocation7 + $0x118] sm:$0xff]
    %v1159 = vld [vmem:[#allocation7 + $0x120] sm:$0xff]
    %v1160 = vld [vmem:[#allocation7 + $0x128] sm:$0xf]
    %v1161 = vld [vmem:[#allocation7 + $0x12c] sm:$0xff]
    %v1162 = vld [vmem:[#allocation7 + $0x134] sm:$0xff]
    %v1163 = vld [vmem:[#allocation7 + $0x13c] sm:$0xf]
    %v1164 = vld [vmem:[#allocation7 + $0x140] sm:$0xff]
    %v1165 = vld [vmem:[#allocation7 + $0x148] sm:$0xff]
    %v1166 = vld [vmem:[#allocation7 + $0x150] sm:$0xf]
    %v1167 = vld [vmem:[#allocation7 + $0x154] sm:$0xff]
    %v1168 = vld [vmem:[#allocation7 + $0x15c] sm:$0xff]
    %v1169 = vld [vmem:[#allocation7 + $0x164] sm:$0xf]
    %v1170 = vld [vmem:[#allocation7 + $0x168] sm:$0xff]
    %v1171 = vld [vmem:[#allocation7 + $0x170] sm:$0xff]
    %v1172 = vld [vmem:[#allocation7 + $0x178] sm:$0xf]
    %v1173 = vld [vmem:[#allocation7 + $0x17c] sm:$0xff]
    %v1174 = vld [vmem:[#allocation7 + $0x184] sm:$0xff]
    %v1175 = vld [vmem:[#allocation7 + $0x18c] sm:$0xf]
    %v1176 = vld [vmem:[#allocation7 + $0x190] sm:$0xff]
    %v1177 = vld [vmem:[#allocation7 + $0x198] sm:$0xff]
    %v1178 = vld [vmem:[#allocation7 + $0x1a0] sm:$0xf]
    %v1179 = vld [vmem:[#allocation7 + $0x1a4] sm:$0xff]
    %v1180 = vld [vmem:[#allocation7 + $0x1ac] sm:$0xff]
    %v1181 = vld [vmem:[#allocation7 + $0x1b4] sm:$0xf]
    %v1182 = vld [vmem:[#allocation7 + $0x1b8] sm:$0xff]
    %v1183 = vld [vmem:[#allocation7 + $0x1c0] sm:$0xff]
    %v1184 = vld [vmem:[#allocation7 + $0x1c8] sm:$0xf]
    %v1185 = vld [vmem:[#allocation7 + $0x1cc] sm:$0xff]
    %v1186 = vld [vmem:[#allocation7 + $0x1d4] sm:$0xff]
    %v1187 = vld [vmem:[#allocation7 + $0x1dc] sm:$0xf]
    %v1188 = vld [vmem:[#allocation7 + $0x1e0] sm:$0xff]
    %v1189 = vld [vmem:[#allocation7 + $0x1e8] sm:$0xff]
    %v1190 = vld [vmem:[#allocation7 + $0x1f0] sm:$0xf]
    %v1191 = vld [vmem:[#allocation7 + $0x1f4] sm:$0xff]
    %v1192 = vld [vmem:[#allocation7 + $0x1fc] sm:$0xff]
    %v1193 = vld [vmem:[#allocation7 + $0x204] sm:$0xf]
    %v1194 = vld [vmem:[#allocation7 + $0x208] sm:$0xff]
    %v1195 = vld [vmem:[#allocation7 + $0x210] sm:$0xff]
    %v1196 = vld [vmem:[#allocation7 + $0x218] sm:$0xf]
    %v1197 = vld [vmem:[#allocation7 + $0x21c] sm:$0xff]
    %v1198 = vld [vmem:[#allocation7 + $0x224] sm:$0xff]
    %v1199 = vld [vmem:[#allocation7 + $0x22c] sm:$0xf]
    %v1200 = vld [vmem:[#allocation7 + $0x230] sm:$0xff]
    %v1201 = vld [vmem:[#allocation7 + $0x238] sm:$0xff]
    %v1202 = vld [vmem:[#allocation7 + $0x240] sm:$0xf]
    %v1203 = vld [vmem:[#allocation7 + $0x244] sm:$0xff]
    %v1204 = vld [vmem:[#allocation7 + $0x24c] sm:$0xff]
    %v1205 = vld [vmem:[#allocation7 + $0x254] sm:$0xf]
    %v1206 = vld [vmem:[#allocation7 + $0x258] sm:$0xff]
    %v1207 = vld [vmem:[#allocation7 + $0x260] sm:$0xff]
    %v1208 = vld [vmem:[#allocation7 + $0x268] sm:$0xf]
    %v1209 = vld [vmem:[#allocation7 + $0x26c] sm:$0xff]
    %v1210 = vld [vmem:[#allocation7 + $0x274] sm:$0xff]
    %v1211 = vld [vmem:[#allocation7 + $0x27c] sm:$0xf]
    %v1212 = vld [vmem:[#allocation7 + $0x280] sm:$0xff]
    %v1213 = vld [vmem:[#allocation7 + $0x288] sm:$0xff]
    %v1214 = vld [vmem:[#allocation7 + $0x290] sm:$0xf]
    %v1215 = vld [vmem:[#allocation7 + $0x294] sm:$0xff]
    %v1216 = vld [vmem:[#allocation7 + $0x29c] sm:$0xff]
    %v1217 = vld [vmem:[#allocation7 + $0x2a4] sm:$0xf]
    %v1218 = vld [vmem:[#allocation7 + $0x2a8] sm:$0xff]
    %v1219 = vld [vmem:[#allocation7 + $0x2b0] sm:$0xff]
    %v1220 = vld [vmem:[#allocation7 + $0x2b8] sm:$0xf]
    %v1221 = vld [vmem:[#allocation7 + $0x2bc] sm:$0xff]
    %v1222 = vld [vmem:[#allocation7 + $0x2c4] sm:$0xff]
    %v1223 = vld [vmem:[#allocation7 + $0x2cc] sm:$0xf]
    %v1224 = vld [vmem:[#allocation7 + $0x2d0] sm:$0xff]
    %v1225 = vld [vmem:[#allocation7 + $0x2d8] sm:$0xff]
    %v1226 = vld [vmem:[#allocation7 + $0x2e0] sm:$0xf]
    %v1227 = vld [vmem:[#allocation7 + $0x2e4] sm:$0xff]
    %v1228 = vld [vmem:[#allocation7 + $0x2ec] sm:$0xff]
    %v1229 = vld [vmem:[#allocation7 + $0x2f4] sm:$0xf]
    %v1230 = vld [vmem:[#allocation7 + $0x2f8] sm:$0xff]
    %v1231 = vld [vmem:[#allocation7 + $0x300] sm:$0xff]
    %v1232 = vld [vmem:[#allocation7 + $0x308] sm:$0xf]
    %v1233 = vld [vmem:[#allocation7 + $0x30c] sm:$0xff]
    %v1234 = vld [vmem:[#allocation7 + $0x314] sm:$0xff]
    %v1235 = vld [vmem:[#allocation7 + $0x31c] sm:$0xf]
    %v1236 = vld [vmem:[#allocation7 + $0x320] sm:$0xff]
    %v1237 = vld [vmem:[#allocation7 + $0x328] sm:$0xff]
    %v1238 = vld [vmem:[#allocation7 + $0x330] sm:$0xf]
    %v1239 = vld [vmem:[#allocation7 + $0x334] sm:$0xff]
    %v1240 = vld [vmem:[#allocation7 + $0x33c] sm:$0xff]
    %v1241 = vld [vmem:[#allocation7 + $0x344] sm:$0xf]
    %v1242 = vld [vmem:[#allocation7 + $0x348] sm:$0xff]
    %v1243 = vld [vmem:[#allocation7 + $0x350] sm:$0xff]
    %v1244 = vld [vmem:[#allocation7 + $0x358] sm:$0xf]
    %v1245 = vld [vmem:[#allocation7 + $0x35c] sm:$0xff]
    %v1246 = vld [vmem:[#allocation7 + $0x364] sm:$0xff]
    %v1247 = vld [vmem:[#allocation7 + $0x36c] sm:$0xf]
    %v1248 = vld [vmem:[#allocation7 + $0x370] sm:$0xff]
    %v1249 = vld [vmem:[#allocation7 + $0x378] sm:$0xff]
    %v1250 = vld [vmem:[#allocation7 + $0x380] sm:$0xf]
    %v1251 = vld [vmem:[#allocation7 + $0x384] sm:$0xff]
    %v1252 = vld [vmem:[#allocation7 + $0x38c] sm:$0xff]
    %v1253 = vld [vmem:[#allocation7 + $0x394] sm:$0xf]
    %v1254 = vld [vmem:[#allocation7 + $0x398] sm:$0xff]
    %v1255 = vld [vmem:[#allocation7 + $0x3a0] sm:$0xff]
    %v1256 = vld [vmem:[#allocation7 + $0x3a8] sm:$0xf]
    %v1257 = vld [vmem:[#allocation7 + $0x3ac] sm:$0xff]
    %v1258 = vld [vmem:[#allocation7 + $0x3b4] sm:$0xff]
    %v1259 = vld [vmem:[#allocation7 + $0x3bc] sm:$0xf]
    %v1260 = vld [vmem:[#allocation7 + $0x3c0] sm:$0xff]
    %v1261 = vld [vmem:[#allocation7 + $0x3c8] sm:$0xff]
    %v1262 = vld [vmem:[#allocation7 + $0x3d0] sm:$0xf]
    %v1263 = vld [vmem:[#allocation7 + $0x3d4] sm:$0xff]
    %v1264 = vld [vmem:[#allocation7 + $0x3dc] sm:$0xff]
    %v1265 = vld [vmem:[#allocation7 + $0x3e4] sm:$0xf]
    %v1266 = vld [vmem:[#allocation7 + $0x3e8] sm:$0xff]
    %v1267 = vld [vmem:[#allocation7 + $0x3f0] sm:$0xff]
    %v1268 = vld [vmem:[#allocation7 + $0x3f8] sm:$0xf]
    %v1269 = vld [vmem:[#allocation7 + $0x3fc] sm:$0xff]
    %v1270 = vld [vmem:[#allocation7 + $0x404] sm:$0xff]
    %v1271 = vld [vmem:[#allocation7 + $0x40c] sm:$0xf]
    %v1272 = vld [vmem:[#allocation7 + $0x410] sm:$0xff]
    %v1273 = vld [vmem:[#allocation7 + $0x418] sm:$0xff]
    %v1274 = vld [vmem:[#allocation7 + $0x420] sm:$0xf]
    %v1275 = vld [vmem:[#allocation7 + $0x424] sm:$0xff]
    %v1276 = vld [vmem:[#allocation7 + $0x42c] sm:$0xff]
    %v1277 = vld [vmem:[#allocation7 + $0x434] sm:$0xf]
    %v1278 = vld [vmem:[#allocation7 + $0x438] sm:$0xff]
    %v1279 = vld [vmem:[#allocation7 + $0x440] sm:$0xff]
    %v1280 = vld [vmem:[#allocation7 + $0x448] sm:$0xf]
    %v1281 = vld [vmem:[#allocation7 + $0x44c] sm:$0xff]
    %v1282 = vld [vmem:[#allocation7 + $0x454] sm:$0xff]
    %v1283 = vld [vmem:[#allocation7 + $0x45c] sm:$0xf]
    %v1284 = vld [vmem:[#allocation7 + $0x460] sm:$0xff]
    %v1285 = vld [vmem:[#allocation7 + $0x468] sm:$0xff]
    %v1286 = vld [vmem:[#allocation7 + $0x470] sm:$0xf]
    %v1287 = vld [vmem:[#allocation7 + $0x474] sm:$0xff]
    %v1288 = vld [vmem:[#allocation7 + $0x47c] sm:$0xff]
    %v1289 = vld [vmem:[#allocation7 + $0x484] sm:$0xf]
    %v1290 = vld [vmem:[#allocation7 + $0x488] sm:$0xff]
    %v1291 = vld [vmem:[#allocation7 + $0x490] sm:$0xff]
    %v1292 = vld [vmem:[#allocation7 + $0x498] sm:$0xf]
    %v1293 = vld [vmem:[#allocation7 + $0x49c] sm:$0xff]
    %v1294 = vld [vmem:[#allocation7 + $0x4a4] sm:$0xff]
    %v1295 = vld [vmem:[#allocation7 + $0x4ac] sm:$0xf]
    %v1296 = vld [vmem:[#allocation7 + $0x4b0] sm:$0xff]
    %v1297 = vld [vmem:[#allocation7 + $0x4b8] sm:$0xff]
    %v1298 = vld [vmem:[#allocation7 + $0x4c0] sm:$0xf]
    %v1299 = vld [vmem:[#allocation7 + $0x4c4] sm:$0xff]
    %v1300 = vld [vmem:[#allocation7 + $0x4cc] sm:$0xff]
    %v1301 = vld [vmem:[#allocation7 + $0x4d4] sm:$0xf]
    %v1302 = vld [vmem:[#allocation7 + $0x4d8] sm:$0xff]
    %v1303 = vld [vmem:[#allocation7 + $0x4e0] sm:$0xff]
    %v1304 = vld [vmem:[#allocation7 + $0x4e8] sm:$0xf]
    %v1305 = vld [vmem:[#allocation7 + $0x4ec] sm:$0xff]
    %v1306 = vld [vmem:[#allocation7 + $0x4f4] sm:$0xff]
    %v1307 = vld [vmem:[#allocation7 + $0x4fc] sm:$0xf]
    %v1308 = vld [vmem:[#allocation7 + $0x500] sm:$0xff]
    %v1309 = vld [vmem:[#allocation7 + $0x508] sm:$0xff]
    %v1310 = vld [vmem:[#allocation7 + $0x510] sm:$0xf]
    %v1311 = vld [vmem:[#allocation7 + $0x514] sm:$0xff]
    %v1312 = vld [vmem:[#allocation7 + $0x51c] sm:$0xff]
    %v1313 = vld [vmem:[#allocation7 + $0x524] sm:$0xf]
    %v1314 = vld [vmem:[#allocation7 + $0x528] sm:$0xff]
    %v1315 = vld [vmem:[#allocation7 + $0x530] sm:$0xff]
    %v1316 = vld [vmem:[#allocation7 + $0x538] sm:$0xf]
    %v1317 = vld [vmem:[#allocation7 + $0x53c] sm:$0xff]
    %v1318 = vld [vmem:[#allocation7 + $0x544] sm:$0xff]
    %v1319 = vld [vmem:[#allocation7 + $0x54c] sm:$0xf]
    %v1320 = vld [vmem:[#allocation7 + $0x550] sm:$0xff]
    %v1321 = vld [vmem:[#allocation7 + $0x558] sm:$0xff]
    %v1322 = vld [vmem:[#allocation7 + $0x560] sm:$0xf]
    %v1323 = vld [vmem:[#allocation7 + $0x564] sm:$0xff]
    %v1324 = vld [vmem:[#allocation7 + $0x56c] sm:$0xff]
    %v1325 = vld [vmem:[#allocation7 + $0x574] sm:$0xf]
    %v1326 = vld [vmem:[#allocation7 + $0x578] sm:$0xff]
    %v1327 = vld [vmem:[#allocation7 + $0x580] sm:$0xff]
    %v1328 = vld [vmem:[#allocation7 + $0x588] sm:$0xf]
    %v1329 = vld [vmem:[#allocation7 + $0x58c] sm:$0xff]
    %v1330 = vld [vmem:[#allocation7 + $0x594] sm:$0xff]
    %v1331 = vld [vmem:[#allocation7 + $0x59c] sm:$0xf]
    %v1333 = vlaneseq
    %v1334 = vshrl.u32 %v1333, 7
    %v1335 = vsub.s32 0, %v1334
    %v1336 = vrot.slane %v113, %v1335
    %v1337 = vlaneseq
    %v1338 = vshrl.u32 %v1337, 7
    %v1339 = vsub.s32 1, %v1338
    %v1340 = vrot.slane %v113, %v1339
    %v1341 = vlaneseq
    %v1342 = vshrl.u32 %v1341, 7
    %v1343 = vsub.s32 2, %v1342
    %v1344 = vrot.slane %v113, %v1343
    %v1345 = vlaneseq
    %v1346 = vshrl.u32 %v1345, 7
    %v1347 = vsub.s32 3, %v1346
    %v1348 = vrot.slane %v113, %v1347
    %v1349 = vlaneseq
    %v1350 = vshrl.u32 %v1349, 7
    %v1351 = vsub.s32 4, %v1350
    %v1352 = vrot.slane %v113, %v1351
    %v1574 = vunpack.c.l.b16 %v1116
    %v1575 = vunpack.c.h.b16 %v1116
    %v1576 = vunpack.c.l.b16 %v1117
    %v1577 = vunpack.c.h.b16 %v1117
    %v1578 = vunpack.c.l.b16 %v1118
    %v1579 = vunpack.c.l.b16 %v1119
    %v1580 = vunpack.c.h.b16 %v1119
    %v1581 = vunpack.c.l.b16 %v1120
    %v1582 = vunpack.c.h.b16 %v1120
    %v1583 = vunpack.c.l.b16 %v1121
    %v1584 = vunpack.c.l.b16 %v1122
    %v1585 = vunpack.c.h.b16 %v1122
    %v1586 = vunpack.c.l.b16 %v1123
    %v1587 = vunpack.c.h.b16 %v1123
    %v1588 = vunpack.c.l.b16 %v1124
    %v1589 = vunpack.c.l.b16 %v1125
    %v1590 = vunpack.c.h.b16 %v1125
    %v1591 = vunpack.c.l.b16 %v1126
    %v1592 = vunpack.c.h.b16 %v1126
    %v1593 = vunpack.c.l.b16 %v1127
    %v1594 = vunpack.c.l.b16 %v1128
    %v1595 = vunpack.c.h.b16 %v1128
    %v1596 = vunpack.c.l.b16 %v1129
    %v1597 = vunpack.c.h.b16 %v1129
    %v1598 = vunpack.c.l.b16 %v1130
    %v1599 = vunpack.c.l.b16 %v1131
    %v1600 = vunpack.c.h.b16 %v1131
    %v1601 = vunpack.c.l.b16 %v1132
    %v1602 = vunpack.c.h.b16 %v1132
    %v1603 = vunpack.c.l.b16 %v1133
    %v1604 = vunpack.c.l.b16 %v1134
    %v1605 = vunpack.c.h.b16 %v1134
    %v1606 = vunpack.c.l.b16 %v1135
    %v1607 = vunpack.c.h.b16 %v1135
    %v1608 = vunpack.c.l.b16 %v1136
    %v1609 = vunpack.c.l.b16 %v1137
    %v1610 = vunpack.c.h.b16 %v1137
    %v1611 = vunpack.c.l.b16 %v1138
    %v1612 = vunpack.c.h.b16 %v1138
    %v1613 = vunpack.c.l.b16 %v1139
    %v1614 = vunpack.c.l.b16 %v1140
    %v1615 = vunpack.c.h.b16 %v1140
    %v1616 = vunpack.c.l.b16 %v1141
    %v1617 = vunpack.c.h.b16 %v1141
    %v1618 = vunpack.c.l.b16 %v1142
    %v1619 = vunpack.c.l.b16 %v1143
    %v1620 = vunpack.c.h.b16 %v1143
    %v1621 = vunpack.c.l.b16 %v1144
    %v1622 = vunpack.c.h.b16 %v1144
    %v1623 = vunpack.c.l.b16 %v1145
    %v1624 = vunpack.c.l.b16 %v1146
    %v1625 = vunpack.c.h.b16 %v1146
    %v1626 = vunpack.c.l.b16 %v1147
    %v1627 = vunpack.c.h.b16 %v1147
    %v1628 = vunpack.c.l.b16 %v1148
    %v1629 = vunpack.c.l.b16 %v1149
    %v1630 = vunpack.c.h.b16 %v1149
    %v1631 = vunpack.c.l.b16 %v1150
    %v1632 = vunpack.c.h.b16 %v1150
    %v1633 = vunpack.c.l.b16 %v1151
    %v1634 = vunpack.c.l.b16 %v1152
    %v1635 = vunpack.c.h.b16 %v1152
    %v1636 = vunpack.c.l.b16 %v1153
    %v1637 = vunpack.c.h.b16 %v1153
    %v1638 = vunpack.c.l.b16 %v1154
    %v1639 = vunpack.c.l.b16 %v1155
    %v1640 = vunpack.c.h.b16 %v1155
    %v1641 = vunpack.c.l.b16 %v1156
    %v1642 = vunpack.c.h.b16 %v1156
    %v1643 = vunpack.c.l.b16 %v1157
    %v1644 = vunpack.c.l.b16 %v1158
    %v1645 = vunpack.c.h.b16 %v1158
    %v1646 = vunpack.c.l.b16 %v1159
    %v1647 = vunpack.c.h.b16 %v1159
    %v1648 = vunpack.c.l.b16 %v1160
    %v1649 = vunpack.c.l.b16 %v1161
    %v1650 = vunpack.c.h.b16 %v1161
    %v1651 = vunpack.c.l.b16 %v1162
    %v1652 = vunpack.c.h.b16 %v1162
    %v1653 = vunpack.c.l.b16 %v1163
    %v1654 = vunpack.c.l.b16 %v1164
    %v1655 = vunpack.c.h.b16 %v1164
    %v1656 = vunpack.c.l.b16 %v1165
    %v1657 = vunpack.c.h.b16 %v1165
    %v1658 = vunpack.c.l.b16 %v1166
    %v1659 = vunpack.c.l.b16 %v1167
    %v1660 = vunpack.c.h.b16 %v1167
    %v1661 = vunpack.c.l.b16 %v1168
    %v1662 = vunpack.c.h.b16 %v1168
    %v1663 = vunpack.c.l.b16 %v1169
    %v1664 = vunpack.c.l.b16 %v1170
    %v1665 = vunpack.c.h.b16 %v1170
    %v1666 = vunpack.c.l.b16 %v1171
    %v1667 = vunpack.c.h.b16 %v1171
    %v1668 = vunpack.c.l.b16 %v1172
    %v1669 = vunpack.c.l.b16 %v1173
    %v1670 = vunpack.c.h.b16 %v1173
    %v1671 = vunpack.c.l.b16 %v1174
    %v1672 = vunpack.c.h.b16 %v1174
    %v1673 = vunpack.c.l.b16 %v1175
    %v1674 = vunpack.c.l.b16 %v1176
    %v1675 = vunpack.c.h.b16 %v1176
    %v1676 = vunpack.c.l.b16 %v1177
    %v1677 = vunpack.c.h.b16 %v1177
    %v1678 = vunpack.c.l.b16 %v1178
    %v1679 = vunpack.c.l.b16 %v1179
    %v1680 = vunpack.c.h.b16 %v1179
    %v1681 = vunpack.c.l.b16 %v1180
    %v1682 = vunpack.c.h.b16 %v1180
    %v1683 = vunpack.c.l.b16 %v1181
    %v1684 = vunpack.c.l.b16 %v1182
    %v1685 = vunpack.c.h.b16 %v1182
    %v1686 = vunpack.c.l.b16 %v1183
    %v1687 = vunpack.c.h.b16 %v1183
    %v1688 = vunpack.c.l.b16 %v1184
    %v1689 = vunpack.c.l.b16 %v1185
    %v1690 = vunpack.c.h.b16 %v1185
    %v1691 = vunpack.c.l.b16 %v1186
    %v1692 = vunpack.c.h.b16 %v1186
    %v1693 = vunpack.c.l.b16 %v1187
    %v1694 = vunpack.c.l.b16 %v1188
    %v1695 = vunpack.c.h.b16 %v1188
    %v1696 = vunpack.c.l.b16 %v1189
    %v1697 = vunpack.c.h.b16 %v1189
    %v1698 = vunpack.c.l.b16 %v1190
    %v1699 = vunpack.c.l.b16 %v1191
    %v1700 = vunpack.c.h.b16 %v1191
    %v1701 = vunpack.c.l.b16 %v1192
    %v1702 = vunpack.c.h.b16 %v1192
    %v1703 = vunpack.c.l.b16 %v1193
    %v1704 = vunpack.c.l.b16 %v1194
    %v1705 = vunpack.c.h.b16 %v1194
    %v1706 = vunpack.c.l.b16 %v1195
    %v1707 = vunpack.c.h.b16 %v1195
    %v1708 = vunpack.c.l.b16 %v1196
    %v1709 = vunpack.c.l.b16 %v1197
    %v1710 = vunpack.c.h.b16 %v1197
    %v1711 = vunpack.c.l.b16 %v1198
    %v1712 = vunpack.c.h.b16 %v1198
    %v1713 = vunpack.c.l.b16 %v1199
    %v1714 = vunpack.c.l.b16 %v1200
    %v1715 = vunpack.c.h.b16 %v1200
    %v1716 = vunpack.c.l.b16 %v1201
    %v1717 = vunpack.c.h.b16 %v1201
    %v1718 = vunpack.c.l.b16 %v1202
    %v1719 = vunpack.c.l.b16 %v1203
    %v1720 = vunpack.c.h.b16 %v1203
    %v1721 = vunpack.c.l.b16 %v1204
    %v1722 = vunpack.c.h.b16 %v1204
    %v1723 = vunpack.c.l.b16 %v1205
    %v1724 = vunpack.c.l.b16 %v1206
    %v1725 = vunpack.c.h.b16 %v1206
    %v1726 = vunpack.c.l.b16 %v1207
    %v1727 = vunpack.c.h.b16 %v1207
    %v1728 = vunpack.c.l.b16 %v1208
    %v1729 = vunpack.c.l.b16 %v1209
    %v1730 = vunpack.c.h.b16 %v1209
    %v1731 = vunpack.c.l.b16 %v1210
    %v1732 = vunpack.c.h.b16 %v1210
    %v1733 = vunpack.c.l.b16 %v1211
    %v1734 = vunpack.c.l.b16 %v1212
    %v1735 = vunpack.c.h.b16 %v1212
    %v1736 = vunpack.c.l.b16 %v1213
    %v1737 = vunpack.c.h.b16 %v1213
    %v1738 = vunpack.c.l.b16 %v1214
    %v1739 = vunpack.c.l.b16 %v1215
    %v1740 = vunpack.c.h.b16 %v1215
    %v1741 = vunpack.c.l.b16 %v1216
    %v1742 = vunpack.c.h.b16 %v1216
    %v1743 = vunpack.c.l.b16 %v1217
    %v1744 = vunpack.c.l.b16 %v1218
    %v1745 = vunpack.c.h.b16 %v1218
    %v1746 = vunpack.c.l.b16 %v1219
    %v1747 = vunpack.c.h.b16 %v1219
    %v1748 = vunpack.c.l.b16 %v1220
    %v1749 = vunpack.c.l.b16 %v1221
    %v1750 = vunpack.c.h.b16 %v1221
    %v1751 = vunpack.c.l.b16 %v1222
    %v1752 = vunpack.c.h.b16 %v1222
    %v1753 = vunpack.c.l.b16 %v1223
    %v1754 = vunpack.c.l.b16 %v1224
    %v1755 = vunpack.c.h.b16 %v1224
    %v1756 = vunpack.c.l.b16 %v1225
    %v1757 = vunpack.c.h.b16 %v1225
    %v1758 = vunpack.c.l.b16 %v1226
    %v1759 = vunpack.c.l.b16 %v1227
    %v1760 = vunpack.c.h.b16 %v1227
    %v1761 = vunpack.c.l.b16 %v1228
    %v1762 = vunpack.c.h.b16 %v1228
    %v1763 = vunpack.c.l.b16 %v1229
    %v1764 = vunpack.c.l.b16 %v1230
    %v1765 = vunpack.c.h.b16 %v1230
    %v1766 = vunpack.c.l.b16 %v1231
    %v1767 = vunpack.c.h.b16 %v1231
    %v1768 = vunpack.c.l.b16 %v1232
    %v1769 = vunpack.c.l.b16 %v1233
    %v1770 = vunpack.c.h.b16 %v1233
    %v1771 = vunpack.c.l.b16 %v1234
    %v1772 = vunpack.c.h.b16 %v1234
    %v1773 = vunpack.c.l.b16 %v1235
    %v1774 = vunpack.c.l.b16 %v1236
    %v1775 = vunpack.c.h.b16 %v1236
    %v1776 = vunpack.c.l.b16 %v1237
    %v1777 = vunpack.c.h.b16 %v1237
    %v1778 = vunpack.c.l.b16 %v1238
    %v1779 = vunpack.c.l.b16 %v1239
    %v1780 = vunpack.c.h.b16 %v1239
    %v1781 = vunpack.c.l.b16 %v1240
    %v1782 = vunpack.c.h.b16 %v1240
    %v1783 = vunpack.c.l.b16 %v1241
    %v1784 = vunpack.c.l.b16 %v1242
    %v1785 = vunpack.c.h.b16 %v1242
    %v1786 = vunpack.c.l.b16 %v1243
    %v1787 = vunpack.c.h.b16 %v1243
    %v1788 = vunpack.c.l.b16 %v1244
    %v1789 = vunpack.c.l.b16 %v1245
    %v1790 = vunpack.c.h.b16 %v1245
    %v1791 = vunpack.c.l.b16 %v1246
    %v1792 = vunpack.c.h.b16 %v1246
    %v1793 = vunpack.c.l.b16 %v1247
    %v1794 = vunpack.c.l.b16 %v1248
    %v1795 = vunpack.c.h.b16 %v1248
    %v1796 = vunpack.c.l.b16 %v1249
    %v1797 = vunpack.c.h.b16 %v1249
    %v1798 = vunpack.c.l.b16 %v1250
    %v1799 = vunpack.c.l.b16 %v1251
    %v1800 = vunpack.c.h.b16 %v1251
    %v1801 = vunpack.c.l.b16 %v1252
    %v1802 = vunpack.c.h.b16 %v1252
    %v1803 = vunpack.c.l.b16 %v1253
    %v1804 = vunpack.c.l.b16 %v1254
    %v1805 = vunpack.c.h.b16 %v1254
    %v1806 = vunpack.c.l.b16 %v1255
    %v1807 = vunpack.c.h.b16 %v1255
    %v1808 = vunpack.c.l.b16 %v1256
    %v1809 = vunpack.c.l.b16 %v1257
    %v1810 = vunpack.c.h.b16 %v1257
    %v1811 = vunpack.c.l.b16 %v1258
    %v1812 = vunpack.c.h.b16 %v1258
    %v1813 = vunpack.c.l.b16 %v1259
    %v1814 = vunpack.c.l.b16 %v1260
    %v1815 = vunpack.c.h.b16 %v1260
    %v1816 = vunpack.c.l.b16 %v1261
    %v1817 = vunpack.c.h.b16 %v1261
    %v1818 = vunpack.c.l.b16 %v1262
    %v1819 = vunpack.c.l.b16 %v1263
    %v1820 = vunpack.c.h.b16 %v1263
    %v1821 = vunpack.c.l.b16 %v1264
    %v1822 = vunpack.c.h.b16 %v1264
    %v1823 = vunpack.c.l.b16 %v1265
    %v1824 = vunpack.c.l.b16 %v1266
    %v1825 = vunpack.c.h.b16 %v1266
    %v1826 = vunpack.c.l.b16 %v1267
    %v1827 = vunpack.c.h.b16 %v1267
    %v1828 = vunpack.c.l.b16 %v1268
    %v1829 = vunpack.c.l.b16 %v1269
    %v1830 = vunpack.c.h.b16 %v1269
    %v1831 = vunpack.c.l.b16 %v1270
    %v1832 = vunpack.c.h.b16 %v1270
    %v1833 = vunpack.c.l.b16 %v1271
    %v1834 = vunpack.c.l.b16 %v1272
    %v1835 = vunpack.c.h.b16 %v1272
    %v1836 = vunpack.c.l.b16 %v1273
    %v1837 = vunpack.c.h.b16 %v1273
    %v1838 = vunpack.c.l.b16 %v1274
    %v1839 = vunpack.c.l.b16 %v1275
    %v1840 = vunpack.c.h.b16 %v1275
    %v1841 = vunpack.c.l.b16 %v1276
    %v1842 = vunpack.c.h.b16 %v1276
    %v1843 = vunpack.c.l.b16 %v1277
    %v1844 = vunpack.c.l.b16 %v1278
    %v1845 = vunpack.c.h.b16 %v1278
    %v1846 = vunpack.c.l.b16 %v1279
    %v1847 = vunpack.c.h.b16 %v1279
    %v1848 = vunpack.c.l.b16 %v1280
    %v1849 = vunpack.c.l.b16 %v1281
    %v1850 = vunpack.c.h.b16 %v1281
    %v1851 = vunpack.c.l.b16 %v1282
    %v1852 = vunpack.c.h.b16 %v1282
    %v1853 = vunpack.c.l.b16 %v1283
    %v1854 = vunpack.c.l.b16 %v1284
    %v1855 = vunpack.c.h.b16 %v1284
    %v1856 = vunpack.c.l.b16 %v1285
    %v1857 = vunpack.c.h.b16 %v1285
    %v1858 = vunpack.c.l.b16 %v1286
    %v1859 = vunpack.c.l.b16 %v1287
    %v1860 = vunpack.c.h.b16 %v1287
    %v1861 = vunpack.c.l.b16 %v1288
    %v1862 = vunpack.c.h.b16 %v1288
    %v1863 = vunpack.c.l.b16 %v1289
    %v1864 = vunpack.c.l.b16 %v1290
    %v1865 = vunpack.c.h.b16 %v1290
    %v1866 = vunpack.c.l.b16 %v1291
    %v1867 = vunpack.c.h.b16 %v1291
    %v1868 = vunpack.c.l.b16 %v1292
    %v1869 = vunpack.c.l.b16 %v1293
    %v1870 = vunpack.c.h.b16 %v1293
    %v1871 = vunpack.c.l.b16 %v1294
    %v1872 = vunpack.c.h.b16 %v1294
    %v1873 = vunpack.c.l.b16 %v1295
    %v1874 = vunpack.c.l.b16 %v1296
    %v1875 = vunpack.c.h.b16 %v1296
    %v1876 = vunpack.c.l.b16 %v1297
    %v1877 = vunpack.c.h.b16 %v1297
    %v1878 = vunpack.c.l.b16 %v1298
    %v1879 = vunpack.c.l.b16 %v1299
    %v1880 = vunpack.c.h.b16 %v1299
    %v1881 = vunpack.c.l.b16 %v1300
    %v1882 = vunpack.c.h.b16 %v1300
    %v1883 = vunpack.c.l.b16 %v1301
    %v1884 = vunpack.c.l.b16 %v1302
    %v1885 = vunpack.c.h.b16 %v1302
    %v1886 = vunpack.c.l.b16 %v1303
    %v1887 = vunpack.c.h.b16 %v1303
    %v1888 = vunpack.c.l.b16 %v1304
    %v1889 = vunpack.c.l.b16 %v1305
    %v1890 = vunpack.c.h.b16 %v1305
    %v1891 = vunpack.c.l.b16 %v1306
    %v1892 = vunpack.c.h.b16 %v1306
    %v1893 = vunpack.c.l.b16 %v1307
    %v1894 = vunpack.c.l.b16 %v1308
    %v1895 = vunpack.c.h.b16 %v1308
    %v1896 = vunpack.c.l.b16 %v1309
    %v1897 = vunpack.c.h.b16 %v1309
    %v1898 = vunpack.c.l.b16 %v1310
    %v1899 = vunpack.c.l.b16 %v1311
    %v1900 = vunpack.c.h.b16 %v1311
    %v1901 = vunpack.c.l.b16 %v1312
    %v1902 = vunpack.c.h.b16 %v1312
    %v1903 = vunpack.c.l.b16 %v1313
    %v1904 = vunpack.c.l.b16 %v1314
    %v1905 = vunpack.c.h.b16 %v1314
    %v1906 = vunpack.c.l.b16 %v1315
    %v1907 = vunpack.c.h.b16 %v1315
    %v1908 = vunpack.c.l.b16 %v1316
    %v1909 = vunpack.c.l.b16 %v1317
    %v1910 = vunpack.c.h.b16 %v1317
    %v1911 = vunpack.c.l.b16 %v1318
    %v1912 = vunpack.c.h.b16 %v1318
    %v1913 = vunpack.c.l.b16 %v1319
    %v1914 = vunpack.c.l.b16 %v1320
    %v1915 = vunpack.c.h.b16 %v1320
    %v1916 = vunpack.c.l.b16 %v1321
    %v1917 = vunpack.c.h.b16 %v1321
    %v1918 = vunpack.c.l.b16 %v1322
    %v1919 = vunpack.c.l.b16 %v1323
    %v1920 = vunpack.c.h.b16 %v1323
    %v1921 = vunpack.c.l.b16 %v1324
    %v1922 = vunpack.c.h.b16 %v1324
    %v1923 = vunpack.c.l.b16 %v1325
    %v1924 = vunpack.c.l.b16 %v1326
    %v1925 = vunpack.c.h.b16 %v1326
    %v1926 = vunpack.c.l.b16 %v1327
    %v1927 = vunpack.c.h.b16 %v1327
    %v1928 = vunpack.c.l.b16 %v1328
    %v1929 = vunpack.c.l.b16 %v1329
    %v1930 = vunpack.c.h.b16 %v1329
    %v1931 = vunpack.c.l.b16 %v1330
    %v1932 = vunpack.c.h.b16 %v1330
    %v1933 = vunpack.c.l.b16 %v1331
    %v1934 = vpack.c.b16 %v1579, %v1574
    %v1935 = vpack.c.b16 %v1580, %v1575
    %v1936 = vpack.c.b16 %v1581, %v1576
    %v1937 = vpack.c.b16 %v1582, %v1577
    %v1938 = vpack.c.b16 %v1583, %v1578
    %v1939 = vpack.c.b16 %v1589, %v1584
    %v1940 = vpack.c.b16 %v1590, %v1585
    %v1941 = vpack.c.b16 %v1591, %v1586
    %v1942 = vpack.c.b16 %v1592, %v1587
    %v1943 = vpack.c.b16 %v1593, %v1588
    %v1944 = vpack.c.b16 %v1599, %v1594
    %v1945 = vpack.c.b16 %v1600, %v1595
    %v1946 = vpack.c.b16 %v1601, %v1596
    %v1947 = vpack.c.b16 %v1602, %v1597
    %v1948 = vpack.c.b16 %v1603, %v1598
    %v1949 = vpack.c.b16 %v1609, %v1604
    %v1950 = vpack.c.b16 %v1610, %v1605
    %v1951 = vpack.c.b16 %v1611, %v1606
    %v1952 = vpack.c.b16 %v1612, %v1607
    %v1953 = vpack.c.b16 %v1613, %v1608
    %v1954 = vpack.c.b16 %v1619, %v1614
    %v1955 = vpack.c.b16 %v1620, %v1615
    %v1956 = vpack.c.b16 %v1621, %v1616
    %v1957 = vpack.c.b16 %v1622, %v1617
    %v1958 = vpack.c.b16 %v1623, %v1618
    %v1959 = vpack.c.b16 %v1629, %v1624
    %v1960 = vpack.c.b16 %v1630, %v1625
    %v1961 = vpack.c.b16 %v1631, %v1626
    %v1962 = vpack.c.b16 %v1632, %v1627
    %v1963 = vpack.c.b16 %v1633, %v1628
    %v1964 = vpack.c.b16 %v1639, %v1634
    %v1965 = vpack.c.b16 %v1640, %v1635
    %v1966 = vpack.c.b16 %v1641, %v1636
    %v1967 = vpack.c.b16 %v1642, %v1637
    %v1968 = vpack.c.b16 %v1643, %v1638
    %v1969 = vpack.c.b16 %v1649, %v1644
    %v1970 = vpack.c.b16 %v1650, %v1645
    %v1971 = vpack.c.b16 %v1651, %v1646
    %v1972 = vpack.c.b16 %v1652, %v1647
    %v1973 = vpack.c.b16 %v1653, %v1648
    %v1974 = vpack.c.b16 %v1659, %v1654
    %v1975 = vpack.c.b16 %v1660, %v1655
    %v1976 = vpack.c.b16 %v1661, %v1656
    %v1977 = vpack.c.b16 %v1662, %v1657
    %v1978 = vpack.c.b16 %v1663, %v1658
    %v1979 = vpack.c.b16 %v1669, %v1664
    %v1980 = vpack.c.b16 %v1670, %v1665
    %v1981 = vpack.c.b16 %v1671, %v1666
    %v1982 = vpack.c.b16 %v1672, %v1667
    %v1983 = vpack.c.b16 %v1673, %v1668
    %v1984 = vpack.c.b16 %v1679, %v1674
    %v1985 = vpack.c.b16 %v1680, %v1675
    %v1986 = vpack.c.b16 %v1681, %v1676
    %v1987 = vpack.c.b16 %v1682, %v1677
    %v1988 = vpack.c.b16 %v1683, %v1678
    %v1989 = vpack.c.b16 %v1689, %v1684
    %v1990 = vpack.c.b16 %v1690, %v1685
    %v1991 = vpack.c.b16 %v1691, %v1686
    %v1992 = vpack.c.b16 %v1692, %v1687
    %v1993 = vpack.c.b16 %v1693, %v1688
    %v1994 = vpack.c.b16 %v1699, %v1694
    %v1995 = vpack.c.b16 %v1700, %v1695
    %v1996 = vpack.c.b16 %v1701, %v1696
    %v1997 = vpack.c.b16 %v1702, %v1697
    %v1998 = vpack.c.b16 %v1703, %v1698
    %v1999 = vpack.c.b16 %v1709, %v1704
    %v2000 = vpack.c.b16 %v1710, %v1705
    %v2001 = vpack.c.b16 %v1711, %v1706
    %v2002 = vpack.c.b16 %v1712, %v1707
    %v2003 = vpack.c.b16 %v1713, %v1708
    %v2004 = vpack.c.b16 %v1719, %v1714
    %v2005 = vpack.c.b16 %v1720, %v1715
    %v2006 = vpack.c.b16 %v1721, %v1716
    %v2007 = vpack.c.b16 %v1722, %v1717
    %v2008 = vpack.c.b16 %v1723, %v1718
    %v2009 = vpack.c.b16 %v1729, %v1724
    %v2010 = vpack.c.b16 %v1730, %v1725
    %v2011 = vpack.c.b16 %v1731, %v1726
    %v2012 = vpack.c.b16 %v1732, %v1727
    %v2013 = vpack.c.b16 %v1733, %v1728
    %v2014 = vpack.c.b16 %v1739, %v1734
    %v2015 = vpack.c.b16 %v1740, %v1735
    %v2016 = vpack.c.b16 %v1741, %v1736
    %v2017 = vpack.c.b16 %v1742, %v1737
    %v2018 = vpack.c.b16 %v1743, %v1738
    %v2019 = vpack.c.b16 %v1749, %v1744
    %v2020 = vpack.c.b16 %v1750, %v1745
    %v2021 = vpack.c.b16 %v1751, %v1746
    %v2022 = vpack.c.b16 %v1752, %v1747
    %v2023 = vpack.c.b16 %v1753, %v1748
    %v2024 = vpack.c.b16 %v1759, %v1754
    %v2025 = vpack.c.b16 %v1760, %v1755
    %v2026 = vpack.c.b16 %v1761, %v1756
    %v2027 = vpack.c.b16 %v1762, %v1757
    %v2028 = vpack.c.b16 %v1763, %v1758
    %v2029 = vpack.c.b16 %v1769, %v1764
    %v2030 = vpack.c.b16 %v1770, %v1765
    %v2031 = vpack.c.b16 %v1771, %v1766
    %v2032 = vpack.c.b16 %v1772, %v1767
    %v2033 = vpack.c.b16 %v1773, %v1768
    %v2034 = vpack.c.b16 %v1779, %v1774
    %v2035 = vpack.c.b16 %v1780, %v1775
    %v2036 = vpack.c.b16 %v1781, %v1776
    %v2037 = vpack.c.b16 %v1782, %v1777
    %v2038 = vpack.c.b16 %v1783, %v1778
    %v2039 = vpack.c.b16 %v1789, %v1784
    %v2040 = vpack.c.b16 %v1790, %v1785
    %v2041 = vpack.c.b16 %v1791, %v1786
    %v2042 = vpack.c.b16 %v1792, %v1787
    %v2043 = vpack.c.b16 %v1793, %v1788
    %v2044 = vpack.c.b16 %v1799, %v1794
    %v2045 = vpack.c.b16 %v1800, %v1795
    %v2046 = vpack.c.b16 %v1801, %v1796
    %v2047 = vpack.c.b16 %v1802, %v1797
    %v2048 = vpack.c.b16 %v1803, %v1798
    %v2049 = vpack.c.b16 %v1809, %v1804
    %v2050 = vpack.c.b16 %v1810, %v1805
    %v2051 = vpack.c.b16 %v1811, %v1806
    %v2052 = vpack.c.b16 %v1812, %v1807
    %v2053 = vpack.c.b16 %v1813, %v1808
    %v2054 = vpack.c.b16 %v1819, %v1814
    %v2055 = vpack.c.b16 %v1820, %v1815
    %v2056 = vpack.c.b16 %v1821, %v1816
    %v2057 = vpack.c.b16 %v1822, %v1817
    %v2058 = vpack.c.b16 %v1823, %v1818
    %v2059 = vpack.c.b16 %v1829, %v1824
    %v2060 = vpack.c.b16 %v1830, %v1825
    %v2061 = vpack.c.b16 %v1831, %v1826
    %v2062 = vpack.c.b16 %v1832, %v1827
    %v2063 = vpack.c.b16 %v1833, %v1828
    %v2064 = vpack.c.b16 %v1839, %v1834
    %v2065 = vpack.c.b16 %v1840, %v1835
    %v2066 = vpack.c.b16 %v1841, %v1836
    %v2067 = vpack.c.b16 %v1842, %v1837
    %v2068 = vpack.c.b16 %v1843, %v1838
    %v2069 = vpack.c.b16 %v1849, %v1844
    %v2070 = vpack.c.b16 %v1850, %v1845
    %v2071 = vpack.c.b16 %v1851, %v1846
    %v2072 = vpack.c.b16 %v1852, %v1847
    %v2073 = vpack.c.b16 %v1853, %v1848
    %v2074 = vpack.c.b16 %v1859, %v1854
    %v2075 = vpack.c.b16 %v1860, %v1855
    %v2076 = vpack.c.b16 %v1861, %v1856
    %v2077 = vpack.c.b16 %v1862, %v1857
    %v2078 = vpack.c.b16 %v1863, %v1858
    %v2079 = vpack.c.b16 %v1869, %v1864
    %v2080 = vpack.c.b16 %v1870, %v1865
    %v2081 = vpack.c.b16 %v1871, %v1866
    %v2082 = vpack.c.b16 %v1872, %v1867
    %v2083 = vpack.c.b16 %v1873, %v1868
    %v2084 = vpack.c.b16 %v1879, %v1874
    %v2085 = vpack.c.b16 %v1880, %v1875
    %v2086 = vpack.c.b16 %v1881, %v1876
    %v2087 = vpack.c.b16 %v1882, %v1877
    %v2088 = vpack.c.b16 %v1883, %v1878
    %v2089 = vpack.c.b16 %v1889, %v1884
    %v2090 = vpack.c.b16 %v1890, %v1885
    %v2091 = vpack.c.b16 %v1891, %v1886
    %v2092 = vpack.c.b16 %v1892, %v1887
    %v2093 = vpack.c.b16 %v1893, %v1888
    %v2094 = vpack.c.b16 %v1899, %v1894
    %v2095 = vpack.c.b16 %v1900, %v1895
    %v2096 = vpack.c.b16 %v1901, %v1896
    %v2097 = vpack.c.b16 %v1902, %v1897
    %v2098 = vpack.c.b16 %v1903, %v1898
    %v2099 = vpack.c.b16 %v1909, %v1904
    %v2100 = vpack.c.b16 %v1910, %v1905
    %v2101 = vpack.c.b16 %v1911, %v1906
    %v2102 = vpack.c.b16 %v1912, %v1907
    %v2103 = vpack.c.b16 %v1913, %v1908
    %v2104 = vpack.c.b16 %v1919, %v1914
    %v2105 = vpack.c.b16 %v1920, %v1915
    %v2106 = vpack.c.b16 %v1921, %v1916
    %v2107 = vpack.c.b16 %v1922, %v1917
    %v2108 = vpack.c.b16 %v1923, %v1918
    %v2109 = vpack.c.b16 %v1929, %v1924
    %v2110 = vpack.c.b16 %v1930, %v1925
    %v2111 = vpack.c.b16 %v1931, %v1926
    %v2112 = vpack.c.b16 %v1932, %v1927
    %v2113 = vpack.c.b16 %v1933, %v1928
    %vm2294 = vcmask 523264
    %v2296 = vsel %vm2294, %v1115, 0
    %2298 = vmatprep.subr.bf16.mxu0 %v1935
    %2299 = vmatpush1.bf16.msra.mxu0 %v1934
    %2300 = vmatprep.subr.bf16.mxu0 %v1940
    %2301 = vmatpush1.bf16.msra.mxu0 %v1939
    %2302 = vmatprep.subr.bf16.mxu0 %v1945
    %2303 = vmatpush1.bf16.msra.mxu0 %v1944
    %2304 = vmatprep.subr.bf16.mxu0 %v1950
    %2305 = vmatpush1.bf16.msra.mxu0 %v1949
    %2306 = vmatprep.subr.bf16.mxu0 %v1955
    %2307 = vmatpush1.bf16.msra.mxu0 %v1954
    %2308 = vmatprep.subr.bf16.mxu0 %v1960
    %2309 = vmatpush1.bf16.msra.mxu0 %v1959
    %2310 = vmatprep.subr.bf16.mxu0 %v1965
    %2311 = vmatpush1.bf16.msra.mxu0 %v1964
    %2312 = vmatprep.subr.bf16.mxu0 %v1970
    %2313 = vmatpush1.bf16.msra.mxu0 %v1969
    %2314 = vmatprep.subr.bf16.mxu0 %v1975
    %2315 = vmatpush1.bf16.msra.mxu0 %v1974
    %2316 = vmatprep.subr.bf16.mxu0 %v1980
    %2317 = vmatpush1.bf16.msra.mxu0 %v1979
    %2318 = vmatprep.subr.bf16.mxu0 %v1985
    %2319 = vmatpush1.bf16.msra.mxu0 %v1984
    %2320 = vmatprep.subr.bf16.mxu0 %v1990
    %2321 = vmatpush1.bf16.msra.mxu0 %v1989
    %2322 = vmatprep.subr.bf16.mxu0 %v1995
    %2323 = vmatpush1.bf16.msra.mxu0 %v1994
    %2324 = vmatprep.subr.bf16.mxu0 %v2000
    %2325 = vmatpush1.bf16.msra.mxu0 %v1999
    %2326 = vmatprep.subr.bf16.mxu0 %v2005
    %2327 = vmatpush1.bf16.msra.mxu0 %v2004
    %2328 = vmatprep.subr.bf16.mxu0 %v2010
    %2329 = vmatpush1.bf16.msra.mxu0 %v2009
    %2330 = vmatprep.mubr.bf16.mxu0 %v1112
    %2331 = vmatmul.mubr.bf16.gmra.mrb[0].mxu0 %v1111
    %v2332 = vpop.f32.mrb[0].mxu0
    %v2333 = vadd.f32 %v1336, %v2332
    %v2334 = vpop.f32.mrb[0].mxu0
    %v2335 = vadd.f32 %v1340, %v2334
    %v2336 = vpop.f32.mrb[0].mxu0
    %v2337 = vpop.f32.mrb[0].mxu0
    %2338 = vdwg.mxu0
    %2339 = vmatprep.subr.bf16.mxu0 %v2015
    %2340 = vmatpush1.bf16.msra.mxu0 %v2014
    %2341 = vmatprep.subr.bf16.mxu0 %v2020
    %2342 = vmatpush1.bf16.msra.mxu0 %v2019
    %2343 = vmatprep.subr.bf16.mxu0 %v2025
    %2344 = vmatpush1.bf16.msra.mxu0 %v2024
    %2345 = vmatprep.subr.bf16.mxu0 %v2030
    %2346 = vmatpush1.bf16.msra.mxu0 %v2029
    %2347 = vmatprep.subr.bf16.mxu0 %v2035
    %2348 = vmatpush1.bf16.msra.mxu0 %v2034
    %2349 = vmatprep.subr.bf16.mxu0 %v2040
    %2350 = vmatpush1.bf16.msra.mxu0 %v2039
    %2351 = vmatprep.subr.bf16.mxu0 %v2045
    %2352 = vmatpush1.bf16.msra.mxu0 %v2044
    %2353 = vmatprep.subr.bf16.mxu0 %v2050
    %2354 = vmatpush1.bf16.msra.mxu0 %v2049
    %2355 = vmatprep.subr.bf16.mxu0 %v2055
    %2356 = vmatpush1.bf16.msra.mxu0 %v2054
    %2357 = vmatprep.subr.bf16.mxu0 %v2060
    %2358 = vmatpush1.bf16.msra.mxu0 %v2059
    %2359 = vmatprep.subr.bf16.mxu0 %v2065
    %2360 = vmatpush1.bf16.msra.mxu0 %v2064
    %2361 = vmatprep.subr.bf16.mxu0 %v2070
    %2362 = vmatpush1.bf16.msra.mxu0 %v2069
    %2363 = vmatprep.subr.bf16.mxu0 %v2075
    %2364 = vmatpush1.bf16.msra.mxu0 %v2074
    %2365 = vmatprep.subr.bf16.mxu0 %v2080
    %2366 = vmatpush1.bf16.msra.mxu0 %v2079
    %2367 = vmatprep.subr.bf16.mxu0 %v2085
    %2368 = vmatpush1.bf16.msra.mxu0 %v2084
    %2369 = vmatprep.subr.bf16.mxu0 %v2090
    %2370 = vmatpush1.bf16.msra.mxu0 %v2089
    %2371 = vmatprep.mubr.bf16.mxu0 %v1114
    %2372 = vmatmul.mubr.bf16.gmra.mrb[0].mxu0 %v1113
    %v2373 = vpop.f32.mrb[0].mxu0
    %v2374 = vadd.f32 %v2333, %v2373
    %v2375 = vpop.f32.mrb[0].mxu0
    %v2376 = vadd.f32 %v2335, %v2375
    %v2377 = vpop.f32.mrb[0].mxu0
    %v2378 = vpop.f32.mrb[0].mxu0
    %2379 = vdwg.mxu0
    %2380 = vmatprep.subr.bf16.mxu0 %v2095
    %2381 = vmatpush1.bf16.msra.mxu0 %v2094
    %2382 = vmatprep.subr.bf16.mxu0 %v2100
    %2383 = vmatpush1.bf16.msra.mxu0 %v2099
    %2384 = vmatprep.subr.bf16.mxu0 %v2105
    %2385 = vmatpush1.bf16.msra.mxu0 %v2104
    %2386 = vmatprep.subr.bf16.mxu0 %v2110
    %2387 = vmatpush1.bf16.msra.mxu0 %v2109
    %2388 = vmatprep.subr.bf16.mxu0 0
    %2389 = vmatpush1.bf16.msra.mxu0 0
    %2390 = vmatprep.subr.bf16.mxu0 0
    %2391 = vmatpush1.bf16.msra.mxu0 0
    %2392 = vmatprep.subr.bf16.mxu0 0
    %2393 = vmatpush1.bf16.msra.mxu0 0
    %2394 = vmatprep.subr.bf16.mxu0 0
    %2395 = vmatpush1.bf16.msra.mxu0 0
    %2396 = vmatprep.subr.bf16.mxu0 0
    %2397 = vmatpush1.bf16.msra.mxu0 0
    %2398 = vmatprep.subr.bf16.mxu0 0
    %2399 = vmatpush1.bf16.msra.mxu0 0
    %2400 = vmatprep.subr.bf16.mxu0 0
    %2401 = vmatpush1.bf16.msra.mxu0 0
    %2402 = vmatprep.subr.bf16.mxu0 0
    %2403 = vmatpush1.bf16.msra.mxu0 0
    %2404 = vmatprep.subr.bf16.mxu0 0
    %2405 = vmatpush1.bf16.msra.mxu0 0
    %2406 = vmatprep.subr.bf16.mxu0 0
    %2407 = vmatpush1.bf16.msra.mxu0 0
    %2408 = vmatprep.subr.bf16.mxu0 0
    %2409 = vmatpush1.bf16.msra.mxu0 0
    %2410 = vmatprep.subr.bf16.mxu0 0
    %2411 = vmatpush1.bf16.msra.mxu0 0
    %2412 = vmatprep.mubr.bf16.mxu0 0
    %2413 = vmatmul.mubr.bf16.gmra.mrb[0].mxu0 %v2296
    %v2414 = vpop.f32.mrb[0].mxu0
    %v2415 = vadd.f32 %v2374, %v2414
    %v2416 = vpop.f32.mrb[0].mxu0
    %v2417 = vadd.f32 %v2376, %v2416
    %v2418 = vpop.f32.mrb[0].mxu0
    %v2419 = vpop.f32.mrb[0].mxu0
    %2420 = vdwg.mxu0
    %2421 = vmatprep.subr.bf16.mxu0 %v1937
    %2422 = vmatpush1.bf16.msra.mxu0 %v1936
    %2423 = vmatprep.subr.bf16.mxu0 %v1942
    %2424 = vmatpush1.bf16.msra.mxu0 %v1941
    %2425 = vmatprep.subr.bf16.mxu0 %v1947
    %2426 = vmatpush1.bf16.msra.mxu0 %v1946
    %2427 = vmatprep.subr.bf16.mxu0 %v1952
    %2428 = vmatpush1.bf16.msra.mxu0 %v1951
    %2429 = vmatprep.subr.bf16.mxu0 %v1957
    %2430 = vmatpush1.bf16.msra.mxu0 %v1956
    %2431 = vmatprep.subr.bf16.mxu0 %v1962
    %2432 = vmatpush1.bf16.msra.mxu0 %v1961
    %2433 = vmatprep.subr.bf16.mxu0 %v1967
    %2434 = vmatpush1.bf16.msra.mxu0 %v1966
    %2435 = vmatprep.subr.bf16.mxu0 %v1972
    %2436 = vmatpush1.bf16.msra.mxu0 %v1971
    %2437 = vmatprep.subr.bf16.mxu0 %v1977
    %2438 = vmatpush1.bf16.msra.mxu0 %v1976
    %2439 = vmatprep.subr.bf16.mxu0 %v1982
    %2440 = vmatpush1.bf16.msra.mxu0 %v1981
    %2441 = vmatprep.subr.bf16.mxu0 %v1987
    %2442 = vmatpush1.bf16.msra.mxu0 %v1986
    %2443 = vmatprep.subr.bf16.mxu0 %v1992
    %2444 = vmatpush1.bf16.msra.mxu0 %v1991
    %2445 = vmatprep.subr.bf16.mxu0 %v1997
    %2446 = vmatpush1.bf16.msra.mxu0 %v1996
    %2447 = vmatprep.subr.bf16.mxu0 %v2002
    %2448 = vmatpush1.bf16.msra.mxu0 %v2001
    %2449 = vmatprep.subr.bf16.mxu0 %v2007
    %2450 = vmatpush1.bf16.msra.mxu0 %v2006
    %2451 = vmatprep.subr.bf16.mxu0 %v2012
    %2452 = vmatpush1.bf16.msra.mxu0 %v2011
    %2453 = vmatprep.mubr.bf16.mxu0 %v1112
    %2454 = vmatmul.mubr.bf16.gmra.mrb[0].mxu0 %v1111
    %v2455 = vpop.f32.mrb[0].mxu0
    %v2456 = vadd.f32 %v1344, %v2455
    %v2457 = vpop.f32.mrb[0].mxu0
    %v2458 = vadd.f32 %v1348, %v2457
    %v2459 = vpop.f32.mrb[0].mxu0
    %v2460 = vpop.f32.mrb[0].mxu0
    %2461 = vdwg.mxu0
    %2462 = vmatprep.subr.bf16.mxu0 %v2017
    %2463 = vmatpush1.bf16.msra.mxu0 %v2016
    %2464 = vmatprep.subr.bf16.mxu0 %v2022
    %2465 = vmatpush1.bf16.msra.mxu0 %v2021
    %2466 = vmatprep.subr.bf16.mxu0 %v2027
    %2467 = vmatpush1.bf16.msra.mxu0 %v2026
    %2468 = vmatprep.subr.bf16.mxu0 %v2032
    %2469 = vmatpush1.bf16.msra.mxu0 %v2031
    %2470 = vmatprep.subr.bf16.mxu0 %v2037
    %2471 = vmatpush1.bf16.msra.mxu0 %v2036
    %2472 = vmatprep.subr.bf16.mxu0 %v2042
    %2473 = vmatpush1.bf16.msra.mxu0 %v2041
    %2474 = vmatprep.subr.bf16.mxu0 %v2047
    %2475 = vmatpush1.bf16.msra.mxu0 %v2046
    %2476 = vmatprep.subr.bf16.mxu0 %v2052
    %2477 = vmatpush1.bf16.msra.mxu0 %v2051
    %2478 = vmatprep.subr.bf16.mxu0 %v2057
    %2479 = vmatpush1.bf16.msra.mxu0 %v2056
    %2480 = vmatprep.subr.bf16.mxu0 %v2062
    %2481 = vmatpush1.bf16.msra.mxu0 %v2061
    %2482 = vmatprep.subr.bf16.mxu0 %v2067
    %2483 = vmatpush1.bf16.msra.mxu0 %v2066
    %2484 = vmatprep.subr.bf16.mxu0 %v2072
    %2485 = vmatpush1.bf16.msra.mxu0 %v2071
    %2486 = vmatprep.subr.bf16.mxu0 %v2077
    %2487 = vmatpush1.bf16.msra.mxu0 %v2076
    %2488 = vmatprep.subr.bf16.mxu0 %v2082
    %2489 = vmatpush1.bf16.msra.mxu0 %v2081
    %2490 = vmatprep.subr.bf16.mxu0 %v2087
    %2491 = vmatpush1.bf16.msra.mxu0 %v2086
    %2492 = vmatprep.subr.bf16.mxu0 %v2092
    %2493 = vmatpush1.bf16.msra.mxu0 %v2091
    %2494 = vmatprep.mubr.bf16.mxu0 %v1114
    %2495 = vmatmul.mubr.bf16.gmra.mrb[0].mxu0 %v1113
    %v2496 = vpop.f32.mrb[0].mxu0
    %v2497 = vadd.f32 %v2456, %v2496
    %v2498 = vpop.f32.mrb[0].mxu0
    %v2499 = vadd.f32 %v2458, %v2498
    %v2500 = vpop.f32.mrb[0].mxu0
    %v2501 = vpop.f32.mrb[0].mxu0
    %2502 = vdwg.mxu0
    %2503 = vmatprep.subr.bf16.mxu0 %v2097
    %2504 = vmatpush1.bf16.msra.mxu0 %v2096
    %2505 = vmatprep.subr.bf16.mxu0 %v2102
    %2506 = vmatpush1.bf16.msra.mxu0 %v2101
    %2507 = vmatprep.subr.bf16.mxu0 %v2107
    %2508 = vmatpush1.bf16.msra.mxu0 %v2106
    %2509 = vmatprep.subr.bf16.mxu0 %v2112
    %2510 = vmatpush1.bf16.msra.mxu0 %v2111
    %2511 = vmatprep.subr.bf16.mxu0 0
    %2512 = vmatpush1.bf16.msra.mxu0 0
    %2513 = vmatprep.subr.bf16.mxu0 0
    %2514 = vmatpush1.bf16.msra.mxu0 0
    %2515 = vmatprep.subr.bf16.mxu0 0
    %2516 = vmatpush1.bf16.msra.mxu0 0
    %2517 = vmatprep.subr.bf16.mxu0 0
    %2518 = vmatpush1.bf16.msra.mxu0 0
    %2519 = vmatprep.subr.bf16.mxu0 0
    %2520 = vmatpush1.bf16.msra.mxu0 0
    %2521 = vmatprep.subr.bf16.mxu0 0
    %2522 = vmatpush1.bf16.msra.mxu0 0
    %2523 = vmatprep.subr.bf16.mxu0 0
    %2524 = vmatpush1.bf16.msra.mxu0 0
    %2525 = vmatprep.subr.bf16.mxu0 0
    %2526 = vmatpush1.bf16.msra.mxu0 0
    %2527 = vmatprep.subr.bf16.mxu0 0
    %2528 = vmatpush1.bf16.msra.mxu0 0
    %2529 = vmatprep.subr.bf16.mxu0 0
    %2530 = vmatpush1.bf16.msra.mxu0 0
    %2531 = vmatprep.subr.bf16.mxu0 0
    %2532 = vmatpush1.bf16.msra.mxu0 0
    %2533 = vmatprep.subr.bf16.mxu0 0
    %2534 = vmatpush1.bf16.msra.mxu0 0
    %2535 = vmatprep.mubr.bf16.mxu0 0
    %2536 = vmatmul.mubr.bf16.gmra.mrb[0].mxu0 %v2296
    %v2537 = vpop.f32.mrb[0].mxu0
    %v2538 = vadd.f32 %v2497, %v2537
    %v2539 = vpop.f32.mrb[0].mxu0
    %v2540 = vadd.f32 %v2499, %v2539
    %v2541 = vpop.f32.mrb[0].mxu0
    %v2542 = vpop.f32.mrb[0].mxu0
    %2543 = vdwg.mxu0
    %2544 = vmatprep.subr.bf16.mxu0 0
    %2545 = vmatpush1.bf16.msra.mxu0 %v1938
    %2546 = vmatprep.subr.bf16.mxu0 0
    %2547 = vmatpush1.bf16.msra.mxu0 %v1943
    %2548 = vmatprep.subr.bf16.mxu0 0
    %2549 = vmatpush1.bf16.msra.mxu0 %v1948
    %2550 = vmatprep.subr.bf16.mxu0 0
    %2551 = vmatpush1.bf16.msra.mxu0 %v1953
    %2552 = vmatprep.subr.bf16.mxu0 0
    %2553 = vmatpush1.bf16.msra.mxu0 %v1958
    %2554 = vmatprep.subr.bf16.mxu0 0
    %2555 = vmatpush1.bf16.msra.mxu0 %v1963
    %2556 = vmatprep.subr.bf16.mxu0 0
    %2557 = vmatpush1.bf16.msra.mxu0 %v1968
    %2558 = vmatprep.subr.bf16.mxu0 0
    %2559 = vmatpush1.bf16.msra.mxu0 %v1973
    %2560 = vmatprep.subr.bf16.mxu0 0
    %2561 = vmatpush1.bf16.msra.mxu0 %v1978
    %2562 = vmatprep.subr.bf16.mxu0 0
    %2563 = vmatpush1.bf16.msra.mxu0 %v1983
    %2564 = vmatprep.subr.bf16.mxu0 0
    %2565 = vmatpush1.bf16.msra.mxu0 %v1988
    %2566 = vmatprep.subr.bf16.mxu0 0
    %2567 = vmatpush1.bf16.msra.mxu0 %v1993
    %2568 = vmatprep.subr.bf16.mxu0 0
    %2569 = vmatpush1.bf16.msra.mxu0 %v1998
    %2570 = vmatprep.subr.bf16.mxu0 0
    %2571 = vmatpush1.bf16.msra.mxu0 %v2003
    %2572 = vmatprep.subr.bf16.mxu0 0
    %2573 = vmatpush1.bf16.msra.mxu0 %v2008
    %2574 = vmatprep.subr.bf16.mxu0 0
    %2575 = vmatpush1.bf16.msra.mxu0 %v2013
    %2576 = vmatprep.mubr.bf16.mxu0 %v1112
    %2577 = vmatmul.mubr.bf16.gmra.mrb[0].mxu0 %v1111
    %v2578 = vpop.f32.mrb[0].mxu0
    %v2579 = vadd.f32 %v1352, %v2578
    %v2580 = vpop.f32.mrb[0].mxu0
    %v2581 = vpop.f32.mrb[0].mxu0
    %v2582 = vpop.f32.mrb[0].mxu0
    %2583 = vdwg.mxu0
    %2584 = vmatprep.subr.bf16.mxu0 0
    %2585 = vmatpush1.bf16.msra.mxu0 %v2018
    %2586 = vmatprep.subr.bf16.mxu0 0
    %2587 = vmatpush1.bf16.msra.mxu0 %v2023
    %2588 = vmatprep.subr.bf16.mxu0 0
    %2589 = vmatpush1.bf16.msra.mxu0 %v2028
    %2590 = vmatprep.subr.bf16.mxu0 0
    %2591 = vmatpush1.bf16.msra.mxu0 %v2033
    %2592 = vmatprep.subr.bf16.mxu0 0
    %2593 = vmatpush1.bf16.msra.mxu0 %v2038
    %2594 = vmatprep.subr.bf16.mxu0 0
    %2595 = vmatpush1.bf16.msra.mxu0 %v2043
    %2596 = vmatprep.subr.bf16.mxu0 0
    %2597 = vmatpush1.bf16.msra.mxu0 %v2048
    %2598 = vmatprep.subr.bf16.mxu0 0
    %2599 = vmatpush1.bf16.msra.mxu0 %v2053
    %2600 = vmatprep.subr.bf16.mxu0 0
    %2601 = vmatpush1.bf16.msra.mxu0 %v2058
    %2602 = vmatprep.subr.bf16.mxu0 0
    %2603 = vmatpush1.bf16.msra.mxu0 %v2063
    %2604 = vmatprep.subr.bf16.mxu0 0
    %2605 = vmatpush1.bf16.msra.mxu0 %v2068
    %2606 = vmatprep.subr.bf16.mxu0 0
    %2607 = vmatpush1.bf16.msra.mxu0 %v2073
    %2608 = vmatprep.subr.bf16.mxu0 0
    %2609 = vmatpush1.bf16.msra.mxu0 %v2078
    %2610 = vmatprep.subr.bf16.mxu0 0
    %2611 = vmatpush1.bf16.msra.mxu0 %v2083
    %2612 = vmatprep.subr.bf16.mxu0 0
    %2613 = vmatpush1.bf16.msra.mxu0 %v2088
    %2614 = vmatprep.subr.bf16.mxu0 0
    %2615 = vmatpush1.bf16.msra.mxu0 %v2093
    %2616 = vmatprep.mubr.bf16.mxu0 %v1114
    %2617 = vmatmul.mubr.bf16.gmra.mrb[0].mxu0 %v1113
    %v2618 = vpop.f32.mrb[0].mxu0
    %v2619 = vadd.f32 %v2579, %v2618
    %v2620 = vpop.f32.mrb[0].mxu0
    %v2621 = vpop.f32.mrb[0].mxu0
    %v2622 = vpop.f32.mrb[0].mxu0
    %2623 = vdwg.mxu0
    %2624 = vmatprep.subr.bf16.mxu0 0
    %2625 = vmatpush1.bf16.msra.mxu0 %v2098
    %2626 = vmatprep.subr.bf16.mxu0 0
    %2627 = vmatpush1.bf16.msra.mxu0 %v2103
    %2628 = vmatprep.subr.bf16.mxu0 0
    %2629 = vmatpush1.bf16.msra.mxu0 %v2108
    %2630 = vmatprep.subr.bf16.mxu0 0
    %2631 = vmatpush1.bf16.msra.mxu0 %v2113
    %2632 = vmatprep.subr.bf16.mxu0 0
    %2633 = vmatpush1.bf16.msra.mxu0 0
    %2634 = vmatprep.subr.bf16.mxu0 0
    %2635 = vmatpush1.bf16.msra.mxu0 0
    %2636 = vmatprep.subr.bf16.mxu0 0
    %2637 = vmatpush1.bf16.msra.mxu0 0
    %2638 = vmatprep.subr.bf16.mxu0 0
    %2639 = vmatpush1.bf16.msra.mxu0 0
    %2640 = vmatprep.subr.bf16.mxu0 0
    %2641 = vmatpush1.bf16.msra.mxu0 0
    %2642 = vmatprep.subr.bf16.mxu0 0
    %2643 = vmatpush1.bf16.msra.mxu0 0
    %2644 = vmatprep.subr.bf16.mxu0 0
    %2645 = vmatpush1.bf16.msra.mxu0 0
    %2646 = vmatprep.subr.bf16.mxu0 0
    %2647 = vmatpush1.bf16.msra.mxu0 0
    %2648 = vmatprep.subr.bf16.mxu0 0
    %2649 = vmatpush1.bf16.msra.mxu0 0
    %2650 = vmatprep.subr.bf16.mxu0 0
    %2651 = vmatpush1.bf16.msra.mxu0 0
    %2652 = vmatprep.subr.bf16.mxu0 0
    %2653 = vmatpush1.bf16.msra.mxu0 0
    %2654 = vmatprep.subr.bf16.mxu0 0
    %2655 = vmatpush1.bf16.msra.mxu0 0
    %2656 = vmatprep.mubr.bf16.mxu0 0
    %2657 = vmatmul.mubr.bf16.gmra.mrb[0].mxu0 %v2296
    %v2658 = vpop.f32.mrb[0].mxu0
    %v2659 = vadd.f32 %v2619, %v2658
    %v2660 = vpop.f32.mrb[0].mxu0
    %v2661 = vpop.f32.mrb[0].mxu0
    %v2662 = vpop.f32.mrb[0].mxu0
    %2663 = vdwg.mxu0
    %v2664 = vmax.f32 %v2415, 0.0
    %v2665 = vmax.f32 %v2417, 0.0
    %v2666 = vmax.f32 %v2538, 0.0
    %v2667 = vmax.f32 %v2540, 0.0
    %v2668 = vmax.f32 %v2659, 0.0
    %v2669 = vpack.c.bf16 %v2664, %v2664
    %v2670 = vpack.c.bf16 %v2665, %v2665
    %v2671 = vpack.c.bf16 %v2666, %v2666
    %v2672 = vpack.c.bf16 %v2667, %v2667
    %v2673 = vpack.c.bf16 %v2668, %v2668
    %v2674 = vld [vmem:[#allocation8] sm:$0xff]
    %v2675 = vld [vmem:[#allocation8 + $0x8] sm:$0xff]
    %v2676 = vld [vmem:[#allocation8 + $0x10] sm:$0xf]
    %v2677 = vld [vmem:[#allocation8 + $0x14] sm:$0xff]
    %v2678 = vld [vmem:[#allocation8 + $0x1c] sm:$0xff]
    %v2679 = vld [vmem:[#allocation8 + $0x24] sm:$0xf]
    %v2680 = vld [vmem:[#allocation8 + $0x28] sm:$0xff]
    %v2681 = vld [vmem:[#allocation8 + $0x30] sm:$0xff]
    %v2682 = vld [vmem:[#allocation8 + $0x38] sm:$0xf]
    %v2683 = vld [vmem:[#allocation8 + $0x3c] sm:$0xff]
    %v2684 = vld [vmem:[#allocation8 + $0x44] sm:$0xff]
    %v2685 = vld [vmem:[#allocation8 + $0x4c] sm:$0xf]
    %v2686 = vld [vmem:[#allocation8 + $0x50] sm:$0xff]
    %v2687 = vld [vmem:[#allocation8 + $0x58] sm:$0xff]
    %v2688 = vld [vmem:[#allocation8 + $0x60] sm:$0xf]
    %v2689 = vld [vmem:[#allocation8 + $0x64] sm:$0xff]
    %v2690 = vld [vmem:[#allocation8 + $0x6c] sm:$0xff]
    %v2691 = vld [vmem:[#allocation8 + $0x74] sm:$0xf]
    %v2692 = vld [vmem:[#allocation8 + $0x78] sm:$0xff]
    %v2693 = vld [vmem:[#allocation8 + $0x80] sm:$0xff]
    %v2694 = vld [vmem:[#allocation8 + $0x88] sm:$0xf]
    %v2695 = vld [vmem:[#allocation8 + $0x8c] sm:$0xff]
    %v2696 = vld [vmem:[#allocation8 + $0x94] sm:$0xff]
    %v2697 = vld [vmem:[#allocation8 + $0x9c] sm:$0xf]
    %v2698 = vld [vmem:[#allocation8 + $0xa0] sm:$0xff]
    %v2699 = vld [vmem:[#allocation8 + $0xa8] sm:$0xff]
    %v2700 = vld [vmem:[#allocation8 + $0xb0] sm:$0xf]
    %v2701 = vld [vmem:[#allocation8 + $0xb4] sm:$0xff]
    %v2702 = vld [vmem:[#allocation8 + $0xbc] sm:$0xff]
    %v2703 = vld [vmem:[#allocation8 + $0xc4] sm:$0xf]
    %v2704 = vld [vmem:[#allocation8 + $0xc8] sm:$0xff]
    %v2705 = vld [vmem:[#allocation8 + $0xd0] sm:$0xff]
    %v2706 = vld [vmem:[#allocation8 + $0xd8] sm:$0xf]
    %v2707 = vld [vmem:[#allocation8 + $0xdc] sm:$0xff]
    %v2708 = vld [vmem:[#allocation8 + $0xe4] sm:$0xff]
    %v2709 = vld [vmem:[#allocation8 + $0xec] sm:$0xf]
    %v2710 = vld [vmem:[#allocation8 + $0xf0] sm:$0xff]
    %v2711 = vld [vmem:[#allocation8 + $0xf8] sm:$0xff]
    %v2712 = vld [vmem:[#allocation8 + $0x100] sm:$0xf]
    %v2713 = vld [vmem:[#allocation8 + $0x104] sm:$0xff]
    %v2714 = vld [vmem:[#allocation8 + $0x10c] sm:$0xff]
    %v2715 = vld [vmem:[#allocation8 + $0x114] sm:$0xf]
    %v2716 = vld [vmem:[#allocation8 + $0x118] sm:$0xff]
    %v2717 = vld [vmem:[#allocation8 + $0x120] sm:$0xff]
    %v2718 = vld [vmem:[#allocation8 + $0x128] sm:$0xf]
    %v2719 = vld [vmem:[#allocation8 + $0x12c] sm:$0xff]
    %v2720 = vld [vmem:[#allocation8 + $0x134] sm:$0xff]
    %v2721 = vld [vmem:[#allocation8 + $0x13c] sm:$0xf]
    %v2722 = vld [vmem:[#allocation8 + $0x140] sm:$0xff]
    %v2723 = vld [vmem:[#allocation8 + $0x148] sm:$0xff]
    %v2724 = vld [vmem:[#allocation8 + $0x150] sm:$0xf]
    %v2725 = vld [vmem:[#allocation8 + $0x154] sm:$0xff]
    %v2726 = vld [vmem:[#allocation8 + $0x15c] sm:$0xff]
    %v2727 = vld [vmem:[#allocation8 + $0x164] sm:$0xf]
    %v2728 = vld [vmem:[#allocation8 + $0x168] sm:$0xff]
    %v2729 = vld [vmem:[#allocation8 + $0x170] sm:$0xff]
    %v2730 = vld [vmem:[#allocation8 + $0x178] sm:$0xf]
    %v2731 = vld [vmem:[#allocation8 + $0x17c] sm:$0xff]
    %v2732 = vld [vmem:[#allocation8 + $0x184] sm:$0xff]
    %v2733 = vld [vmem:[#allocation8 + $0x18c] sm:$0xf]
    %v2734 = vld [vmem:[#allocation8 + $0x190] sm:$0xff]
    %v2735 = vld [vmem:[#allocation8 + $0x198] sm:$0xff]
    %v2736 = vld [vmem:[#allocation8 + $0x1a0] sm:$0xf]
    %v2737 = vld [vmem:[#allocation8 + $0x1a4] sm:$0xff]
    %v2738 = vld [vmem:[#allocation8 + $0x1ac] sm:$0xff]
    %v2739 = vld [vmem:[#allocation8 + $0x1b4] sm:$0xf]
    %v2740 = vld [vmem:[#allocation8 + $0x1b8] sm:$0xff]
    %v2741 = vld [vmem:[#allocation8 + $0x1c0] sm:$0xff]
    %v2742 = vld [vmem:[#allocation8 + $0x1c8] sm:$0xf]
    %v2743 = vld [vmem:[#allocation8 + $0x1cc] sm:$0xff]
    %v2744 = vld [vmem:[#allocation8 + $0x1d4] sm:$0xff]
    %v2745 = vld [vmem:[#allocation8 + $0x1dc] sm:$0xf]
    %v2746 = vld [vmem:[#allocation8 + $0x1e0] sm:$0xff]
    %v2747 = vld [vmem:[#allocation8 + $0x1e8] sm:$0xff]
    %v2748 = vld [vmem:[#allocation8 + $0x1f0] sm:$0xf]
    %v2749 = vld [vmem:[#allocation8 + $0x1f4] sm:$0xff]
    %v2750 = vld [vmem:[#allocation8 + $0x1fc] sm:$0xff]
    %v2751 = vld [vmem:[#allocation8 + $0x204] sm:$0xf]
    %v2752 = vld [vmem:[#allocation8 + $0x208] sm:$0xff]
    %v2753 = vld [vmem:[#allocation8 + $0x210] sm:$0xff]
    %v2754 = vld [vmem:[#allocation8 + $0x218] sm:$0xf]
    %v2755 = vld [vmem:[#allocation8 + $0x21c] sm:$0xff]
    %v2756 = vld [vmem:[#allocation8 + $0x224] sm:$0xff]
    %v2757 = vld [vmem:[#allocation8 + $0x22c] sm:$0xf]
    %v2758 = vld [vmem:[#allocation8 + $0x230] sm:$0xff]
    %v2759 = vld [vmem:[#allocation8 + $0x238] sm:$0xff]
    %v2760 = vld [vmem:[#allocation8 + $0x240] sm:$0xf]
    %v2761 = vld [vmem:[#allocation8 + $0x244] sm:$0xff]
    %v2762 = vld [vmem:[#allocation8 + $0x24c] sm:$0xff]
    %v2763 = vld [vmem:[#allocation8 + $0x254] sm:$0xf]
    %v2764 = vld [vmem:[#allocation8 + $0x258] sm:$0xff]
    %v2765 = vld [vmem:[#allocation8 + $0x260] sm:$0xff]
    %v2766 = vld [vmem:[#allocation8 + $0x268] sm:$0xf]
    %v2767 = vld [vmem:[#allocation8 + $0x26c] sm:$0xff]
    %v2768 = vld [vmem:[#allocation8 + $0x274] sm:$0xff]
    %v2769 = vld [vmem:[#allocation8 + $0x27c] sm:$0xf]
    %v2770 = vld [vmem:[#allocation8 + $0x280] sm:$0xff]
    %v2771 = vld [vmem:[#allocation8 + $0x288] sm:$0xff]
    %v2772 = vld [vmem:[#allocation8 + $0x290] sm:$0xf]
    %v2773 = vld [vmem:[#allocation8 + $0x294] sm:$0xff]
    %v2774 = vld [vmem:[#allocation8 + $0x29c] sm:$0xff]
    %v2775 = vld [vmem:[#allocation8 + $0x2a4] sm:$0xf]
    %v2776 = vld [vmem:[#allocation8 + $0x2a8] sm:$0xff]
    %v2777 = vld [vmem:[#allocation8 + $0x2b0] sm:$0xff]
    %v2778 = vld [vmem:[#allocation8 + $0x2b8] sm:$0xf]
    %v2779 = vld [vmem:[#allocation8 + $0x2bc] sm:$0xff]
    %v2780 = vld [vmem:[#allocation8 + $0x2c4] sm:$0xff]
    %v2781 = vld [vmem:[#allocation8 + $0x2cc] sm:$0xf]
    %v2782 = vld [vmem:[#allocation8 + $0x2d0] sm:$0xff]
    %v2783 = vld [vmem:[#allocation8 + $0x2d8] sm:$0xff]
    %v2784 = vld [vmem:[#allocation8 + $0x2e0] sm:$0xf]
    %v2785 = vld [vmem:[#allocation8 + $0x2e4] sm:$0xff]
    %v2786 = vld [vmem:[#allocation8 + $0x2ec] sm:$0xff]
    %v2787 = vld [vmem:[#allocation8 + $0x2f4] sm:$0xf]
    %v2788 = vld [vmem:[#allocation8 + $0x2f8] sm:$0xff]
    %v2789 = vld [vmem:[#allocation8 + $0x300] sm:$0xff]
    %v2790 = vld [vmem:[#allocation8 + $0x308] sm:$0xf]
    %v2791 = vld [vmem:[#allocation8 + $0x30c] sm:$0xff]
    %v2792 = vld [vmem:[#allocation8 + $0x314] sm:$0xff]
    %v2793 = vld [vmem:[#allocation8 + $0x31c] sm:$0xf]
    %v2794 = vld [vmem:[#allocation8 + $0x320] sm:$0xff]
    %v2795 = vld [vmem:[#allocation8 + $0x328] sm:$0xff]
    %v2796 = vld [vmem:[#allocation8 + $0x330] sm:$0xf]
    %v2797 = vld [vmem:[#allocation8 + $0x334] sm:$0xff]
    %v2798 = vld [vmem:[#allocation8 + $0x33c] sm:$0xff]
    %v2799 = vld [vmem:[#allocation8 + $0x344] sm:$0xf]
    %v2800 = vld [vmem:[#allocation8 + $0x348] sm:$0xff]
    %v2801 = vld [vmem:[#allocation8 + $0x350] sm:$0xff]
    %v2802 = vld [vmem:[#allocation8 + $0x358] sm:$0xf]
    %v2803 = vld [vmem:[#allocation8 + $0x35c] sm:$0xff]
    %v2804 = vld [vmem:[#allocation8 + $0x364] sm:$0xff]
    %v2805 = vld [vmem:[#allocation8 + $0x36c] sm:$0xf]
    %v2806 = vld [vmem:[#allocation8 + $0x370] sm:$0xff]
    %v2807 = vld [vmem:[#allocation8 + $0x378] sm:$0xff]
    %v2808 = vld [vmem:[#allocation8 + $0x380] sm:$0xf]
    %v2809 = vld [vmem:[#allocation8 + $0x384] sm:$0xff]
    %v2810 = vld [vmem:[#allocation8 + $0x38c] sm:$0xff]
    %v2811 = vld [vmem:[#allocation8 + $0x394] sm:$0xf]
    %v2812 = vld [vmem:[#allocation8 + $0x398] sm:$0xff]
    %v2813 = vld [vmem:[#allocation8 + $0x3a0] sm:$0xff]
    %v2814 = vld [vmem:[#allocation8 + $0x3a8] sm:$0xf]
    %v2815 = vld [vmem:[#allocation8 + $0x3ac] sm:$0xff]
    %v2816 = vld [vmem:[#allocation8 + $0x3b4] sm:$0xff]
    %v2817 = vld [vmem:[#allocation8 + $0x3bc] sm:$0xf]
    %v2818 = vld [vmem:[#allocation8 + $0x3c0] sm:$0xff]
    %v2819 = vld [vmem:[#allocation8 + $0x3c8] sm:$0xff]
    %v2820 = vld [vmem:[#allocation8 + $0x3d0] sm:$0xf]
    %v2821 = vld [vmem:[#allocation8 + $0x3d4] sm:$0xff]
    %v2822 = vld [vmem:[#allocation8 + $0x3dc] sm:$0xff]
    %v2823 = vld [vmem:[#allocation8 + $0x3e4] sm:$0xf]
    %v2824 = vld [vmem:[#allocation8 + $0x3e8] sm:$0xff]
    %v2825 = vld [vmem:[#allocation8 + $0x3f0] sm:$0xff]
    %v2826 = vld [vmem:[#allocation8 + $0x3f8] sm:$0xf]
    %v2827 = vld [vmem:[#allocation8 + $0x3fc] sm:$0xff]
    %v2828 = vld [vmem:[#allocation8 + $0x404] sm:$0xff]
    %v2829 = vld [vmem:[#allocation8 + $0x40c] sm:$0xf]
    %v2830 = vld [vmem:[#allocation8 + $0x410] sm:$0xff]
    %v2831 = vld [vmem:[#allocation8 + $0x418] sm:$0xff]
    %v2832 = vld [vmem:[#allocation8 + $0x420] sm:$0xf]
    %v2833 = vld [vmem:[#allocation8 + $0x424] sm:$0xff]
    %v2834 = vld [vmem:[#allocation8 + $0x42c] sm:$0xff]
    %v2835 = vld [vmem:[#allocation8 + $0x434] sm:$0xf]
    %v2836 = vld [vmem:[#allocation8 + $0x438] sm:$0xff]
    %v2837 = vld [vmem:[#allocation8 + $0x440] sm:$0xff]
    %v2838 = vld [vmem:[#allocation8 + $0x448] sm:$0xf]
    %v2839 = vld [vmem:[#allocation8 + $0x44c] sm:$0xff]
    %v2840 = vld [vmem:[#allocation8 + $0x454] sm:$0xff]
    %v2841 = vld [vmem:[#allocation8 + $0x45c] sm:$0xf]
    %v2842 = vld [vmem:[#allocation8 + $0x460] sm:$0xff]
    %v2843 = vld [vmem:[#allocation8 + $0x468] sm:$0xff]
    %v2844 = vld [vmem:[#allocation8 + $0x470] sm:$0xf]
    %v2845 = vld [vmem:[#allocation8 + $0x474] sm:$0xff]
    %v2846 = vld [vmem:[#allocation8 + $0x47c] sm:$0xff]
    %v2847 = vld [vmem:[#allocation8 + $0x484] sm:$0xf]
    %v2848 = vld [vmem:[#allocation8 + $0x488] sm:$0xff]
    %v2849 = vld [vmem:[#allocation8 + $0x490] sm:$0xff]
    %v2850 = vld [vmem:[#allocation8 + $0x498] sm:$0xf]
    %v2851 = vld [vmem:[#allocation8 + $0x49c] sm:$0xff]
    %v2852 = vld [vmem:[#allocation8 + $0x4a4] sm:$0xff]
    %v2853 = vld [vmem:[#allocation8 + $0x4ac] sm:$0xf]
    %v2854 = vld [vmem:[#allocation8 + $0x4b0] sm:$0xff]
    %v2855 = vld [vmem:[#allocation8 + $0x4b8] sm:$0xff]
    %v2856 = vld [vmem:[#allocation8 + $0x4c0] sm:$0xf]
    %v2857 = vld [vmem:[#allocation8 + $0x4c4] sm:$0xff]
    %v2858 = vld [vmem:[#allocation8 + $0x4cc] sm:$0xff]
    %v2859 = vld [vmem:[#allocation8 + $0x4d4] sm:$0xf]
    %v2860 = vld [vmem:[#allocation8 + $0x4d8] sm:$0xff]
    %v2861 = vld [vmem:[#allocation8 + $0x4e0] sm:$0xff]
    %v2862 = vld [vmem:[#allocation8 + $0x4e8] sm:$0xf]
    %v2863 = vld [vmem:[#allocation8 + $0x4ec] sm:$0xff]
    %v2864 = vld [vmem:[#allocation8 + $0x4f4] sm:$0xff]
    %v2865 = vld [vmem:[#allocation8 + $0x4fc] sm:$0xf]
    %v2866 = vld [vmem:[#allocation8 + $0x500] sm:$0xff]
    %v2867 = vld [vmem:[#allocation8 + $0x508] sm:$0xff]
    %v2868 = vld [vmem:[#allocation8 + $0x510] sm:$0xf]
    %v2869 = vld [vmem:[#allocation8 + $0x514] sm:$0xff]
    %v2870 = vld [vmem:[#allocation8 + $0x51c] sm:$0xff]
    %v2871 = vld [vmem:[#allocation8 + $0x524] sm:$0xf]
    %v2872 = vld [vmem:[#allocation8 + $0x528] sm:$0xff]
    %v2873 = vld [vmem:[#allocation8 + $0x530] sm:$0xff]
    %v2874 = vld [vmem:[#allocation8 + $0x538] sm:$0xf]
    %v2875 = vld [vmem:[#allocation8 + $0x53c] sm:$0xff]
    %v2876 = vld [vmem:[#allocation8 + $0x544] sm:$0xff]
    %v2877 = vld [vmem:[#allocation8 + $0x54c] sm:$0xf]
    %v2878 = vld [vmem:[#allocation8 + $0x550] sm:$0xff]
    %v2879 = vld [vmem:[#allocation8 + $0x558] sm:$0xff]
    %v2880 = vld [vmem:[#allocation8 + $0x560] sm:$0xf]
    %v2881 = vld [vmem:[#allocation8 + $0x564] sm:$0xff]
    %v2882 = vld [vmem:[#allocation8 + $0x56c] sm:$0xff]
    %v2883 = vld [vmem:[#allocation8 + $0x574] sm:$0xf]
    %v2884 = vld [vmem:[#allocation8 + $0x578] sm:$0xff]
    %v2885 = vld [vmem:[#allocation8 + $0x580] sm:$0xff]
    %v2886 = vld [vmem:[#allocation8 + $0x588] sm:$0xf]
    %v2887 = vld [vmem:[#allocation8 + $0x58c] sm:$0xff]
    %v2888 = vld [vmem:[#allocation8 + $0x594] sm:$0xff]
    %v2889 = vld [vmem:[#allocation8 + $0x59c] sm:$0xf]
    %v3106 = vunpack.c.l.b16 %v2674
    %v3107 = vunpack.c.h.b16 %v2674
    %v3108 = vunpack.c.l.b16 %v2675
    %v3109 = vunpack.c.h.b16 %v2675
    %v3110 = vunpack.c.l.b16 %v2676
    %v3111 = vunpack.c.l.b16 %v2677
    %v3112 = vunpack.c.h.b16 %v2677
    %v3113 = vunpack.c.l.b16 %v2678
    %v3114 = vunpack.c.h.b16 %v2678
    %v3115 = vunpack.c.l.b16 %v2679
    %v3116 = vunpack.c.l.b16 %v2680
    %v3117 = vunpack.c.h.b16 %v2680
    %v3118 = vunpack.c.l.b16 %v2681
    %v3119 = vunpack.c.h.b16 %v2681
    %v3120 = vunpack.c.l.b16 %v2682
    %v3121 = vunpack.c.l.b16 %v2683
    %v3122 = vunpack.c.h.b16 %v2683
    %v3123 = vunpack.c.l.b16 %v2684
    %v3124 = vunpack.c.h.b16 %v2684
    %v3125 = vunpack.c.l.b16 %v2685
    %v3126 = vunpack.c.l.b16 %v2686
    %v3127 = vunpack.c.h.b16 %v2686
    %v3128 = vunpack.c.l.b16 %v2687
    %v3129 = vunpack.c.h.b16 %v2687
    %v3130 = vunpack.c.l.b16 %v2688
    %v3131 = vunpack.c.l.b16 %v2689
    %v3132 = vunpack.c.h.b16 %v2689
    %v3133 = vunpack.c.l.b16 %v2690
    %v3134 = vunpack.c.h.b16 %v2690
    %v3135 = vunpack.c.l.b16 %v2691
    %v3136 = vunpack.c.l.b16 %v2692
    %v3137 = vunpack.c.h.b16 %v2692
    %v3138 = vunpack.c.l.b16 %v2693
    %v3139 = vunpack.c.h.b16 %v2693
    %v3140 = vunpack.c.l.b16 %v2694
    %v3141 = vunpack.c.l.b16 %v2695
    %v3142 = vunpack.c.h.b16 %v2695
    %v3143 = vunpack.c.l.b16 %v2696
    %v3144 = vunpack.c.h.b16 %v2696
    %v3145 = vunpack.c.l.b16 %v2697
    %v3146 = vunpack.c.l.b16 %v2698
    %v3147 = vunpack.c.h.b16 %v2698
    %v3148 = vunpack.c.l.b16 %v2699
    %v3149 = vunpack.c.h.b16 %v2699
    %v3150 = vunpack.c.l.b16 %v2700
    %v3151 = vunpack.c.l.b16 %v2701
    %v3152 = vunpack.c.h.b16 %v2701
    %v3153 = vunpack.c.l.b16 %v2702
    %v3154 = vunpack.c.h.b16 %v2702
    %v3155 = vunpack.c.l.b16 %v2703
    %v3156 = vunpack.c.l.b16 %v2704
    %v3157 = vunpack.c.h.b16 %v2704
    %v3158 = vunpack.c.l.b16 %v2705
    %v3159 = vunpack.c.h.b16 %v2705
    %v3160 = vunpack.c.l.b16 %v2706
    %v3161 = vunpack.c.l.b16 %v2707
    %v3162 = vunpack.c.h.b16 %v2707
    %v3163 = vunpack.c.l.b16 %v2708
    %v3164 = vunpack.c.h.b16 %v2708
    %v3165 = vunpack.c.l.b16 %v2709
    %v3166 = vunpack.c.l.b16 %v2710
    %v3167 = vunpack.c.h.b16 %v2710
    %v3168 = vunpack.c.l.b16 %v2711
    %v3169 = vunpack.c.h.b16 %v2711
    %v3170 = vunpack.c.l.b16 %v2712
    %v3171 = vunpack.c.l.b16 %v2713
    %v3172 = vunpack.c.h.b16 %v2713
    %v3173 = vunpack.c.l.b16 %v2714
    %v3174 = vunpack.c.h.b16 %v2714
    %v3175 = vunpack.c.l.b16 %v2715
    %v3176 = vunpack.c.l.b16 %v2716
    %v3177 = vunpack.c.h.b16 %v2716
    %v3178 = vunpack.c.l.b16 %v2717
    %v3179 = vunpack.c.h.b16 %v2717
    %v3180 = vunpack.c.l.b16 %v2718
    %v3181 = vunpack.c.l.b16 %v2719
    %v3182 = vunpack.c.h.b16 %v2719
    %v3183 = vunpack.c.l.b16 %v2720
    %v3184 = vunpack.c.h.b16 %v2720
    %v3185 = vunpack.c.l.b16 %v2721
    %v3186 = vunpack.c.l.b16 %v2722
    %v3187 = vunpack.c.h.b16 %v2722
    %v3188 = vunpack.c.l.b16 %v2723
    %v3189 = vunpack.c.h.b16 %v2723
    %v3190 = vunpack.c.l.b16 %v2724
    %v3191 = vunpack.c.l.b16 %v2725
    %v3192 = vunpack.c.h.b16 %v2725
    %v3193 = vunpack.c.l.b16 %v2726
    %v3194 = vunpack.c.h.b16 %v2726
    %v3195 = vunpack.c.l.b16 %v2727
    %v3196 = vunpack.c.l.b16 %v2728
    %v3197 = vunpack.c.h.b16 %v2728
    %v3198 = vunpack.c.l.b16 %v2729
    %v3199 = vunpack.c.h.b16 %v2729
    %v3200 = vunpack.c.l.b16 %v2730
    %v3201 = vunpack.c.l.b16 %v2731
    %v3202 = vunpack.c.h.b16 %v2731
    %v3203 = vunpack.c.l.b16 %v2732
    %v3204 = vunpack.c.h.b16 %v2732
    %v3205 = vunpack.c.l.b16 %v2733
    %v3206 = vunpack.c.l.b16 %v2734
    %v3207 = vunpack.c.h.b16 %v2734
    %v3208 = vunpack.c.l.b16 %v2735
    %v3209 = vunpack.c.h.b16 %v2735
    %v3210 = vunpack.c.l.b16 %v2736
    %v3211 = vunpack.c.l.b16 %v2737
    %v3212 = vunpack.c.h.b16 %v2737
    %v3213 = vunpack.c.l.b16 %v2738
    %v3214 = vunpack.c.h.b16 %v2738
    %v3215 = vunpack.c.l.b16 %v2739
    %v3216 = vunpack.c.l.b16 %v2740
    %v3217 = vunpack.c.h.b16 %v2740
    %v3218 = vunpack.c.l.b16 %v2741
    %v3219 = vunpack.c.h.b16 %v2741
    %v3220 = vunpack.c.l.b16 %v2742
    %v3221 = vunpack.c.l.b16 %v2743
    %v3222 = vunpack.c.h.b16 %v2743
    %v3223 = vunpack.c.l.b16 %v2744
    %v3224 = vunpack.c.h.b16 %v2744
    %v3225 = vunpack.c.l.b16 %v2745
    %v3226 = vunpack.c.l.b16 %v2746
    %v3227 = vunpack.c.h.b16 %v2746
    %v3228 = vunpack.c.l.b16 %v2747
    %v3229 = vunpack.c.h.b16 %v2747
    %v3230 = vunpack.c.l.b16 %v2748
    %v3231 = vunpack.c.l.b16 %v2749
    %v3232 = vunpack.c.h.b16 %v2749
    %v3233 = vunpack.c.l.b16 %v2750
    %v3234 = vunpack.c.h.b16 %v2750
    %v3235 = vunpack.c.l.b16 %v2751
    %v3236 = vunpack.c.l.b16 %v2752
    %v3237 = vunpack.c.h.b16 %v2752
    %v3238 = vunpack.c.l.b16 %v2753
    %v3239 = vunpack.c.h.b16 %v2753
    %v3240 = vunpack.c.l.b16 %v2754
    %v3241 = vunpack.c.l.b16 %v2755
    %v3242 = vunpack.c.h.b16 %v2755
    %v3243 = vunpack.c.l.b16 %v2756
    %v3244 = vunpack.c.h.b16 %v2756
    %v3245 = vunpack.c.l.b16 %v2757
    %v3246 = vunpack.c.l.b16 %v2758
    %v3247 = vunpack.c.h.b16 %v2758
    %v3248 = vunpack.c.l.b16 %v2759
    %v3249 = vunpack.c.h.b16 %v2759
    %v3250 = vunpack.c.l.b16 %v2760
    %v3251 = vunpack.c.l.b16 %v2761
    %v3252 = vunpack.c.h.b16 %v2761
    %v3253 = vunpack.c.l.b16 %v2762
    %v3254 = vunpack.c.h.b16 %v2762
    %v3255 = vunpack.c.l.b16 %v2763
    %v3256 = vunpack.c.l.b16 %v2764
    %v3257 = vunpack.c.h.b16 %v2764
    %v3258 = vunpack.c.l.b16 %v2765
    %v3259 = vunpack.c.h.b16 %v2765
    %v3260 = vunpack.c.l.b16 %v2766
    %v3261 = vunpack.c.l.b16 %v2767
    %v3262 = vunpack.c.h.b16 %v2767
    %v3263 = vunpack.c.l.b16 %v2768
    %v3264 = vunpack.c.h.b16 %v2768
    %v3265 = vunpack.c.l.b16 %v2769
    %v3266 = vunpack.c.l.b16 %v2770
    %v3267 = vunpack.c.h.b16 %v2770
    %v3268 = vunpack.c.l.b16 %v2771
    %v3269 = vunpack.c.h.b16 %v2771
    %v3270 = vunpack.c.l.b16 %v2772
    %v3271 = vunpack.c.l.b16 %v2773
    %v3272 = vunpack.c.h.b16 %v2773
    %v3273 = vunpack.c.l.b16 %v2774
    %v3274 = vunpack.c.h.b16 %v2774
    %v3275 = vunpack.c.l.b16 %v2775
    %v3276 = vunpack.c.l.b16 %v2776
    %v3277 = vunpack.c.h.b16 %v2776
    %v3278 = vunpack.c.l.b16 %v2777
    %v3279 = vunpack.c.h.b16 %v2777
    %v3280 = vunpack.c.l.b16 %v2778
    %v3281 = vunpack.c.l.b16 %v2779
    %v3282 = vunpack.c.h.b16 %v2779
    %v3283 = vunpack.c.l.b16 %v2780
    %v3284 = vunpack.c.h.b16 %v2780
    %v3285 = vunpack.c.l.b16 %v2781
    %v3286 = vunpack.c.l.b16 %v2782
    %v3287 = vunpack.c.h.b16 %v2782
    %v3288 = vunpack.c.l.b16 %v2783
    %v3289 = vunpack.c.h.b16 %v2783
    %v3290 = vunpack.c.l.b16 %v2784
    %v3291 = vunpack.c.l.b16 %v2785
    %v3292 = vunpack.c.h.b16 %v2785
    %v3293 = vunpack.c.l.b16 %v2786
    %v3294 = vunpack.c.h.b16 %v2786
    %v3295 = vunpack.c.l.b16 %v2787
    %v3296 = vunpack.c.l.b16 %v2788
    %v3297 = vunpack.c.h.b16 %v2788
    %v3298 = vunpack.c.l.b16 %v2789
    %v3299 = vunpack.c.h.b16 %v2789
    %v3300 = vunpack.c.l.b16 %v2790
    %v3301 = vunpack.c.l.b16 %v2791
    %v3302 = vunpack.c.h.b16 %v2791
    %v3303 = vunpack.c.l.b16 %v2792
    %v3304 = vunpack.c.h.b16 %v2792
    %v3305 = vunpack.c.l.b16 %v2793
    %v3306 = vunpack.c.l.b16 %v2794
    %v3307 = vunpack.c.h.b16 %v2794
    %v3308 = vunpack.c.l.b16 %v2795
    %v3309 = vunpack.c.h.b16 %v2795
    %v3310 = vunpack.c.l.b16 %v2796
    %v3311 = vunpack.c.l.b16 %v2797
    %v3312 = vunpack.c.h.b16 %v2797
    %v3313 = vunpack.c.l.b16 %v2798
    %v3314 = vunpack.c.h.b16 %v2798
    %v3315 = vunpack.c.l.b16 %v2799
    %v3316 = vunpack.c.l.b16 %v2800
    %v3317 = vunpack.c.h.b16 %v2800
    %v3318 = vunpack.c.l.b16 %v2801
    %v3319 = vunpack.c.h.b16 %v2801
    %v3320 = vunpack.c.l.b16 %v2802
    %v3321 = vunpack.c.l.b16 %v2803
    %v3322 = vunpack.c.h.b16 %v2803
    %v3323 = vunpack.c.l.b16 %v2804
    %v3324 = vunpack.c.h.b16 %v2804
    %v3325 = vunpack.c.l.b16 %v2805
    %v3326 = vunpack.c.l.b16 %v2806
    %v3327 = vunpack.c.h.b16 %v2806
    %v3328 = vunpack.c.l.b16 %v2807
    %v3329 = vunpack.c.h.b16 %v2807
    %v3330 = vunpack.c.l.b16 %v2808
    %v3331 = vunpack.c.l.b16 %v2809
    %v3332 = vunpack.c.h.b16 %v2809
    %v3333 = vunpack.c.l.b16 %v2810
    %v3334 = vunpack.c.h.b16 %v2810
    %v3335 = vunpack.c.l.b16 %v2811
    %v3336 = vunpack.c.l.b16 %v2812
    %v3337 = vunpack.c.h.b16 %v2812
    %v3338 = vunpack.c.l.b16 %v2813
    %v3339 = vunpack.c.h.b16 %v2813
    %v3340 = vunpack.c.l.b16 %v2814
    %v3341 = vunpack.c.l.b16 %v2815
    %v3342 = vunpack.c.h.b16 %v2815
    %v3343 = vunpack.c.l.b16 %v2816
    %v3344 = vunpack.c.h.b16 %v2816
    %v3345 = vunpack.c.l.b16 %v2817
    %v3346 = vunpack.c.l.b16 %v2818
    %v3347 = vunpack.c.h.b16 %v2818
    %v3348 = vunpack.c.l.b16 %v2819
    %v3349 = vunpack.c.h.b16 %v2819
    %v3350 = vunpack.c.l.b16 %v2820
    %v3351 = vunpack.c.l.b16 %v2821
    %v3352 = vunpack.c.h.b16 %v2821
    %v3353 = vunpack.c.l.b16 %v2822
    %v3354 = vunpack.c.h.b16 %v2822
    %v3355 = vunpack.c.l.b16 %v2823
    %v3356 = vunpack.c.l.b16 %v2824
    %v3357 = vunpack.c.h.b16 %v2824
    %v3358 = vunpack.c.l.b16 %v2825
    %v3359 = vunpack.c.h.b16 %v2825
    %v3360 = vunpack.c.l.b16 %v2826
    %v3361 = vunpack.c.l.b16 %v2827
    %v3362 = vunpack.c.h.b16 %v2827
    %v3363 = vunpack.c.l.b16 %v2828
    %v3364 = vunpack.c.h.b16 %v2828
    %v3365 = vunpack.c.l.b16 %v2829
    %v3366 = vunpack.c.l.b16 %v2830
    %v3367 = vunpack.c.h.b16 %v2830
    %v3368 = vunpack.c.l.b16 %v2831
    %v3369 = vunpack.c.h.b16 %v2831
    %v3370 = vunpack.c.l.b16 %v2832
    %v3371 = vunpack.c.l.b16 %v2833
    %v3372 = vunpack.c.h.b16 %v2833
    %v3373 = vunpack.c.l.b16 %v2834
    %v3374 = vunpack.c.h.b16 %v2834
    %v3375 = vunpack.c.l.b16 %v2835
    %v3376 = vunpack.c.l.b16 %v2836
    %v3377 = vunpack.c.h.b16 %v2836
    %v3378 = vunpack.c.l.b16 %v2837
    %v3379 = vunpack.c.h.b16 %v2837
    %v3380 = vunpack.c.l.b16 %v2838
    %v3381 = vunpack.c.l.b16 %v2839
    %v3382 = vunpack.c.h.b16 %v2839
    %v3383 = vunpack.c.l.b16 %v2840
    %v3384 = vunpack.c.h.b16 %v2840
    %v3385 = vunpack.c.l.b16 %v2841
    %v3386 = vunpack.c.l.b16 %v2842
    %v3387 = vunpack.c.h.b16 %v2842
    %v3388 = vunpack.c.l.b16 %v2843
    %v3389 = vunpack.c.h.b16 %v2843
    %v3390 = vunpack.c.l.b16 %v2844
    %v3391 = vunpack.c.l.b16 %v2845
    %v3392 = vunpack.c.h.b16 %v2845
    %v3393 = vunpack.c.l.b16 %v2846
    %v3394 = vunpack.c.h.b16 %v2846
    %v3395 = vunpack.c.l.b16 %v2847
    %v3396 = vunpack.c.l.b16 %v2848
    %v3397 = vunpack.c.h.b16 %v2848
    %v3398 = vunpack.c.l.b16 %v2849
    %v3399 = vunpack.c.h.b16 %v2849
    %v3400 = vunpack.c.l.b16 %v2850
    %v3401 = vunpack.c.l.b16 %v2851
    %v3402 = vunpack.c.h.b16 %v2851
    %v3403 = vunpack.c.l.b16 %v2852
    %v3404 = vunpack.c.h.b16 %v2852
    %v3405 = vunpack.c.l.b16 %v2853
    %v3406 = vunpack.c.l.b16 %v2854
    %v3407 = vunpack.c.h.b16 %v2854
    %v3408 = vunpack.c.l.b16 %v2855
    %v3409 = vunpack.c.h.b16 %v2855
    %v3410 = vunpack.c.l.b16 %v2856
    %v3411 = vunpack.c.l.b16 %v2857
    %v3412 = vunpack.c.h.b16 %v2857
    %v3413 = vunpack.c.l.b16 %v2858
    %v3414 = vunpack.c.h.b16 %v2858
    %v3415 = vunpack.c.l.b16 %v2859
    %v3416 = vunpack.c.l.b16 %v2860
    %v3417 = vunpack.c.h.b16 %v2860
    %v3418 = vunpack.c.l.b16 %v2861
    %v3419 = vunpack.c.h.b16 %v2861
    %v3420 = vunpack.c.l.b16 %v2862
    %v3421 = vunpack.c.l.b16 %v2863
    %v3422 = vunpack.c.h.b16 %v2863
    %v3423 = vunpack.c.l.b16 %v2864
    %v3424 = vunpack.c.h.b16 %v2864
    %v3425 = vunpack.c.l.b16 %v2865
    %v3426 = vunpack.c.l.b16 %v2866
    %v3427 = vunpack.c.h.b16 %v2866
    %v3428 = vunpack.c.l.b16 %v2867
    %v3429 = vunpack.c.h.b16 %v2867
    %v3430 = vunpack.c.l.b16 %v2868
    %v3431 = vunpack.c.l.b16 %v2869
    %v3432 = vunpack.c.h.b16 %v2869
    %v3433 = vunpack.c.l.b16 %v2870
    %v3434 = vunpack.c.h.b16 %v2870
    %v3435 = vunpack.c.l.b16 %v2871
    %v3436 = vunpack.c.l.b16 %v2872
    %v3437 = vunpack.c.h.b16 %v2872
    %v3438 = vunpack.c.l.b16 %v2873
    %v3439 = vunpack.c.h.b16 %v2873
    %v3440 = vunpack.c.l.b16 %v2874
    %v3441 = vunpack.c.l.b16 %v2875
    %v3442 = vunpack.c.h.b16 %v2875
    %v3443 = vunpack.c.l.b16 %v2876
    %v3444 = vunpack.c.h.b16 %v2876
    %v3445 = vunpack.c.l.b16 %v2877
    %v3446 = vunpack.c.l.b16 %v2878
    %v3447 = vunpack.c.h.b16 %v2878
    %v3448 = vunpack.c.l.b16 %v2879
    %v3449 = vunpack.c.h.b16 %v2879
    %v3450 = vunpack.c.l.b16 %v2880
    %v3451 = vunpack.c.l.b16 %v2881
    %v3452 = vunpack.c.h.b16 %v2881
    %v3453 = vunpack.c.l.b16 %v2882
    %v3454 = vunpack.c.h.b16 %v2882
    %v3455 = vunpack.c.l.b16 %v2883
    %v3456 = vunpack.c.l.b16 %v2884
    %v3457 = vunpack.c.h.b16 %v2884
    %v3458 = vunpack.c.l.b16 %v2885
    %v3459 = vunpack.c.h.b16 %v2885
    %v3460 = vunpack.c.l.b16 %v2886
    %v3461 = vunpack.c.l.b16 %v2887
    %v3462 = vunpack.c.h.b16 %v2887
    %v3463 = vunpack.c.l.b16 %v2888
    %v3464 = vunpack.c.h.b16 %v2888
    %v3465 = vunpack.c.l.b16 %v2889
    %v3466 = vpack.c.b16 %v3111, %v3106
    %v3467 = vpack.c.b16 %v3112, %v3107
    %v3468 = vpack.c.b16 %v3113, %v3108
    %v3469 = vpack.c.b16 %v3114, %v3109
    %v3470 = vpack.c.b16 %v3115, %v3110
    %v3471 = vpack.c.b16 %v3121, %v3116
    %v3472 = vpack.c.b16 %v3122, %v3117
    %v3473 = vpack.c.b16 %v3123, %v3118
    %v3474 = vpack.c.b16 %v3124, %v3119
    %v3475 = vpack.c.b16 %v3125, %v3120
    %v3476 = vpack.c.b16 %v3131, %v3126
    %v3477 = vpack.c.b16 %v3132, %v3127
    %v3478 = vpack.c.b16 %v3133, %v3128
    %v3479 = vpack.c.b16 %v3134, %v3129
    %v3480 = vpack.c.b16 %v3135, %v3130
    %v3481 = vpack.c.b16 %v3141, %v3136
    %v3482 = vpack.c.b16 %v3142, %v3137
    %v3483 = vpack.c.b16 %v3143, %v3138
    %v3484 = vpack.c.b16 %v3144, %v3139
    %v3485 = vpack.c.b16 %v3145, %v3140
    %v3486 = vpack.c.b16 %v3151, %v3146
    %v3487 = vpack.c.b16 %v3152, %v3147
    %v3488 = vpack.c.b16 %v3153, %v3148
    %v3489 = vpack.c.b16 %v3154, %v3149
    %v3490 = vpack.c.b16 %v3155, %v3150
    %v3491 = vpack.c.b16 %v3161, %v3156
    %v3492 = vpack.c.b16 %v3162, %v3157
    %v3493 = vpack.c.b16 %v3163, %v3158
    %v3494 = vpack.c.b16 %v3164, %v3159
    %v3495 = vpack.c.b16 %v3165, %v3160
    %v3496 = vpack.c.b16 %v3171, %v3166
    %v3497 = vpack.c.b16 %v3172, %v3167
    %v3498 = vpack.c.b16 %v3173, %v3168
    %v3499 = vpack.c.b16 %v3174, %v3169
    %v3500 = vpack.c.b16 %v3175, %v3170
    %v3501 = vpack.c.b16 %v3181, %v3176
    %v3502 = vpack.c.b16 %v3182, %v3177
    %v3503 = vpack.c.b16 %v3183, %v3178
    %v3504 = vpack.c.b16 %v3184, %v3179
    %v3505 = vpack.c.b16 %v3185, %v3180
    %v3506 = vpack.c.b16 %v3191, %v3186
    %v3507 = vpack.c.b16 %v3192, %v3187
    %v3508 = vpack.c.b16 %v3193, %v3188
    %v3509 = vpack.c.b16 %v3194, %v3189
    %v3510 = vpack.c.b16 %v3195, %v3190
    %v3511 = vpack.c.b16 %v3201, %v3196
    %v3512 = vpack.c.b16 %v3202, %v3197
    %v3513 = vpack.c.b16 %v3203, %v3198
    %v3514 = vpack.c.b16 %v3204, %v3199
    %v3515 = vpack.c.b16 %v3205, %v3200
    %v3516 = vpack.c.b16 %v3211, %v3206
    %v3517 = vpack.c.b16 %v3212, %v3207
    %v3518 = vpack.c.b16 %v3213, %v3208
    %v3519 = vpack.c.b16 %v3214, %v3209
    %v3520 = vpack.c.b16 %v3215, %v3210
    %v3521 = vpack.c.b16 %v3221, %v3216
    %v3522 = vpack.c.b16 %v3222, %v3217
    %v3523 = vpack.c.b16 %v3223, %v3218
    %v3524 = vpack.c.b16 %v3224, %v3219
    %v3525 = vpack.c.b16 %v3225, %v3220
    %v3526 = vpack.c.b16 %v3231, %v3226
    %v3527 = vpack.c.b16 %v3232, %v3227
    %v3528 = vpack.c.b16 %v3233, %v3228
    %v3529 = vpack.c.b16 %v3234, %v3229
    %v3530 = vpack.c.b16 %v3235, %v3230
    %v3531 = vpack.c.b16 %v3241, %v3236
    %v3532 = vpack.c.b16 %v3242, %v3237
    %v3533 = vpack.c.b16 %v3243, %v3238
    %v3534 = vpack.c.b16 %v3244, %v3239
    %v3535 = vpack.c.b16 %v3245, %v3240
    %v3536 = vpack.c.b16 %v3251, %v3246
    %v3537 = vpack.c.b16 %v3252, %v3247
    %v3538 = vpack.c.b16 %v3253, %v3248
    %v3539 = vpack.c.b16 %v3254, %v3249
    %v3540 = vpack.c.b16 %v3255, %v3250
    %v3541 = vpack.c.b16 %v3261, %v3256
    %v3542 = vpack.c.b16 %v3262, %v3257
    %v3543 = vpack.c.b16 %v3263, %v3258
    %v3544 = vpack.c.b16 %v3264, %v3259
    %v3545 = vpack.c.b16 %v3265, %v3260
    %v3546 = vpack.c.b16 %v3271, %v3266
    %v3547 = vpack.c.b16 %v3272, %v3267
    %v3548 = vpack.c.b16 %v3273, %v3268
    %v3549 = vpack.c.b16 %v3274, %v3269
    %v3550 = vpack.c.b16 %v3275, %v3270
    %v3551 = vpack.c.b16 %v3281, %v3276
    %v3552 = vpack.c.b16 %v3282, %v3277
    %v3553 = vpack.c.b16 %v3283, %v3278
    %v3554 = vpack.c.b16 %v3284, %v3279
    %v3555 = vpack.c.b16 %v3285, %v3280
    %v3556 = vpack.c.b16 %v3291, %v3286
    %v3557 = vpack.c.b16 %v3292, %v3287
    %v3558 = vpack.c.b16 %v3293, %v3288
    %v3559 = vpack.c.b16 %v3294, %v3289
    %v3560 = vpack.c.b16 %v3295, %v3290
    %v3561 = vpack.c.b16 %v3301, %v3296
    %v3562 = vpack.c.b16 %v3302, %v3297
    %v3563 = vpack.c.b16 %v3303, %v3298
    %v3564 = vpack.c.b16 %v3304, %v3299
    %v3565 = vpack.c.b16 %v3305, %v3300
    %v3566 = vpack.c.b16 %v3311, %v3306
    %v3567 = vpack.c.b16 %v3312, %v3307
    %v3568 = vpack.c.b16 %v3313, %v3308
    %v3569 = vpack.c.b16 %v3314, %v3309
    %v3570 = vpack.c.b16 %v3315, %v3310
    %v3571 = vpack.c.b16 %v3321, %v3316
    %v3572 = vpack.c.b16 %v3322, %v3317
    %v3573 = vpack.c.b16 %v3323, %v3318
    %v3574 = vpack.c.b16 %v3324, %v3319
    %v3575 = vpack.c.b16 %v3325, %v3320
    %v3576 = vpack.c.b16 %v3331, %v3326
    %v3577 = vpack.c.b16 %v3332, %v3327
    %v3578 = vpack.c.b16 %v3333, %v3328
    %v3579 = vpack.c.b16 %v3334, %v3329
    %v3580 = vpack.c.b16 %v3335, %v3330
    %v3581 = vpack.c.b16 %v3341, %v3336
    %v3582 = vpack.c.b16 %v3342, %v3337
    %v3583 = vpack.c.b16 %v3343, %v3338
    %v3584 = vpack.c.b16 %v3344, %v3339
    %v3585 = vpack.c.b16 %v3345, %v3340
    %v3586 = vpack.c.b16 %v3351, %v3346
    %v3587 = vpack.c.b16 %v3352, %v3347
    %v3588 = vpack.c.b16 %v3353, %v3348
    %v3589 = vpack.c.b16 %v3354, %v3349
    %v3590 = vpack.c.b16 %v3355, %v3350
    %v3591 = vpack.c.b16 %v3361, %v3356
    %v3592 = vpack.c.b16 %v3362, %v3357
    %v3593 = vpack.c.b16 %v3363, %v3358
    %v3594 = vpack.c.b16 %v3364, %v3359
    %v3595 = vpack.c.b16 %v3365, %v3360
    %v3596 = vpack.c.b16 %v3371, %v3366
    %v3597 = vpack.c.b16 %v3372, %v3367
    %v3598 = vpack.c.b16 %v3373, %v3368
    %v3599 = vpack.c.b16 %v3374, %v3369
    %v3600 = vpack.c.b16 %v3375, %v3370
    %v3601 = vpack.c.b16 %v3381, %v3376
    %v3602 = vpack.c.b16 %v3382, %v3377
    %v3603 = vpack.c.b16 %v3383, %v3378
    %v3604 = vpack.c.b16 %v3384, %v3379
    %v3605 = vpack.c.b16 %v3385, %v3380
    %v3606 = vpack.c.b16 %v3391, %v3386
    %v3607 = vpack.c.b16 %v3392, %v3387
    %v3608 = vpack.c.b16 %v3393, %v3388
    %v3609 = vpack.c.b16 %v3394, %v3389
    %v3610 = vpack.c.b16 %v3395, %v3390
    %v3611 = vpack.c.b16 %v3401, %v3396
    %v3612 = vpack.c.b16 %v3402, %v3397
    %v3613 = vpack.c.b16 %v3403, %v3398
    %v3614 = vpack.c.b16 %v3404, %v3399
    %v3615 = vpack.c.b16 %v3405, %v3400
    %v3616 = vpack.c.b16 %v3411, %v3406
    %v3617 = vpack.c.b16 %v3412, %v3407
    %v3618 = vpack.c.b16 %v3413, %v3408
    %v3619 = vpack.c.b16 %v3414, %v3409
    %v3620 = vpack.c.b16 %v3415, %v3410
    %v3621 = vpack.c.b16 %v3421, %v3416
    %v3622 = vpack.c.b16 %v3422, %v3417
    %v3623 = vpack.c.b16 %v3423, %v3418
    %v3624 = vpack.c.b16 %v3424, %v3419
    %v3625 = vpack.c.b16 %v3425, %v3420
    %v3626 = vpack.c.b16 %v3431, %v3426
    %v3627 = vpack.c.b16 %v3432, %v3427
    %v3628 = vpack.c.b16 %v3433, %v3428
    %v3629 = vpack.c.b16 %v3434, %v3429
    %v3630 = vpack.c.b16 %v3435, %v3430
    %v3631 = vpack.c.b16 %v3441, %v3436
    %v3632 = vpack.c.b16 %v3442, %v3437
    %v3633 = vpack.c.b16 %v3443, %v3438
    %v3634 = vpack.c.b16 %v3444, %v3439
    %v3635 = vpack.c.b16 %v3445, %v3440
    %v3636 = vpack.c.b16 %v3451, %v3446
    %v3637 = vpack.c.b16 %v3452, %v3447
    %v3638 = vpack.c.b16 %v3453, %v3448
    %v3639 = vpack.c.b16 %v3454, %v3449
    %v3640 = vpack.c.b16 %v3455, %v3450
    %v3641 = vpack.c.b16 %v3461, %v3456
    %v3642 = vpack.c.b16 %v3462, %v3457
    %v3643 = vpack.c.b16 %v3463, %v3458
    %v3644 = vpack.c.b16 %v3464, %v3459
    %v3645 = vpack.c.b16 %v3465, %v3460
    %v3827 = vsel %vm2294, %v2673, 0
    %3829 = vmatprep.subr.bf16.mxu0 %v3467
    %3830 = vmatpush1.bf16.msra.mxu0 %v3466
    %3831 = vmatprep.subr.bf16.mxu0 %v3472
    %3832 = vmatpush1.bf16.msra.mxu0 %v3471
    %3833 = vmatprep.subr.bf16.mxu0 %v3477
    %3834 = vmatpush1.bf16.msra.mxu0 %v3476
    %3835 = vmatprep.subr.bf16.mxu0 %v3482
    %3836 = vmatpush1.bf16.msra.mxu0 %v3481
    %3837 = vmatprep.subr.bf16.mxu0 %v3487
    %3838 = vmatpush1.bf16.msra.mxu0 %v3486
    %3839 = vmatprep.subr.bf16.mxu0 %v3492
    %3840 = vmatpush1.bf16.msra.mxu0 %v3491
    %3841 = vmatprep.subr.bf16.mxu0 %v3497
    %3842 = vmatpush1.bf16.msra.mxu0 %v3496
    %3843 = vmatprep.subr.bf16.mxu0 %v3502
    %3844 = vmatpush1.bf16.msra.mxu0 %v3501
    %3845 = vmatprep.subr.bf16.mxu0 %v3507
    %3846 = vmatpush1.bf16.msra.mxu0 %v3506
    %3847 = vmatprep.subr.bf16.mxu0 %v3512
    %3848 = vmatpush1.bf16.msra.mxu0 %v3511
    %3849 = vmatprep.subr.bf16.mxu0 %v3517
    %3850 = vmatpush1.bf16.msra.mxu0 %v3516
    %3851 = vmatprep.subr.bf16.mxu0 %v3522
    %3852 = vmatpush1.bf16.msra.mxu0 %v3521
    %3853 = vmatprep.subr.bf16.mxu0 %v3527
    %3854 = vmatpush1.bf16.msra.mxu0 %v3526
    %3855 = vmatprep.subr.bf16.mxu0 %v3532
    %3856 = vmatpush1.bf16.msra.mxu0 %v3531
    %3857 = vmatprep.subr.bf16.mxu0 %v3537
    %3858 = vmatpush1.bf16.msra.mxu0 %v3536
    %3859 = vmatprep.subr.bf16.mxu0 %v3542
    %3860 = vmatpush1.bf16.msra.mxu0 %v3541
    %3861 = vmatprep.mubr.bf16.mxu0 %v2670
    %3862 = vmatmul.mubr.bf16.gmra.mrb[0].mxu0 %v2669
    %v3863 = vpop.f32.mrb[0].mxu0
    %v3864 = vadd.f32 0.0, %v3863
    %v3865 = vpop.f32.mrb[0].mxu0
    %v3866 = vadd.f32 0.0, %v3865
    %v3867 = vpop.f32.mrb[0].mxu0
    %v3868 = vpop.f32.mrb[0].mxu0
    %3869 = vdwg.mxu0
    %3870 = vmatprep.subr.bf16.mxu0 %v3547
    %3871 = vmatpush1.bf16.msra.mxu0 %v3546
    %3872 = vmatprep.subr.bf16.mxu0 %v3552
    %3873 = vmatpush1.bf16.msra.mxu0 %v3551
    %3874 = vmatprep.subr.bf16.mxu0 %v3557
    %3875 = vmatpush1.bf16.msra.mxu0 %v3556
    %3876 = vmatprep.subr.bf16.mxu0 %v3562
    %3877 = vmatpush1.bf16.msra.mxu0 %v3561
    %3878 = vmatprep.subr.bf16.mxu0 %v3567
    %3879 = vmatpush1.bf16.msra.mxu0 %v3566
    %3880 = vmatprep.subr.bf16.mxu0 %v3572
    %3881 = vmatpush1.bf16.msra.mxu0 %v3571
    %3882 = vmatprep.subr.bf16.mxu0 %v3577
    %3883 = vmatpush1.bf16.msra.mxu0 %v3576
    %3884 = vmatprep.subr.bf16.mxu0 %v3582
    %3885 = vmatpush1.bf16.msra.mxu0 %v3581
    %3886 = vmatprep.subr.bf16.mxu0 %v3587
    %3887 = vmatpush1.bf16.msra.mxu0 %v3586
    %3888 = vmatprep.subr.bf16.mxu0 %v3592
    %3889 = vmatpush1.bf16.msra.mxu0 %v3591
    %3890 = vmatprep.subr.bf16.mxu0 %v3597
    %3891 = vmatpush1.bf16.msra.mxu0 %v3596
    %3892 = vmatprep.subr.bf16.mxu0 %v3602
    %3893 = vmatpush1.bf16.msra.mxu0 %v3601
    %3894 = vmatprep.subr.bf16.mxu0 %v3607
    %3895 = vmatpush1.bf16.msra.mxu0 %v3606
    %3896 = vmatprep.subr.bf16.mxu0 %v3612
    %3897 = vmatpush1.bf16.msra.mxu0 %v3611
    %3898 = vmatprep.subr.bf16.mxu0 %v3617
    %3899 = vmatpush1.bf16.msra.mxu0 %v3616
    %3900 = vmatprep.subr.bf16.mxu0 %v3622
    %3901 = vmatpush1.bf16.msra.mxu0 %v3621
    %3902 = vmatprep.mubr.bf16.mxu0 %v2672
    %3903 = vmatmul.mubr.bf16.gmra.mrb[0].mxu0 %v2671
    %v3904 = vpop.f32.mrb[0].mxu0
    %v3905 = vadd.f32 %v3864, %v3904
    %v3906 = vpop.f32.mrb[0].mxu0
    %v3907 = vadd.f32 %v3866, %v3906
    %v3908 = vpop.f32.mrb[0].mxu0
    %v3909 = vpop.f32.mrb[0].mxu0
    %3910 = vdwg.mxu0
    %3911 = vmatprep.subr.bf16.mxu0 %v3627
    %3912 = vmatpush1.bf16.msra.mxu0 %v3626
    %3913 = vmatprep.subr.bf16.mxu0 %v3632
    %3914 = vmatpush1.bf16.msra.mxu0 %v3631
    %3915 = vmatprep.subr.bf16.mxu0 %v3637
    %3916 = vmatpush1.bf16.msra.mxu0 %v3636
    %3917 = vmatprep.subr.bf16.mxu0 %v3642
    %3918 = vmatpush1.bf16.msra.mxu0 %v3641
    %3919 = vmatprep.subr.bf16.mxu0 0
    %3920 = vmatpush1.bf16.msra.mxu0 0
    %3921 = vmatprep.subr.bf16.mxu0 0
    %3922 = vmatpush1.bf16.msra.mxu0 0
    %3923 = vmatprep.subr.bf16.mxu0 0
    %3924 = vmatpush1.bf16.msra.mxu0 0
    %3925 = vmatprep.subr.bf16.mxu0 0
    %3926 = vmatpush1.bf16.msra.mxu0 0
    %3927 = vmatprep.subr.bf16.mxu0 0
    %3928 = vmatpush1.bf16.msra.mxu0 0
    %3929 = vmatprep.subr.bf16.mxu0 0
    %3930 = vmatpush1.bf16.msra.mxu0 0
    %3931 = vmatprep.subr.bf16.mxu0 0
    %3932 = vmatpush1.bf16.msra.mxu0 0
    %3933 = vmatprep.subr.bf16.mxu0 0
    %3934 = vmatpush1.bf16.msra.mxu0 0
    %3935 = vmatprep.subr.bf16.mxu0 0
    %3936 = vmatpush1.bf16.msra.mxu0 0
    %3937 = vmatprep.subr.bf16.mxu0 0
    %3938 = vmatpush1.bf16.msra.mxu0 0
    %3939 = vmatprep.subr.bf16.mxu0 0
    %3940 = vmatpush1.bf16.msra.mxu0 0
    %3941 = vmatprep.subr.bf16.mxu0 0
    %3942 = vmatpush1.bf16.msra.mxu0 0
    %3943 = vmatprep.mubr.bf16.mxu0 0
    %3944 = vmatmul.mubr.bf16.gmra.mrb[0].mxu0 %v3827
    %v3945 = vpop.f32.mrb[0].mxu0
    %v3946 = vadd.f32 %v3905, %v3945
    %v3947 = vpop.f32.mrb[0].mxu0
    %v3948 = vadd.f32 %v3907, %v3947
    %v3949 = vpop.f32.mrb[0].mxu0
    %v3950 = vpop.f32.mrb[0].mxu0
    %3951 = vdwg.mxu0
    %3952 = vmatprep.subr.bf16.mxu0 %v3469
    %3953 = vmatpush1.bf16.msra.mxu0 %v3468
    %3954 = vmatprep.subr.bf16.mxu0 %v3474
    %3955 = vmatpush1.bf16.msra.mxu0 %v3473
    %3956 = vmatprep.subr.bf16.mxu0 %v3479
    %3957 = vmatpush1.bf16.msra.mxu0 %v3478
    %3958 = vmatprep.subr.bf16.mxu0 %v3484
    %3959 = vmatpush1.bf16.msra.mxu0 %v3483
    %3960 = vmatprep.subr.bf16.mxu0 %v3489
    %3961 = vmatpush1.bf16.msra.mxu0 %v3488
    %3962 = vmatprep.subr.bf16.mxu0 %v3494
    %3963 = vmatpush1.bf16.msra.mxu0 %v3493
    %3964 = vmatprep.subr.bf16.mxu0 %v3499
    %3965 = vmatpush1.bf16.msra.mxu0 %v3498
    %3966 = vmatprep.subr.bf16.mxu0 %v3504
    %3967 = vmatpush1.bf16.msra.mxu0 %v3503
    %3968 = vmatprep.subr.bf16.mxu0 %v3509
    %3969 = vmatpush1.bf16.msra.mxu0 %v3508
    %3970 = vmatprep.subr.bf16.mxu0 %v3514
    %3971 = vmatpush1.bf16.msra.mxu0 %v3513
    %3972 = vmatprep.subr.bf16.mxu0 %v3519
    %3973 = vmatpush1.bf16.msra.mxu0 %v3518
    %3974 = vmatprep.subr.bf16.mxu0 %v3524
    %3975 = vmatpush1.bf16.msra.mxu0 %v3523
    %3976 = vmatprep.subr.bf16.mxu0 %v3529
    %3977 = vmatpush1.bf16.msra.mxu0 %v3528
    %3978 = vmatprep.subr.bf16.mxu0 %v3534
    %3979 = vmatpush1.bf16.msra.mxu0 %v3533
    %3980 = vmatprep.subr.bf16.mxu0 %v3539
    %3981 = vmatpush1.bf16.msra.mxu0 %v3538
    %3982 = vmatprep.subr.bf16.mxu0 %v3544
    %3983 = vmatpush1.bf16.msra.mxu0 %v3543
    %3984 = vmatprep.mubr.bf16.mxu0 %v2670
    %3985 = vmatmul.mubr.bf16.gmra.mrb[0].mxu0 %v2669
    %v3986 = vpop.f32.mrb[0].mxu0
    %v3987 = vadd.f32 0.0, %v3986
    %v3988 = vpop.f32.mrb[0].mxu0
    %v3989 = vadd.f32 0.0, %v3988
    %v3990 = vpop.f32.mrb[0].mxu0
    %v3991 = vpop.f32.mrb[0].mxu0
    %3992 = vdwg.mxu0
    %3993 = vmatprep.subr.bf16.mxu0 %v3549
    %3994 = vmatpush1.bf16.msra.mxu0 %v3548
    %3995 = vmatprep.subr.bf16.mxu0 %v3554
    %3996 = vmatpush1.bf16.msra.mxu0 %v3553
    %3997 = vmatprep.subr.bf16.mxu0 %v3559
    %3998 = vmatpush1.bf16.msra.mxu0 %v3558
    %3999 = vmatprep.subr.bf16.mxu0 %v3564
    %4000 = vmatpush1.bf16.msra.mxu0 %v3563
    %4001 = vmatprep.subr.bf16.mxu0 %v3569
    %4002 = vmatpush1.bf16.msra.mxu0 %v3568
    %4003 = vmatprep.subr.bf16.mxu0 %v3574
    %4004 = vmatpush1.bf16.msra.mxu0 %v3573
    %4005 = vmatprep.subr.bf16.mxu0 %v3579
    %4006 = vmatpush1.bf16.msra.mxu0 %v3578
    %4007 = vmatprep.subr.bf16.mxu0 %v3584
    %4008 = vmatpush1.bf16.msra.mxu0 %v3583
    %4009 = vmatprep.subr.bf16.mxu0 %v3589
    %4010 = vmatpush1.bf16.msra.mxu0 %v3588
    %4011 = vmatprep.subr.bf16.mxu0 %v3594
    %4012 = vmatpush1.bf16.msra.mxu0 %v3593
    %4013 = vmatprep.subr.bf16.mxu0 %v3599
    %4014 = vmatpush1.bf16.msra.mxu0 %v3598
    %4015 = vmatprep.subr.bf16.mxu0 %v3604
    %4016 = vmatpush1.bf16.msra.mxu0 %v3603
    %4017 = vmatprep.subr.bf16.mxu0 %v3609
    %4018 = vmatpush1.bf16.msra.mxu0 %v3608
    %4019 = vmatprep.subr.bf16.mxu0 %v3614
    %4020 = vmatpush1.bf16.msra.mxu0 %v3613
    %4021 = vmatprep.subr.bf16.mxu0 %v3619
    %4022 = vmatpush1.bf16.msra.mxu0 %v3618
    %4023 = vmatprep.subr.bf16.mxu0 %v3624
    %4024 = vmatpush1.bf16.msra.mxu0 %v3623
    %4025 = vmatprep.mubr.bf16.mxu0 %v2672
    %4026 = vmatmul.mubr.bf16.gmra.mrb[0].mxu0 %v2671
    %v4027 = vpop.f32.mrb[0].mxu0
    %v4028 = vadd.f32 %v3987, %v4027
    %v4029 = vpop.f32.mrb[0].mxu0
    %v4030 = vadd.f32 %v3989, %v4029
    %v4031 = vpop.f32.mrb[0].mxu0
    %v4032 = vpop.f32.mrb[0].mxu0
    %4033 = vdwg.mxu0
    %4034 = vmatprep.subr.bf16.mxu0 %v3629
    %4035 = vmatpush1.bf16.msra.mxu0 %v3628
    %4036 = vmatprep.subr.bf16.mxu0 %v3634
    %4037 = vmatpush1.bf16.msra.mxu0 %v3633
    %4038 = vmatprep.subr.bf16.mxu0 %v3639
    %4039 = vmatpush1.bf16.msra.mxu0 %v3638
    %4040 = vmatprep.subr.bf16.mxu0 %v3644
    %4041 = vmatpush1.bf16.msra.mxu0 %v3643
    %4042 = vmatprep.subr.bf16.mxu0 0
    %4043 = vmatpush1.bf16.msra.mxu0 0
    %4044 = vmatprep.subr.bf16.mxu0 0
    %4045 = vmatpush1.bf16.msra.mxu0 0
    %4046 = vmatprep.subr.bf16.mxu0 0
    %4047 = vmatpush1.bf16.msra.mxu0 0
    %4048 = vmatprep.subr.bf16.mxu0 0
    %4049 = vmatpush1.bf16.msra.mxu0 0
    %4050 = vmatprep.subr.bf16.mxu0 0
    %4051 = vmatpush1.bf16.msra.mxu0 0
    %4052 = vmatprep.subr.bf16.mxu0 0
    %4053 = vmatpush1.bf16.msra.mxu0 0
    %4054 = vmatprep.subr.bf16.mxu0 0
    %4055 = vmatpush1.bf16.msra.mxu0 0
    %4056 = vmatprep.subr.bf16.mxu0 0
    %4057 = vmatpush1.bf16.msra.mxu0 0
    %4058 = vmatprep.subr.bf16.mxu0 0
    %4059 = vmatpush1.bf16.msra.mxu0 0
    %4060 = vmatprep.subr.bf16.mxu0 0
    %4061 = vmatpush1.bf16.msra.mxu0 0
    %4062 = vmatprep.subr.bf16.mxu0 0
    %4063 = vmatpush1.bf16.msra.mxu0 0
    %4064 = vmatprep.subr.bf16.mxu0 0
    %4065 = vmatpush1.bf16.msra.mxu0 0
    %4066 = vmatprep.mubr.bf16.mxu0 0
    %4067 = vmatmul.mubr.bf16.gmra.mrb[0].mxu0 %v3827
    %v4068 = vpop.f32.mrb[0].mxu0
    %v4069 = vadd.f32 %v4028, %v4068
    %v4070 = vpop.f32.mrb[0].mxu0
    %v4071 = vadd.f32 %v4030, %v4070
    %v4072 = vpop.f32.mrb[0].mxu0
    %v4073 = vpop.f32.mrb[0].mxu0
    %4074 = vdwg.mxu0
    %4075 = vmatprep.subr.bf16.mxu0 0
    %4076 = vmatpush1.bf16.msra.mxu0 %v3470
    %4077 = vmatprep.subr.bf16.mxu0 0
    %4078 = vmatpush1.bf16.msra.mxu0 %v3475
    %4079 = vmatprep.subr.bf16.mxu0 0
    %4080 = vmatpush1.bf16.msra.mxu0 %v3480
    %4081 = vmatprep.subr.bf16.mxu0 0
    %4082 = vmatpush1.bf16.msra.mxu0 %v3485
    %4083 = vmatprep.subr.bf16.mxu0 0
    %4084 = vmatpush1.bf16.msra.mxu0 %v3490
    %4085 = vmatprep.subr.bf16.mxu0 0
    %4086 = vmatpush1.bf16.msra.mxu0 %v3495
    %4087 = vmatprep.subr.bf16.mxu0 0
    %4088 = vmatpush1.bf16.msra.mxu0 %v3500
    %4089 = vmatprep.subr.bf16.mxu0 0
    %4090 = vmatpush1.bf16.msra.mxu0 %v3505
    %4091 = vmatprep.subr.bf16.mxu0 0
    %4092 = vmatpush1.bf16.msra.mxu0 %v3510
    %4093 = vmatprep.subr.bf16.mxu0 0
    %4094 = vmatpush1.bf16.msra.mxu0 %v3515
    %4095 = vmatprep.subr.bf16.mxu0 0
    %4096 = vmatpush1.bf16.msra.mxu0 %v3520
    %4097 = vmatprep.subr.bf16.mxu0 0
    %4098 = vmatpush1.bf16.msra.mxu0 %v3525
    %4099 = vmatprep.subr.bf16.mxu0 0
    %4100 = vmatpush1.bf16.msra.mxu0 %v3530
    %4101 = vmatprep.subr.bf16.mxu0 0
    %4102 = vmatpush1.bf16.msra.mxu0 %v3535
    %4103 = vmatprep.subr.bf16.mxu0 0
    %4104 = vmatpush1.bf16.msra.mxu0 %v3540
    %4105 = vmatprep.subr.bf16.mxu0 0
    %4106 = vmatpush1.bf16.msra.mxu0 %v3545
    %4107 = vmatprep.mubr.bf16.mxu0 %v2670
    %4108 = vmatmul.mubr.bf16.gmra.mrb[0].mxu0 %v2669
    %v4109 = vpop.f32.mrb[0].mxu0
    %v4110 = vadd.f32 0.0, %v4109
    %v4111 = vpop.f32.mrb[0].mxu0
    %v4112 = vpop.f32.mrb[0].mxu0
    %v4113 = vpop.f32.mrb[0].mxu0
    %4114 = vdwg.mxu0
    %4115 = vmatprep.subr.bf16.mxu0 0
    %4116 = vmatpush1.bf16.msra.mxu0 %v3550
    %4117 = vmatprep.subr.bf16.mxu0 0
    %4118 = vmatpush1.bf16.msra.mxu0 %v3555
    %4119 = vmatprep.subr.bf16.mxu0 0
    %4120 = vmatpush1.bf16.msra.mxu0 %v3560
    %4121 = vmatprep.subr.bf16.mxu0 0
    %4122 = vmatpush1.bf16.msra.mxu0 %v3565
    %4123 = vmatprep.subr.bf16.mxu0 0
    %4124 = vmatpush1.bf16.msra.mxu0 %v3570
    %4125 = vmatprep.subr.bf16.mxu0 0
    %4126 = vmatpush1.bf16.msra.mxu0 %v3575
    %4127 = vmatprep.subr.bf16.mxu0 0
    %4128 = vmatpush1.bf16.msra.mxu0 %v3580
    %4129 = vmatprep.subr.bf16.mxu0 0
    %4130 = vmatpush1.bf16.msra.mxu0 %v3585
    %4131 = vmatprep.subr.bf16.mxu0 0
    %4132 = vmatpush1.bf16.msra.mxu0 %v3590
    %4133 = vmatprep.subr.bf16.mxu0 0
    %4134 = vmatpush1.bf16.msra.mxu0 %v3595
    %4135 = vmatprep.subr.bf16.mxu0 0
    %4136 = vmatpush1.bf16.msra.mxu0 %v3600
    %4137 = vmatprep.subr.bf16.mxu0 0
    %4138 = vmatpush1.bf16.msra.mxu0 %v3605
    %4139 = vmatprep.subr.bf16.mxu0 0
    %4140 = vmatpush1.bf16.msra.mxu0 %v3610
    %4141 = vmatprep.subr.bf16.mxu0 0
    %4142 = vmatpush1.bf16.msra.mxu0 %v3615
    %4143 = vmatprep.subr.bf16.mxu0 0
    %4144 = vmatpush1.bf16.msra.mxu0 %v3620
    %4145 = vmatprep.subr.bf16.mxu0 0
    %4146 = vmatpush1.bf16.msra.mxu0 %v3625
    %4147 = vmatprep.mubr.bf16.mxu0 %v2672
    %4148 = vmatmul.mubr.bf16.gmra.mrb[0].mxu0 %v2671
    %v4149 = vpop.f32.mrb[0].mxu0
    %v4150 = vadd.f32 %v4110, %v4149
    %v4151 = vpop.f32.mrb[0].mxu0
    %v4152 = vpop.f32.mrb[0].mxu0
    %v4153 = vpop.f32.mrb[0].mxu0
    %4154 = vdwg.mxu0
    %4155 = vmatprep.subr.bf16.mxu0 0
    %4156 = vmatpush1.bf16.msra.mxu0 %v3630
    %4157 = vmatprep.subr.bf16.mxu0 0
    %4158 = vmatpush1.bf16.msra.mxu0 %v3635
    %4159 = vmatprep.subr.bf16.mxu0 0
    %4160 = vmatpush1.bf16.msra.mxu0 %v3640
    %4161 = vmatprep.subr.bf16.mxu0 0
    %4162 = vmatpush1.bf16.msra.mxu0 %v3645
    %4163 = vmatprep.subr.bf16.mxu0 0
    %4164 = vmatpush1.bf16.msra.mxu0 0
    %4165 = vmatprep.subr.bf16.mxu0 0
    %4166 = vmatpush1.bf16.msra.mxu0 0
    %4167 = vmatprep.subr.bf16.mxu0 0
    %4168 = vmatpush1.bf16.msra.mxu0 0
    %4169 = vmatprep.subr.bf16.mxu0 0
    %4170 = vmatpush1.bf16.msra.mxu0 0
    %4171 = vmatprep.subr.bf16.mxu0 0
    %4172 = vmatpush1.bf16.msra.mxu0 0
    %4173 = vmatprep.subr.bf16.mxu0 0
    %4174 = vmatpush1.bf16.msra.mxu0 0
    %4175 = vmatprep.subr.bf16.mxu0 0
    %4176 = vmatpush1.bf16.msra.mxu0 0
    %4177 = vmatprep.subr.bf16.mxu0 0
    %4178 = vmatpush1.bf16.msra.mxu0 0
    %4179 = vmatprep.subr.bf16.mxu0 0
    %4180 = vmatpush1.bf16.msra.mxu0 0
    %4181 = vmatprep.subr.bf16.mxu0 0
    %4182 = vmatpush1.bf16.msra.mxu0 0
    %4183 = vmatprep.subr.bf16.mxu0 0
    %4184 = vmatpush1.bf16.msra.mxu0 0
    %4185 = vmatprep.subr.bf16.mxu0 0
    %4186 = vmatpush1.bf16.msra.mxu0 0
    %4187 = vmatprep.mubr.bf16.mxu0 0
    %4188 = vmatmul.mubr.bf16.gmra.mrb[0].mxu0 %v3827
    %v4189 = vpop.f32.mrb[0].mxu0
    %v4190 = vadd.f32 %v4150, %v4189
    %v4191 = vpop.f32.mrb[0].mxu0
    %v4192 = vpop.f32.mrb[0].mxu0
    %v4193 = vpop.f32.mrb[0].mxu0
    %4194 = vdwg.mxu0
    %v4195 = vadd.f32 %v876, %v3946
    %v4196 = vadd.f32 %v878, %v3948
    %v4197 = vadd.f32 %v958, %v4069
    %v4198 = vadd.f32 %v960, %v4071
    %v4199 = vadd.f32 %v1039, %v4190
    %v4200 = vpack.c.bf16 %v4195, %v4195
    %v4201 = vpack.c.bf16 %v4196, %v4196
    %v4202 = vpack.c.bf16 %v4197, %v4197
    %v4203 = vpack.c.bf16 %v4198, %v4198
    %v4204 = vpack.c.bf16 %v4199, %v4199
    %v4205 = vld [vmem:[#allocation10] sm:$0xf]
    %v4206 = vld [vmem:[#allocation10 + $0x4] sm:$0xf]
    %v4207 = vld [vmem:[#allocation10 + $0x8] sm:$0xf]
    %v4208 = vld [vmem:[#allocation10 + $0xc] sm:$0xf]
    %v4209 = vld [vmem:[#allocation10 + $0x10] sm:$0xf]
    %v4210 = vld [vmem:[#allocation10 + $0x14] sm:$0xf]
    %v4211 = vld [vmem:[#allocation10 + $0x18] sm:$0xf]
    %v4212 = vld [vmem:[#allocation10 + $0x1c] sm:$0xf]
    %v4213 = vld [vmem:[#allocation10 + $0x20] sm:$0xf]
    %v4214 = vld [vmem:[#allocation10 + $0x24] sm:$0xf]
    %v4215 = vld [vmem:[#allocation10 + $0x28] sm:$0xf]
    %v4216 = vld [vmem:[#allocation10 + $0x2c] sm:$0xf]
    %v4217 = vld [vmem:[#allocation10 + $0x30] sm:$0xf]
    %v4218 = vld [vmem:[#allocation10 + $0x34] sm:$0xf]
    %v4219 = vld [vmem:[#allocation10 + $0x38] sm:$0xf]
    %v4220 = vld [vmem:[#allocation10 + $0x3c] sm:$0xf]
    %v4221 = vld [vmem:[#allocation10 + $0x40] sm:$0xf]
    %v4222 = vld [vmem:[#allocation10 + $0x44] sm:$0xf]
    %v4223 = vld [vmem:[#allocation10 + $0x48] sm:$0xf]
    %v4224 = vld [vmem:[#allocation10 + $0x4c] sm:$0xf]
    %v4225 = vld [vmem:[#allocation10 + $0x50] sm:$0xf]
    %v4226 = vld [vmem:[#allocation10 + $0x54] sm:$0xf]
    %v4227 = vld [vmem:[#allocation10 + $0x58] sm:$0xf]
    %v4228 = vld [vmem:[#allocation10 + $0x5c] sm:$0xf]
    %v4229 = vld [vmem:[#allocation10 + $0x60] sm:$0xf]
    %v4230 = vld [vmem:[#allocation10 + $0x64] sm:$0xf]
    %v4231 = vld [vmem:[#allocation10 + $0x68] sm:$0xf]
    %v4232 = vld [vmem:[#allocation10 + $0x6c] sm:$0xf]
    %v4233 = vld [vmem:[#allocation10 + $0x70] sm:$0xf]
    %v4234 = vld [vmem:[#allocation10 + $0x74] sm:$0xf]
    %v4235 = vld [vmem:[#allocation10 + $0x78] sm:$0xf]
    %v4236 = vld [vmem:[#allocation10 + $0x7c] sm:$0xf]
    %v4237 = vld [vmem:[#allocation10 + $0x80] sm:$0xf]
    %v4238 = vld [vmem:[#allocation10 + $0x84] sm:$0xf]
    %v4239 = vld [vmem:[#allocation10 + $0x88] sm:$0xf]
    %v4240 = vld [vmem:[#allocation10 + $0x8c] sm:$0xf]
    %v4241 = vld [vmem:[#allocation10 + $0x90] sm:$0xf]
    %v4242 = vld [vmem:[#allocation10 + $0x94] sm:$0xf]
    %v4243 = vld [vmem:[#allocation10 + $0x98] sm:$0xf]
    %v4244 = vld [vmem:[#allocation10 + $0x9c] sm:$0xf]
    %v4245 = vld [vmem:[#allocation10 + $0xa0] sm:$0xf]
    %v4246 = vld [vmem:[#allocation10 + $0xa4] sm:$0xf]
    %v4247 = vld [vmem:[#allocation10 + $0xa8] sm:$0xf]
    %v4248 = vld [vmem:[#allocation10 + $0xac] sm:$0xf]
    %v4249 = vld [vmem:[#allocation10 + $0xb0] sm:$0xf]
    %v4250 = vld [vmem:[#allocation10 + $0xb4] sm:$0xf]
    %v4251 = vld [vmem:[#allocation10 + $0xb8] sm:$0xf]
    %v4252 = vld [vmem:[#allocation10 + $0xbc] sm:$0xf]
    %v4253 = vld [vmem:[#allocation10 + $0xc0] sm:$0xf]
    %v4254 = vld [vmem:[#allocation10 + $0xc4] sm:$0xf]
    %v4255 = vld [vmem:[#allocation10 + $0xc8] sm:$0xf]
    %v4256 = vld [vmem:[#allocation10 + $0xcc] sm:$0xf]
    %v4257 = vld [vmem:[#allocation10 + $0xd0] sm:$0xf]
    %v4258 = vld [vmem:[#allocation10 + $0xd4] sm:$0xf]
    %v4259 = vld [vmem:[#allocation10 + $0xd8] sm:$0xf]
    %v4260 = vld [vmem:[#allocation10 + $0xdc] sm:$0xf]
    %v4261 = vld [vmem:[#allocation10 + $0xe0] sm:$0xf]
    %v4262 = vld [vmem:[#allocation10 + $0xe4] sm:$0xf]
    %v4263 = vld [vmem:[#allocation10 + $0xe8] sm:$0xf]
    %v4264 = vld [vmem:[#allocation10 + $0xec] sm:$0xf]
    %v4265 = vld [vmem:[#allocation10 + $0xf0] sm:$0xf]
    %v4266 = vld [vmem:[#allocation10 + $0xf4] sm:$0xf]
    %v4267 = vld [vmem:[#allocation10 + $0xf8] sm:$0xf]
    %v4268 = vld [vmem:[#allocation10 + $0xfc] sm:$0xf]
    %v4269 = vld [vmem:[#allocation10 + $0x100] sm:$0xf]
    %v4270 = vld [vmem:[#allocation10 + $0x104] sm:$0xf]
    %v4271 = vld [vmem:[#allocation10 + $0x108] sm:$0xf]
    %v4272 = vld [vmem:[#allocation10 + $0x10c] sm:$0xf]
    %v4273 = vld [vmem:[#allocation10 + $0x110] sm:$0xf]
    %v4274 = vld [vmem:[#allocation10 + $0x114] sm:$0xf]
    %v4275 = vld [vmem:[#allocation10 + $0x118] sm:$0xf]
    %v4276 = vld [vmem:[#allocation10 + $0x11c] sm:$0xf]
    %v4349 = vunpack.c.l.b16 %v4205
    %v4350 = vunpack.c.l.b16 %v4206
    %v4351 = vunpack.c.l.b16 %v4207
    %v4352 = vunpack.c.l.b16 %v4208
    %v4353 = vunpack.c.l.b16 %v4209
    %v4354 = vunpack.c.l.b16 %v4210
    %v4355 = vunpack.c.l.b16 %v4211
    %v4356 = vunpack.c.l.b16 %v4212
    %v4357 = vunpack.c.l.b16 %v4213
    %v4358 = vunpack.c.l.b16 %v4214
    %v4359 = vunpack.c.l.b16 %v4215
    %v4360 = vunpack.c.l.b16 %v4216
    %v4361 = vunpack.c.l.b16 %v4217
    %v4362 = vunpack.c.l.b16 %v4218
    %v4363 = vunpack.c.l.b16 %v4219
    %v4364 = vunpack.c.l.b16 %v4220
    %v4365 = vunpack.c.l.b16 %v4221
    %v4366 = vunpack.c.l.b16 %v4222
    %v4367 = vunpack.c.l.b16 %v4223
    %v4368 = vunpack.c.l.b16 %v4224
    %v4369 = vunpack.c.l.b16 %v4225
    %v4370 = vunpack.c.l.b16 %v4226
    %v4371 = vunpack.c.l.b16 %v4227
    %v4372 = vunpack.c.l.b16 %v4228
    %v4373 = vunpack.c.l.b16 %v4229
    %v4374 = vunpack.c.l.b16 %v4230
    %v4375 = vunpack.c.l.b16 %v4231
    %v4376 = vunpack.c.l.b16 %v4232
    %v4377 = vunpack.c.l.b16 %v4233
    %v4378 = vunpack.c.l.b16 %v4234
    %v4379 = vunpack.c.l.b16 %v4235
    %v4380 = vunpack.c.l.b16 %v4236
    %v4381 = vunpack.c.l.b16 %v4237
    %v4382 = vunpack.c.l.b16 %v4238
    %v4383 = vunpack.c.l.b16 %v4239
    %v4384 = vunpack.c.l.b16 %v4240
    %v4385 = vunpack.c.l.b16 %v4241
    %v4386 = vunpack.c.l.b16 %v4242
    %v4387 = vunpack.c.l.b16 %v4243
    %v4388 = vunpack.c.l.b16 %v4244
    %v4389 = vunpack.c.l.b16 %v4245
    %v4390 = vunpack.c.l.b16 %v4246
    %v4391 = vunpack.c.l.b16 %v4247
    %v4392 = vunpack.c.l.b16 %v4248
    %v4393 = vunpack.c.l.b16 %v4249
    %v4394 = vunpack.c.l.b16 %v4250
    %v4395 = vunpack.c.l.b16 %v4251
    %v4396 = vunpack.c.l.b16 %v4252
    %v4397 = vunpack.c.l.b16 %v4253
    %v4398 = vunpack.c.l.b16 %v4254
    %v4399 = vunpack.c.l.b16 %v4255
    %v4400 = vunpack.c.l.b16 %v4256
    %v4401 = vunpack.c.l.b16 %v4257
    %v4402 = vunpack.c.l.b16 %v4258
    %v4403 = vunpack.c.l.b16 %v4259
    %v4404 = vunpack.c.l.b16 %v4260
    %v4405 = vunpack.c.l.b16 %v4261
    %v4406 = vunpack.c.l.b16 %v4262
    %v4407 = vunpack.c.l.b16 %v4263
    %v4408 = vunpack.c.l.b16 %v4264
    %v4409 = vunpack.c.l.b16 %v4265
    %v4410 = vunpack.c.l.b16 %v4266
    %v4411 = vunpack.c.l.b16 %v4267
    %v4412 = vunpack.c.l.b16 %v4268
    %v4413 = vunpack.c.l.b16 %v4269
    %v4414 = vunpack.c.l.b16 %v4270
    %v4415 = vunpack.c.l.b16 %v4271
    %v4416 = vunpack.c.l.b16 %v4272
    %v4417 = vunpack.c.l.b16 %v4273
    %v4418 = vunpack.c.l.b16 %v4274
    %v4419 = vunpack.c.l.b16 %v4275
    %v4420 = vunpack.c.l.b16 %v4276
    %v4421 = vpack.c.b16 %v4350, %v4349
    %v4422 = vpack.c.b16 %v4352, %v4351
    %v4423 = vpack.c.b16 %v4354, %v4353
    %v4424 = vpack.c.b16 %v4356, %v4355
    %v4425 = vpack.c.b16 %v4358, %v4357
    %v4426 = vpack.c.b16 %v4360, %v4359
    %v4427 = vpack.c.b16 %v4362, %v4361
    %v4428 = vpack.c.b16 %v4364, %v4363
    %v4429 = vpack.c.b16 %v4366, %v4365
    %v4430 = vpack.c.b16 %v4368, %v4367
    %v4431 = vpack.c.b16 %v4370, %v4369
    %v4432 = vpack.c.b16 %v4372, %v4371
    %v4433 = vpack.c.b16 %v4374, %v4373
    %v4434 = vpack.c.b16 %v4376, %v4375
    %v4435 = vpack.c.b16 %v4378, %v4377
    %v4436 = vpack.c.b16 %v4380, %v4379
    %v4437 = vpack.c.b16 %v4382, %v4381
    %v4438 = vpack.c.b16 %v4384, %v4383
    %v4439 = vpack.c.b16 %v4386, %v4385
    %v4440 = vpack.c.b16 %v4388, %v4387
    %v4441 = vpack.c.b16 %v4390, %v4389
    %v4442 = vpack.c.b16 %v4392, %v4391
    %v4443 = vpack.c.b16 %v4394, %v4393
    %v4444 = vpack.c.b16 %v4396, %v4395
    %v4445 = vpack.c.b16 %v4398, %v4397
    %v4446 = vpack.c.b16 %v4400, %v4399
    %v4447 = vpack.c.b16 %v4402, %v4401
    %v4448 = vpack.c.b16 %v4404, %v4403
    %v4449 = vpack.c.b16 %v4406, %v4405
    %v4450 = vpack.c.b16 %v4408, %v4407
    %v4451 = vpack.c.b16 %v4410, %v4409
    %v4452 = vpack.c.b16 %v4412, %v4411
    %v4453 = vpack.c.b16 %v4414, %v4413
    %v4454 = vpack.c.b16 %v4416, %v4415
    %v4455 = vpack.c.b16 %v4418, %v4417
    %v4456 = vpack.c.b16 %v4420, %v4419
    %v4494 = vsel %vm2294, %v4204, 0
    %4496 = vmatprep.subr.bf16.mxu0 0
    %4497 = vmatpush1.bf16.msra.mxu0 %v4421
    %4498 = vmatprep.subr.bf16.mxu0 0
    %4499 = vmatpush1.bf16.msra.mxu0 %v4422
    %4500 = vmatprep.subr.bf16.mxu0 0
    %4501 = vmatpush1.bf16.msra.mxu0 %v4423
    %4502 = vmatprep.subr.bf16.mxu0 0
    %4503 = vmatpush1.bf16.msra.mxu0 %v4424
    %4504 = vmatprep.subr.bf16.mxu0 0
    %4505 = vmatpush1.bf16.msra.mxu0 %v4425
    %4506 = vmatprep.subr.bf16.mxu0 0
    %4507 = vmatpush1.bf16.msra.mxu0 %v4426
    %4508 = vmatprep.subr.bf16.mxu0 0
    %4509 = vmatpush1.bf16.msra.mxu0 %v4427
    %4510 = vmatprep.subr.bf16.mxu0 0
    %4511 = vmatpush1.bf16.msra.mxu0 %v4428
    %4512 = vmatprep.subr.bf16.mxu0 0
    %4513 = vmatpush1.bf16.msra.mxu0 %v4429
    %4514 = vmatprep.subr.bf16.mxu0 0
    %4515 = vmatpush1.bf16.msra.mxu0 %v4430
    %4516 = vmatprep.subr.bf16.mxu0 0
    %4517 = vmatpush1.bf16.msra.mxu0 %v4431
    %4518 = vmatprep.subr.bf16.mxu0 0
    %4519 = vmatpush1.bf16.msra.mxu0 %v4432
    %4520 = vmatprep.subr.bf16.mxu0 0
    %4521 = vmatpush1.bf16.msra.mxu0 %v4433
    %4522 = vmatprep.subr.bf16.mxu0 0
    %4523 = vmatpush1.bf16.msra.mxu0 %v4434
    %4524 = vmatprep.subr.bf16.mxu0 0
    %4525 = vmatpush1.bf16.msra.mxu0 %v4435
    %4526 = vmatprep.subr.bf16.mxu0 0
    %4527 = vmatpush1.bf16.msra.mxu0 %v4436
    %4528 = vmatprep.mubr.bf16.mxu0 %v4201
    %4529 = vmatmul.mubr.bf16.gmra.mrb[0].mxu0 %v4200
    %v4530 = vpop.f32.mrb[0].mxu0
    %v4531 = vadd.f32 %v114, %v4530
    %v4532 = vpop.f32.mrb[0].mxu0
    %v4533 = vpop.f32.mrb[0].mxu0
    %v4534 = vpop.f32.mrb[0].mxu0
    %4535 = vdwg.mxu0
    %4536 = vmatprep.subr.bf16.mxu0 0
    %4537 = vmatpush1.bf16.msra.mxu0 %v4437
    %4538 = vmatprep.subr.bf16.mxu0 0
    %4539 = vmatpush1.bf16.msra.mxu0 %v4438
    %4540 = vmatprep.subr.bf16.mxu0 0
    %4541 = vmatpush1.bf16.msra.mxu0 %v4439
    %4542 = vmatprep.subr.bf16.mxu0 0
    %4543 = vmatpush1.bf16.msra.mxu0 %v4440
    %4544 = vmatprep.subr.bf16.mxu0 0
    %4545 = vmatpush1.bf16.msra.mxu0 %v4441
    %4546 = vmatprep.subr.bf16.mxu0 0
    %4547 = vmatpush1.bf16.msra.mxu0 %v4442
    %4548 = vmatprep.subr.bf16.mxu0 0
    %4549 = vmatpush1.bf16.msra.mxu0 %v4443
    %4550 = vmatprep.subr.bf16.mxu0 0
    %4551 = vmatpush1.bf16.msra.mxu0 %v4444
    %4552 = vmatprep.subr.bf16.mxu0 0
    %4553 = vmatpush1.bf16.msra.mxu0 %v4445
    %4554 = vmatprep.subr.bf16.mxu0 0
    %4555 = vmatpush1.bf16.msra.mxu0 %v4446
    %4556 = vmatprep.subr.bf16.mxu0 0
    %4557 = vmatpush1.bf16.msra.mxu0 %v4447
    %4558 = vmatprep.subr.bf16.mxu0 0
    %4559 = vmatpush1.bf16.msra.mxu0 %v4448
    %4560 = vmatprep.subr.bf16.mxu0 0
    %4561 = vmatpush1.bf16.msra.mxu0 %v4449
    %4562 = vmatprep.subr.bf16.mxu0 0
    %4563 = vmatpush1.bf16.msra.mxu0 %v4450
    %4564 = vmatprep.subr.bf16.mxu0 0
    %4565 = vmatpush1.bf16.msra.mxu0 %v4451
    %4566 = vmatprep.subr.bf16.mxu0 0
    %4567 = vmatpush1.bf16.msra.mxu0 %v4452
    %4568 = vmatprep.mubr.bf16.mxu0 %v4203
    %4569 = vmatmul.mubr.bf16.gmra.mrb[0].mxu0 %v4202
    %v4570 = vpop.f32.mrb[0].mxu0
    %v4571 = vadd.f32 %v4531, %v4570
    %v4572 = vpop.f32.mrb[0].mxu0
    %v4573 = vpop.f32.mrb[0].mxu0
    %v4574 = vpop.f32.mrb[0].mxu0
    %4575 = vdwg.mxu0
    %4576 = vmatprep.subr.bf16.mxu0 0
    %4577 = vmatpush1.bf16.msra.mxu0 %v4453
    %4578 = vmatprep.subr.bf16.mxu0 0
    %4579 = vmatpush1.bf16.msra.mxu0 %v4454
    %4580 = vmatprep.subr.bf16.mxu0 0
    %4581 = vmatpush1.bf16.msra.mxu0 %v4455
    %4582 = vmatprep.subr.bf16.mxu0 0
    %4583 = vmatpush1.bf16.msra.mxu0 %v4456
    %4584 = vmatprep.subr.bf16.mxu0 0
    %4585 = vmatpush1.bf16.msra.mxu0 0
    %4586 = vmatprep.subr.bf16.mxu0 0
    %4587 = vmatpush1.bf16.msra.mxu0 0
    %4588 = vmatprep.subr.bf16.mxu0 0
    %4589 = vmatpush1.bf16.msra.mxu0 0
    %4590 = vmatprep.subr.bf16.mxu0 0
    %4591 = vmatpush1.bf16.msra.mxu0 0
    %4592 = vmatprep.subr.bf16.mxu0 0
    %4593 = vmatpush1.bf16.msra.mxu0 0
    %4594 = vmatprep.subr.bf16.mxu0 0
    %4595 = vmatpush1.bf16.msra.mxu0 0
    %4596 = vmatprep.subr.bf16.mxu0 0
    %4597 = vmatpush1.bf16.msra.mxu0 0
    %4598 = vmatprep.subr.bf16.mxu0 0
    %4599 = vmatpush1.bf16.msra.mxu0 0
    %4600 = vmatprep.subr.bf16.mxu0 0
    %4601 = vmatpush1.bf16.msra.mxu0 0
    %4602 = vmatprep.subr.bf16.mxu0 0
    %4603 = vmatpush1.bf16.msra.mxu0 0
    %4604 = vmatprep.subr.bf16.mxu0 0
    %4605 = vmatpush1.bf16.msra.mxu0 0
    %4606 = vmatprep.subr.bf16.mxu0 0
    %4607 = vmatpush1.bf16.msra.mxu0 0
    %4608 = vmatprep.mubr.bf16.mxu0 0
    %4609 = vmatmul.mubr.bf16.gmra.mrb[0].mxu0 %v4494
    %v4610 = vpop.f32.mrb[0].mxu0
    %v4611 = vadd.f32 %v4571, %v4610
    %v4612 = vpop.f32.mrb[0].mxu0
    %v4613 = vpop.f32.mrb[0].mxu0
    %v4614 = vpop.f32.mrb[0].mxu0
    %4615 = vdwg.mxu0
    %4616 = vst [vmem:[#allocation13] sm:$0xff] %v4611
    // Predicated region
    $region50: #{tpu_custom_call.1} parent=1 // pred_check
      _
    $region51: #{tpu_custom_call.1} parent=1 // pred_check_branch
      %4618 = sbr.rel (0) target = $region53
    $region52: #{tpu_custom_call.1} parent=1 // pred_region
      %s4620 = ssub.s32 128, 128
      %4621 = vsyncadd [#allocation4], %s4620
      %s4623 = sshll.u32 [#allocation13], 4
      %s4624 = int_to_ptr.vmem [resolvable:$true] %s4623
      %4626 = dma.vmem_to_hbm [thread:$0]  %s4624, 128, %s6, [#allocation4]
    $region53: #{tpu_custom_call.1} parent=1 // pred_fallthru
      _
    // Predicated region
    $region54: #{tpu_custom_call.1} parent=1 // pred_check
      _
    $region55: #{tpu_custom_call.1} parent=1 // pred_check_branch
      %4628 = sbr.rel (0) target = $region57
    $region56: #{tpu_custom_call.1} parent=1 // pred_region
      %4629 = dma.done [#allocation4], 128
    $region57: #{tpu_custom_call.1} parent=1 // pred_fallthru
      _
    %4630 = vsyncpa [#allocation3], 1
    %4631 = vsyncpa [#allocation6], 1
    %4632 = vsyncpa [#allocation9], 1
    %4633 = vsyncpa [#allocation12], 1
    %4634 = vsyncpa [#allocation4], 1

</llo_original>
